<compile_context>
chip_gen: v6e
topology: v6e:2x2x1
jax: 0.10.0
libtpu: 0.0.40
codegen_flags: <defaults>
</compile_context>

<pallas_src>
import jax
import jax.numpy as jnp
from jax import lax
from jax.experimental import pallas as pl
from jax.experimental.pallas import tpu as pltpu

# Small synthetic sizes (reference module uses embedding_dim=256, hidden_dim=512,
# vocab from a checkpoint — shrunk here, semantics identical).
VOCAB = 128
EMBED = 128
HIDDEN = 128
BATCH = 2
SEQ = 8
SUBLANE = 8  # f32 sublane width — pad batch up to this
# TODO(synk): at real T/B, pad T*Bp to >=256 rows (multiple of 8) so the Phase-1
# and Phase-3 matmuls fill full MXU passes on v6e/v7x.


def lstm_caption_kernel(emb_ref, h0_ref, c0_ref, wih_ref, whh_ref, b_ref,
                        wfc_hbm_ref, bfc_ref, out_ref, hN_ref, cN_ref,
                        gx_sc, hs_sc, wfc_vmem, wfc_sem):
    """Fused: input projection + LSTM recurrence + vocab projection.

    emb_ref     : (T*Bp, E)  bf16   time-major, batch-padded, flattened embeddings
    h0_ref      : (Bp, H)    f32
    c0_ref      : (Bp, H)    f32
    wih_ref     : (E, 4H)    bf16   W_ih^T
    whh_ref     : (H, 4H)    bf16   W_hh^T
    b_ref       : (1, 4H)    f32    b_ih + b_hh
    wfc_hbm_ref : (H, V)     bf16   W_fc^T, left in HBM (memory_space=pl.ANY)
    bfc_ref     : (1, V)     f32
    out_ref     : (T*Bp, V)  f32    logits slab (lane/sublane dense)
    hN_ref      : (Bp, H)    f32    final hidden state
    cN_ref      : (Bp, H)    f32    final cell state
    gx_sc       : (T*Bp, 4H) bf16   hoisted input-projection gates
    hs_sc       : (T*Bp, H)  bf16   per-step hidden states for the deferred fc
    wfc_vmem    : (H, V)     bf16   VMEM landing buffer for W_fc^T
    wfc_sem     : DMA semaphore for the W_fc copy
    """
    Bp = h0_ref.shape[0]
    H = h0_ref.shape[1]
    T = emb_ref.shape[0] // Bp

    # ---- Kick off the W_fc HBM->VMEM DMA immediately; it overlaps Phases 1-2
    # and is only waited on right before Phase 3 (the projection that uses it).
    wfc_cp = pltpu.make_async_copy(wfc_hbm_ref, wfc_vmem, wfc_sem)
    wfc_cp.start()

    # ---- Phase 1 (hoisted, non-recurrent): gates_x for ALL steps in one matmul.
    # Stored bf16 to halve scratch VMEM and per-step slice-load bytes.
    gx_sc[...] = (jnp.dot(emb_ref[...], wih_ref[...],
                          preferred_element_type=jnp.float32)
                  + b_ref[...]).astype(gx_sc.dtype)

    # Per-gate activation scaling, hoisted out of the loop (JAX does not CSE
    # broadcast_in_dim). PyTorch gate order is [i, f, g, o]; we compute a single
    # tanh over the whole (Bp, 4H) tensor:
    #   sigmoid(x) = 0.5 * tanh(0.5 * x) + 0.5      (i, f, o blocks: pre-scale 0.5)
    #   tanh(x)                                      (g block:       pre-scale 1.0)
    col = lax.broadcasted_iota(jnp.int32, (1, 4 * H), 1)
    is_g = jnp.logical_and(col >= 2 * H, col < 3 * H)
    pre_scale = jnp.where(is_g, jnp.float32(1.0), jnp.float32(0.5))   # (1, 4H)

    # ---- Phase 2 (the only serial part): h_t = f(h_{t-1}); only h@W_hh is on
    # the critical path. fori_loop(unroll=True) keeps LLO visibility while
    # letting regalloc reuse vregs (W_hh is reloaded from VMEM per step — the
    # vld slots are hidden under MXU latency, and the value is not pinned
    # across the whole unroll).
    def step(t, carry):
        h, c = carry                                                   # (Bp, H) f32
        row = pl.multiple_of(t * Bp, SUBLANE)
        gx = gx_sc[pl.ds(row, Bp), :].astype(jnp.float32)              # (Bp, 4H)
        gates = gx + jnp.dot(h.astype(jnp.bfloat16), whh_ref[...],
                             preferred_element_type=jnp.float32)       # (Bp, 4H)
        t_all = jnp.tanh(gates * pre_scale)        # ONE fused EUP pass for i,f,g,o
        i = 0.5 * t_all[:, 0:H] + 0.5
        f = 0.5 * t_all[:, H:2 * H] + 0.5
        g = t_all[:, 2 * H:3 * H]
        o = 0.5 * t_all[:, 3 * H:4 * H] + 0.5
        c = f * c + i * g
        h = o * jnp.tanh(c)
        hs_sc[pl.ds(row, Bp), :] = h.astype(hs_sc.dtype)
        return (h, c)

    h, c = lax.fori_loop(0, T, step, (h0_ref[...], c0_ref[...]), unroll=True)
    hN_ref[...] = h
    cN_ref[...] = c

    # ---- Phase 3 (deferred): one (T*Bp, H) @ (H, V) vocab projection; the
    # output is a single dense slab instead of T masked (1, B, V) stores.
    wfc_cp.wait()                       # W_fc has been landing during Phases 1-2
    out_ref[...] = (jnp.dot(hs_sc[...], wfc_vmem[...],
                            preferred_element_type=jnp.float32)
                    + bfc_ref[...]).astype(out_ref.dtype)


def prepare_weights(params):
    """One-time weight packing (transpose + bf16 cast), done OUTSIDE forward."""
    return {
        "embedding": params["embedding"].astype(jnp.float32),
        "wih_t": jnp.transpose(params["w_ih"]).astype(jnp.bfloat16),   # (E, 4H)
        "whh_t": jnp.transpose(params["w_hh"]).astype(jnp.bfloat16),   # (H, 4H)
        "b": (params["b_ih"] + params["b_hh"]).reshape(1, -1).astype(jnp.float32),
        "wfc_t": jnp.transpose(params["w_fc"]).astype(jnp.bfloat16),   # (H, V)
        "bfc": params["b_fc"].reshape(1, -1).astype(jnp.float32),
    }


def image_captioning_forward(packed, features, captions, hidden):
    """Mirrors ImageCaptioningModel.forward(features, captions, hidden)."""
    # `features` is accepted to match the PyTorch signature but (exactly like
    # the reference module's forward) it is not used.
    del features

    h0, c0 = hidden                                            # each (1, B, H)
    B, T = captions.shape
    Bp = ((B + SUBLANE - 1) // SUBLANE) * SUBLANE              # pad batch -> 8
    pad_b = Bp - B

    # Glue: embedding gather, time-major layout, batch padding, flatten.
    emb = jnp.take(packed["embedding"], captions, axis=0)      # (B, T, E)
    emb_tm = jnp.transpose(emb, (1, 0, 2))                     # (T, B, E)
    emb_tm = jnp.pad(emb_tm, ((0, 0), (0, pad_b), (0, 0)))     # (T, Bp, E)
    emb_flat = emb_tm.reshape(T * Bp, EMBED).astype(jnp.bfloat16)

    h0p = jnp.pad(h0[0], ((0, pad_b), (0, 0))).astype(jnp.float32)   # (Bp, H)
    c0p = jnp.pad(c0[0], ((0, pad_b), (0, 0))).astype(jnp.float32)   # (Bp, H)

    vmem = pl.BlockSpec(memory_space=pltpu.MemorySpace.VMEM)
    hbm = pl.BlockSpec(memory_space=pl.ANY)     # W_fc stays in HBM; manual DMA

    # Advisory cost estimate for the XLA scheduler.
    flops = (2 * T * Bp * EMBED * 4 * HIDDEN           # Phase 1
             + T * 2 * Bp * HIDDEN * 4 * HIDDEN        # Phase 2 matmuls
             + 2 * T * Bp * HIDDEN * VOCAB)            # Phase 3
    transcendentals = T * Bp * (4 * HIDDEN + HIDDEN)   # fused gate tanh + tanh(c)
    bytes_accessed = (T * Bp * EMBED * 2 + 2 * Bp * HIDDEN * 4
                      + EMBED * 4 * HIDDEN * 2 + HIDDEN * 4 * HIDDEN * 2
                      + 4 * HIDDEN * 4 + HIDDEN * VOCAB * 2 + VOCAB * 4
                      + T * Bp * VOCAB * 4 + 2 * Bp * HIDDEN * 4)

    out_flat, hN, cN = pl.pallas_call(
        lstm_caption_kernel,
        out_shape=(
            jax.ShapeDtypeStruct((T * Bp, VOCAB), jnp.float32),
            jax.ShapeDtypeStruct((Bp, HIDDEN), jnp.float32),
            jax.ShapeDtypeStruct((Bp, HIDDEN), jnp.float32),
        ),
        in_specs=[vmem, vmem, vmem, vmem, vmem, vmem, hbm, vmem],
        out_specs=(vmem, vmem, vmem),
        scratch_shapes=[
            pltpu.VMEM((T * Bp, 4 * HIDDEN), jnp.bfloat16),   # hoisted gates_x
            pltpu.VMEM((T * Bp, HIDDEN), jnp.bfloat16),       # per-step h_t
            pltpu.VMEM((HIDDEN, VOCAB), jnp.bfloat16),        # W_fc landing buf
            pltpu.SemaphoreType.DMA,                          # W_fc copy sem
        ],
        cost_estimate=pl.CostEstimate(flops=flops,
                                      transcendentals=transcendentals,
                                      bytes_accessed=bytes_accessed),
    )(emb_flat, h0p, c0p,
      packed["wih_t"], packed["whh_t"], packed["b"],
      packed["wfc_t"], packed["bfc"])

    # Un-pad / back to batch-first (B, T, V).
    outputs = jnp.transpose(out_flat.reshape(T, Bp, VOCAB), (1, 0, 2))[:B]
    hN = hN[:B][None, :, :]
    cN = cN[:B][None, :, :]
    return outputs, (hN, cN)


def reference_forward(params, captions, hidden):
    """Pure-JAX reference of the same forward pass (PyTorch LSTM semantics)."""
    H = HIDDEN
    emb = jnp.take(params["embedding"], captions, axis=0)   # (B, T, E)
    h = hidden[0][0]
    c = hidden[1][0]

    def step(carry, x_t):
        h, c = carry
        gates = (x_t @ params["w_ih"].T + params["b_ih"]
                 + h @ params["w_hh"].T + params["b_hh"])
        i = jax.nn.sigmoid(gates[:, 0:H])
        f = jax.nn.sigmoid(gates[:, H:2 * H])
        g = jnp.tanh(gates[:, 2 * H:3 * H])
        o = jax.nn.sigmoid(gates[:, 3 * H:4 * H])
        c = f * c + i * g
        h = o * jnp.tanh(c)
        return (h, c), h

    (hN, cN), hs = jax.lax.scan(step, (h, c), jnp.transpose(emb, (1, 0, 2)))
    outs = jnp.einsum("tbh,vh->tbv", hs, params["w_fc"]) + params["b_fc"]
    return jnp.transpose(outs, (1, 0, 2)), (hN[None], cN[None])


def init_params(key):
    ks = jax.random.split(key, 7)
    s = 0.05
    return {
        "embedding": jax.random.normal(ks[0], (VOCAB, EMBED), jnp.float32) * s,
        "w_ih": jax.random.normal(ks[1], (4 * HIDDEN, EMBED), jnp.float32) * s,
        "w_hh": jax.random.normal(ks[2], (4 * HIDDEN, HIDDEN), jnp.float32) * s,
        "b_ih": jax.random.normal(ks[3], (4 * HIDDEN,), jnp.float32) * s,
        "b_hh": jax.random.normal(ks[4], (4 * HIDDEN,), jnp.float32) * s,
        "w_fc": jax.random.normal(ks[5], (VOCAB, HIDDEN), jnp.float32) * s,
        "b_fc": jax.random.normal(ks[6], (VOCAB,), jnp.float32) * s,
    }


if __name__ == "__main__":
    key = jax.random.PRNGKey(0)
    kp, kcap, kh, kc, kf = jax.random.split(key, 5)

    params = init_params(kp)
    packed = prepare_weights(params)      # one-time transpose / bf16 pack

    # Example inputs (features unused by forward, included to match signature).
    features = jax.random.normal(kf, (BATCH, 3, 32, 32), jnp.float32)
    captions = jax.random.randint(kcap, (BATCH, SEQ), 0, VOCAB, dtype=jnp.int32)
    h0 = jax.random.normal(kh, (1, BATCH, HIDDEN), jnp.float32) * 0.1
    c0 = jax.random.normal(kc, (1, BATCH, HIDDEN), jnp.float32) * 0.1

    outputs, (hN, cN) = image_captioning_forward(packed, features, captions, (h0, c0))
    jax.block_until_ready((outputs, hN, cN))

    ref_out, (ref_h, ref_c) = reference_forward(params, captions, (h0, c0))
    assert outputs.shape == (BATCH, SEQ, VOCAB)
    assert hN.shape == (1, BATCH, HIDDEN) and cN.shape == (1, BATCH, HIDDEN)
    assert jnp.allclose(outputs, ref_out, atol=2e-2, rtol=2e-2)
    assert jnp.allclose(hN, ref_h, atol=2e-2, rtol=2e-2)
    assert jnp.allclose(cN, ref_c, atol=2e-2, rtol=2e-2)

    print("KERNEL_OK")
</pallas_src>

<mosaic_0001>
module attributes {stable_mosaic.version = 11 : i64} {
  func.func @lstm_caption_kernel(%arg0: memref<64x128xbf16, #tpu.memory_space<vmem>>, %arg1: memref<8x128xf32, #tpu.memory_space<vmem>>, %arg2: memref<8x128xf32, #tpu.memory_space<vmem>>, %arg3: memref<128x512xbf16, #tpu.memory_space<vmem>>, %arg4: memref<128x512xbf16, #tpu.memory_space<vmem>>, %arg5: memref<1x512xf32, #tpu.memory_space<vmem>>, %arg6: memref<128x128xbf16, #tpu.memory_space<any>>, %arg7: memref<1x128xf32, #tpu.memory_space<vmem>>, %arg8: memref<64x128xf32, #tpu.memory_space<vmem>>, %arg9: memref<8x128xf32, #tpu.memory_space<vmem>>, %arg10: memref<8x128xf32, #tpu.memory_space<vmem>>, %arg11: memref<64x512xbf16, #tpu.memory_space<vmem>>, %arg12: memref<64x128xbf16, #tpu.memory_space<vmem>>, %arg13: memref<128x128xbf16, #tpu.memory_space<vmem>>, %arg14: memref<!tpu.dma_semaphore, #tpu.memory_space<semaphore_mem>>) attributes {dimension_semantics = [], scalar_prefetch = 0 : i64, scratch_operands = 4 : i64, tpu.core_type = #tpu.core_type<tc>} {
    tpu.enqueue_dma source(%arg6 : memref<128x128xbf16, #tpu.memory_space<any>>) target(%arg13 : memref<128x128xbf16, #tpu.memory_space<vmem>>) target_semaphore(%arg14 : memref<!tpu.dma_semaphore, #tpu.memory_space<semaphore_mem>>)
    %c0 = arith.constant 0 : index
    %c0_0 = arith.constant 0 : index
    %0 = vector.load %arg0[%c0, %c0_0] : memref<64x128xbf16, #tpu.memory_space<vmem>>, vector<64x128xbf16>
    %c0_1 = arith.constant 0 : index
    %c0_2 = arith.constant 0 : index
    %1 = vector.load %arg3[%c0_1, %c0_2] : memref<128x512xbf16, #tpu.memory_space<vmem>>, vector<128x512xbf16>
    %cst = arith.constant dense<0.000000e+00> : vector<64x512xf32>
    %2 = tpu.matmul %0, %1, %cst {dimension_numbers = #tpu.dot_dimension_numbers<[1], [0], [0], [1], [0, 0, 1, 1], [], []>} : vector<64x128xbf16>, vector<128x512xbf16>, vector<64x512xf32> -> vector<64x512xf32>
    %c0_3 = arith.constant 0 : index
    %c0_4 = arith.constant 0 : index
    %3 = vector.load %arg5[%c0_3, %c0_4] : memref<1x512xf32, #tpu.memory_space<vmem>>, vector<1x512xf32>
    %4 = vector.broadcast %3 : vector<1x512xf32> to vector<64x512xf32>
    %5 = arith.addf %2, %4 : vector<64x512xf32>
    %6 = arith.truncf %5 : vector<64x512xf32> to vector<64x512xbf16>
    %c0_5 = arith.constant 0 : index
    %c0_6 = arith.constant 0 : index
    %7 = vector.load %arg11[%c0_5, %c0_6] : memref<64x512xbf16, #tpu.memory_space<vmem>>, vector<64x512xbf16>
    tpu.vector_store %arg11[%c0_5, %c0_6], %6 {strides = array<i32>} : memref<64x512xbf16, #tpu.memory_space<vmem>>, vector<64x512xbf16>,
    %8 = tpu.iota {dimensions = array<i32: 1>} : vector<1x512xi32>
    %c256_i32 = arith.constant 256 : i32
    %9 = vector.broadcast %c256_i32 : i32 to vector<1x512xi32>
    %10 = arith.cmpi sge, %8, %9 : vector<1x512xi32>
    %c384_i32 = arith.constant 384 : i32
    %11 = vector.broadcast %c384_i32 : i32 to vector<1x512xi32>
    %12 = arith.cmpi slt, %8, %11 : vector<1x512xi32>
    %13 = arith.andi %10, %12 : vector<1x512xi1>
    %cst_7 = arith.constant 1.000000e+00 : f32
    %cst_8 = arith.constant 5.000000e-01 : f32
    %14 = vector.broadcast %cst_7 : f32 to vector<1x512xf32>
    %15 = vector.broadcast %cst_8 : f32 to vector<1x512xf32>
    %16 = arith.select %13, %14, %15 : vector<1x512xi1>, vector<1x512xf32>
    %c0_9 = arith.constant 0 : index
    %c0_10 = arith.constant 0 : index
    %17 = vector.load %arg1[%c0_9, %c0_10] : memref<8x128xf32, #tpu.memory_space<vmem>>, vector<8x128xf32>
    %c0_11 = arith.constant 0 : index
    %c0_12 = arith.constant 0 : index
    %18 = vector.load %arg2[%c0_11, %c0_12] : memref<8x128xf32, #tpu.memory_space<vmem>>, vector<8x128xf32>
    %c0_i32 = arith.constant 0 : i32
    %c8_i32 = arith.constant 8 : i32
    %19 = arith.muli %c0_i32, %c8_i32 : i32
    %20 = tpu.assume_multiple %19, 8 : i32
    %21 = arith.index_cast %20 : i32 to index
    %c0_13 = arith.constant 0 : index
    %22 = vector.load %arg11[%21, %c0_13] : memref<64x512xbf16, #tpu.memory_space<vmem>>, vector<8x512xbf16>
    %23 = arith.extf %22 : vector<8x512xbf16> to vector<8x512xf32>
    %24 = arith.truncf %17 : vector<8x128xf32> to vector<8x128xbf16>
    %c0_14 = arith.constant 0 : index
    %c0_15 = arith.constant 0 : index
    %25 = vector.load %arg4[%c0_14, %c0_15] : memref<128x512xbf16, #tpu.memory_space<vmem>>, vector<128x512xbf16>
    %cst_16 = arith.constant dense<0.000000e+00> : vector<8x512xf32>
    %26 = tpu.matmul %24, %25, %cst_16 {dimension_numbers = #tpu.dot_dimension_numbers<[1], [0], [0], [1], [0, 0, 1, 1], [], []>} : vector<8x128xbf16>, vector<128x512xbf16>, vector<8x512xf32> -> vector<8x512xf32>
    %27 = arith.addf %23, %26 : vector<8x512xf32>
    %28 = vector.broadcast %16 : vector<1x512xf32> to vector<8x512xf32>
    %29 = arith.mulf %27, %28 : vector<8x512xf32>
    %30 = math.tanh %29 : vector<8x512xf32>
    %31 = vector.extract_strided_slice %30 {offsets = [0, 0], sizes = [8, 128], strides = [1, 1]} : vector<8x512xf32> to vector<8x128xf32>
    %cst_17 = arith.constant 5.000000e-01 : f32
    %32 = vector.broadcast %cst_17 : f32 to vector<8x128xf32>
    %33 = arith.mulf %32, %31 : vector<8x128xf32>
    %cst_18 = arith.constant 5.000000e-01 : f32
    %34 = vector.broadcast %cst_18 : f32 to vector<8x128xf32>
    %35 = arith.addf %33, %34 : vector<8x128xf32>
    %36 = vector.extract_strided_slice %30 {offsets = [0, 128], sizes = [8, 128], strides = [1, 1]} : vector<8x512xf32> to vector<8x128xf32>
    %cst_19 = arith.constant 5.000000e-01 : f32
    %37 = vector.broadcast %cst_19 : f32 to vector<8x128xf32>
    %38 = arith.mulf %37, %36 : vector<8x128xf32>
    %cst_20 = arith.constant 5.000000e-01 : f32
    %39 = vector.broadcast %cst_20 : f32 to vector<8x128xf32>
    %40 = arith.addf %38, %39 : vector<8x128xf32>
    %41 = vector.extract_strided_slice %30 {offsets = [0, 256], sizes = [8, 128], strides = [1, 1]} : vector<8x512xf32> to vector<8x128xf32>
    %42 = vector.extract_strided_slice %30 {offsets = [0, 384], sizes = [8, 128], strides = [1, 1]} : vector<8x512xf32> to vector<8x128xf32>
    %cst_21 = arith.constant 5.000000e-01 : f32
    %43 = vector.broadcast %cst_21 : f32 to vector<8x128xf32>
    %44 = arith.mulf %43, %42 : vector<8x128xf32>
    %cst_22 = arith.constant 5.000000e-01 : f32
    %45 = vector.broadcast %cst_22 : f32 to vector<8x128xf32>
    %46 = arith.addf %44, %45 : vector<8x128xf32>
    %47 = arith.mulf %40, %18 : vector<8x128xf32>
    %48 = arith.mulf %35, %41 : vector<8x128xf32>
    %49 = arith.addf %47, %48 : vector<8x128xf32>
    %50 = math.tanh %49 : vector<8x128xf32>
    %51 = arith.mulf %46, %50 : vector<8x128xf32>
    %52 = arith.truncf %51 : vector<8x128xf32> to vector<8x128xbf16>
    %53 = arith.index_cast %20 : i32 to index
    %c0_23 = arith.constant 0 : index
    %54 = vector.load %arg12[%53, %c0_23] : memref<64x128xbf16, #tpu.memory_space<vmem>>, vector<8x128xbf16>
    tpu.vector_store %arg12[%53, %c0_23], %52 {strides = array<i32>} : memref<64x128xbf16, #tpu.memory_space<vmem>>, vector<8x128xbf16>,
    %c1_i32 = arith.constant 1 : i32
    %c8_i32_24 = arith.constant 8 : i32
    %55 = arith.muli %c1_i32, %c8_i32_24 : i32
    %56 = tpu.assume_multiple %55, 8 : i32
    %57 = arith.index_cast %56 : i32 to index
    %c0_25 = arith.constant 0 : index
    %58 = vector.load %arg11[%57, %c0_25] : memref<64x512xbf16, #tpu.memory_space<vmem>>, vector<8x512xbf16>
    %59 = arith.extf %58 : vector<8x512xbf16> to vector<8x512xf32>
    %60 = arith.truncf %51 : vector<8x128xf32> to vector<8x128xbf16>
    %c0_26 = arith.constant 0 : index
    %c0_27 = arith.constant 0 : index
    %61 = vector.load %arg4[%c0_26, %c0_27] : memref<128x512xbf16, #tpu.memory_space<vmem>>, vector<128x512xbf16>
    %cst_28 = arith.constant dense<0.000000e+00> : vector<8x512xf32>
    %62 = tpu.matmul %60, %61, %cst_28 {dimension_numbers = #tpu.dot_dimension_numbers<[1], [0], [0], [1], [0, 0, 1, 1], [], []>} : vector<8x128xbf16>, vector<128x512xbf16>, vector<8x512xf32> -> vector<8x512xf32>
    %63 = arith.addf %59, %62 : vector<8x512xf32>
    %64 = vector.broadcast %16 : vector<1x512xf32> to vector<8x512xf32>
    %65 = arith.mulf %63, %64 : vector<8x512xf32>
    %66 = math.tanh %65 : vector<8x512xf32>
    %67 = vector.extract_strided_slice %66 {offsets = [0, 0], sizes = [8, 128], strides = [1, 1]} : vector<8x512xf32> to vector<8x128xf32>
    %cst_29 = arith.constant 5.000000e-01 : f32
    %68 = vector.broadcast %cst_29 : f32 to vector<8x128xf32>
    %69 = arith.mulf %68, %67 : vector<8x128xf32>
    %cst_30 = arith.constant 5.000000e-01 : f32
    %70 = vector.broadcast %cst_30 : f32 to vector<8x128xf32>
    %71 = arith.addf %69, %70 : vector<8x128xf32>
    %72 = vector.extract_strided_slice %66 {offsets = [0, 128], sizes = [8, 128], strides = [1, 1]} : vector<8x512xf32> to vector<8x128xf32>
    %cst_31 = arith.constant 5.000000e-01 : f32
    %73 = vector.broadcast %cst_31 : f32 to vector<8x128xf32>
    %74 = arith.mulf %73, %72 : vector<8x128xf32>
    %cst_32 = arith.constant 5.000000e-01 : f32
    %75 = vector.broadcast %cst_32 : f32 to vector<8x128xf32>
    %76 = arith.addf %74, %75 : vector<8x128xf32>
    %77 = vector.extract_strided_slice %66 {offsets = [0, 256], sizes = [8, 128], strides = [1, 1]} : vector<8x512xf32> to vector<8x128xf32>
    %78 = vector.extract_strided_slice %66 {offsets = [0, 384], sizes = [8, 128], strides = [1, 1]} : vector<8x512xf32> to vector<8x128xf32>
    %cst_33 = arith.constant 5.000000e-01 : f32
    %79 = vector.broadcast %cst_33 : f32 to vector<8x128xf32>
    %80 = arith.mulf %79, %78 : vector<8x128xf32>
    %cst_34 = arith.constant 5.000000e-01 : f32
    %81 = vector.broadcast %cst_34 : f32 to vector<8x128xf32>
    %82 = arith.addf %80, %81 : vector<8x128xf32>
    %83 = arith.mulf %76, %49 : vector<8x128xf32>
    %84 = arith.mulf %71, %77 : vector<8x128xf32>
    %85 = arith.addf %83, %84 : vector<8x128xf32>
    %86 = math.tanh %85 : vector<8x128xf32>
    %87 = arith.mulf %82, %86 : vector<8x128xf32>
    %88 = arith.truncf %87 : vector<8x128xf32> to vector<8x128xbf16>
    %89 = arith.index_cast %56 : i32 to index
    %c0_35 = arith.constant 0 : index
    %90 = vector.load %arg12[%89, %c0_35] : memref<64x128xbf16, #tpu.memory_space<vmem>>, vector<8x128xbf16>
    tpu.vector_store %arg12[%89, %c0_35], %88 {strides = array<i32>} : memref<64x128xbf16, #tpu.memory_space<vmem>>, vector<8x128xbf16>,
    %c2_i32 = arith.constant 2 : i32
    %c8_i32_36 = arith.constant 8 : i32
    %91 = arith.muli %c2_i32, %c8_i32_36 : i32
    %92 = tpu.assume_multiple %91, 8 : i32
    %93 = arith.index_cast %92 : i32 to index
    %c0_37 = arith.constant 0 : index
    %94 = vector.load %arg11[%93, %c0_37] : memref<64x512xbf16, #tpu.memory_space<vmem>>, vector<8x512xbf16>
    %95 = arith.extf %94 : vector<8x512xbf16> to vector<8x512xf32>
    %96 = arith.truncf %87 : vector<8x128xf32> to vector<8x128xbf16>
    %c0_38 = arith.constant 0 : index
    %c0_39 = arith.constant 0 : index
    %97 = vector.load %arg4[%c0_38, %c0_39] : memref<128x512xbf16, #tpu.memory_space<vmem>>, vector<128x512xbf16>
    %cst_40 = arith.constant dense<0.000000e+00> : vector<8x512xf32>
    %98 = tpu.matmul %96, %97, %cst_40 {dimension_numbers = #tpu.dot_dimension_numbers<[1], [0], [0], [1], [0, 0, 1, 1], [], []>} : vector<8x128xbf16>, vector<128x512xbf16>, vector<8x512xf32> -> vector<8x512xf32>
    %99 = arith.addf %95, %98 : vector<8x512xf32>
    %100 = vector.broadcast %16 : vector<1x512xf32> to vector<8x512xf32>
    %101 = arith.mulf %99, %100 : vector<8x512xf32>
    %102 = math.tanh %101 : vector<8x512xf32>
    %103 = vector.extract_strided_slice %102 {offsets = [0, 0], sizes = [8, 128], strides = [1, 1]} : vector<8x512xf32> to vector<8x128xf32>
    %cst_41 = arith.constant 5.000000e-01 : f32
    %104 = vector.broadcast %cst_41 : f32 to vector<8x128xf32>
    %105 = arith.mulf %104, %103 : vector<8x128xf32>
    %cst_42 = arith.constant 5.000000e-01 : f32
    %106 = vector.broadcast %cst_42 : f32 to vector<8x128xf32>
    %107 = arith.addf %105, %106 : vector<8x128xf32>
    %108 = vector.extract_strided_slice %102 {offsets = [0, 128], sizes = [8, 128], strides = [1, 1]} : vector<8x512xf32> to vector<8x128xf32>
    %cst_43 = arith.constant 5.000000e-01 : f32
    %109 = vector.broadcast %cst_43 : f32 to vector<8x128xf32>
    %110 = arith.mulf %109, %108 : vector<8x128xf32>
    %cst_44 = arith.constant 5.000000e-01 : f32
    %111 = vector.broadcast %cst_44 : f32 to vector<8x128xf32>
    %112 = arith.addf %110, %111 : vector<8x128xf32>
    %113 = vector.extract_strided_slice %102 {offsets = [0, 256], sizes = [8, 128], strides = [1, 1]} : vector<8x512xf32> to vector<8x128xf32>
    %114 = vector.extract_strided_slice %102 {offsets = [0, 384], sizes = [8, 128], strides = [1, 1]} : vector<8x512xf32> to vector<8x128xf32>
    %cst_45 = arith.constant 5.000000e-01 : f32
    %115 = vector.broadcast %cst_45 : f32 to vector<8x128xf32>
    %116 = arith.mulf %115, %114 : vector<8x128xf32>
    %cst_46 = arith.constant 5.000000e-01 : f32
    %117 = vector.broadcast %cst_46 : f32 to vector<8x128xf32>
    %118 = arith.addf %116, %117 : vector<8x128xf32>
    %119 = arith.mulf %112, %85 : vector<8x128xf32>
    %120 = arith.mulf %107, %113 : vector<8x128xf32>
    %121 = arith.addf %119, %120 : vector<8x128xf32>
    %122 = math.tanh %121 : vector<8x128xf32>
    %123 = arith.mulf %118, %122 : vector<8x128xf32>
    %124 = arith.truncf %123 : vector<8x128xf32> to vector<8x128xbf16>
    %125 = arith.index_cast %92 : i32 to index
    %c0_47 = arith.constant 0 : index
    %126 = vector.load %arg12[%125, %c0_47] : memref<64x128xbf16, #tpu.memory_space<vmem>>, vector<8x128xbf16>
    tpu.vector_store %arg12[%125, %c0_47], %124 {strides = array<i32>} : memref<64x128xbf16, #tpu.memory_space<vmem>>, vector<8x128xbf16>,
    %c3_i32 = arith.constant 3 : i32
    %c8_i32_48 = arith.constant 8 : i32
    %127 = arith.muli %c3_i32, %c8_i32_48 : i32
    %128 = tpu.assume_multiple %127, 8 : i32
    %129 = arith.index_cast %128 : i32 to index
    %c0_49 = arith.constant 0 : index
    %130 = vector.load %arg11[%129, %c0_49] : memref<64x512xbf16, #tpu.memory_space<vmem>>, vector<8x512xbf16>
    %131 = arith.extf %130 : vector<8x512xbf16> to vector<8x512xf32>
    %132 = arith.truncf %123 : vector<8x128xf32> to vector<8x128xbf16>
    %c0_50 = arith.constant 0 : index
    %c0_51 = arith.constant 0 : index
    %133 = vector.load %arg4[%c0_50, %c0_51] : memref<128x512xbf16, #tpu.memory_space<vmem>>, vector<128x512xbf16>
    %cst_52 = arith.constant dense<0.000000e+00> : vector<8x512xf32>
    %134 = tpu.matmul %132, %133, %cst_52 {dimension_numbers = #tpu.dot_dimension_numbers<[1], [0], [0], [1], [0, 0, 1, 1], [], []>} : vector<8x128xbf16>, vector<128x512xbf16>, vector<8x512xf32> -> vector<8x512xf32>
    %135 = arith.addf %131, %134 : vector<8x512xf32>
    %136 = vector.broadcast %16 : vector<1x512xf32> to vector<8x512xf32>
    %137 = arith.mulf %135, %136 : vector<8x512xf32>
    %138 = math.tanh %137 : vector<8x512xf32>
    %139 = vector.extract_strided_slice %138 {offsets = [0, 0], sizes = [8, 128], strides = [1, 1]} : vector<8x512xf32> to vector<8x128xf32>
    %cst_53 = arith.constant 5.000000e-01 : f32
    %140 = vector.broadcast %cst_53 : f32 to vector<8x128xf32>
    %141 = arith.mulf %140, %139 : vector<8x128xf32>
    %cst_54 = arith.constant 5.000000e-01 : f32
    %142 = vector.broadcast %cst_54 : f32 to vector<8x128xf32>
    %143 = arith.addf %141, %142 : vector<8x128xf32>
    %144 = vector.extract_strided_slice %138 {offsets = [0, 128], sizes = [8, 128], strides = [1, 1]} : vector<8x512xf32> to vector<8x128xf32>
    %cst_55 = arith.constant 5.000000e-01 : f32
    %145 = vector.broadcast %cst_55 : f32 to vector<8x128xf32>
    %146 = arith.mulf %145, %144 : vector<8x128xf32>
    %cst_56 = arith.constant 5.000000e-01 : f32
    %147 = vector.broadcast %cst_56 : f32 to vector<8x128xf32>
    %148 = arith.addf %146, %147 : vector<8x128xf32>
    %149 = vector.extract_strided_slice %138 {offsets = [0, 256], sizes = [8, 128], strides = [1, 1]} : vector<8x512xf32> to vector<8x128xf32>
    %150 = vector.extract_strided_slice %138 {offsets = [0, 384], sizes = [8, 128], strides = [1, 1]} : vector<8x512xf32> to vector<8x128xf32>
    %cst_57 = arith.constant 5.000000e-01 : f32
    %151 = vector.broadcast %cst_57 : f32 to vector<8x128xf32>
    %152 = arith.mulf %151, %150 : vector<8x128xf32>
    %cst_58 = arith.constant 5.000000e-01 : f32
    %153 = vector.broadcast %cst_58 : f32 to vector<8x128xf32>
    %154 = arith.addf %152, %153 : vector<8x128xf32>
    %155 = arith.mulf %148, %121 : vector<8x128xf32>
    %156 = arith.mulf %143, %149 : vector<8x128xf32>
    %157 = arith.addf %155, %156 : vector<8x128xf32>
    %158 = math.tanh %157 : vector<8x128xf32>
    %159 = arith.mulf %154, %158 : vector<8x128xf32>
    %160 = arith.truncf %159 : vector<8x128xf32> to vector<8x128xbf16>
    %161 = arith.index_cast %128 : i32 to index
    %c0_59 = arith.constant 0 : index
    %162 = vector.load %arg12[%161, %c0_59] : memref<64x128xbf16, #tpu.memory_space<vmem>>, vector<8x128xbf16>
    tpu.vector_store %arg12[%161, %c0_59], %160 {strides = array<i32>} : memref<64x128xbf16, #tpu.memory_space<vmem>>, vector<8x128xbf16>,
    %c4_i32 = arith.constant 4 : i32
    %c8_i32_60 = arith.constant 8 : i32
    %163 = arith.muli %c4_i32, %c8_i32_60 : i32
    %164 = tpu.assume_multiple %163, 8 : i32
    %165 = arith.index_cast %164 : i32 to index
    %c0_61 = arith.constant 0 : index
    %166 = vector.load %arg11[%165, %c0_61] : memref<64x512xbf16, #tpu.memory_space<vmem>>, vector<8x512xbf16>
    %167 = arith.extf %166 : vector<8x512xbf16> to vector<8x512xf32>
    %168 = arith.truncf %159 : vector<8x128xf32> to vector<8x128xbf16>
    %c0_62 = arith.constant 0 : index
    %c0_63 = arith.constant 0 : index
    %169 = vector.load %arg4[%c0_62, %c0_63] : memref<128x512xbf16, #tpu.memory_space<vmem>>, vector<128x512xbf16>
    %cst_64 = arith.constant dense<0.000000e+00> : vector<8x512xf32>
    %170 = tpu.matmul %168, %169, %cst_64 {dimension_numbers = #tpu.dot_dimension_numbers<[1], [0], [0], [1], [0, 0, 1, 1], [], []>} : vector<8x128xbf16>, vector<128x512xbf16>, vector<8x512xf32> -> vector<8x512xf32>
    %171 = arith.addf %167, %170 : vector<8x512xf32>
    %172 = vector.broadcast %16 : vector<1x512xf32> to vector<8x512xf32>
    %173 = arith.mulf %171, %172 : vector<8x512xf32>
    %174 = math.tanh %173 : vector<8x512xf32>
    %175 = vector.extract_strided_slice %174 {offsets = [0, 0], sizes = [8, 128], strides = [1, 1]} : vector<8x512xf32> to vector<8x128xf32>
    %cst_65 = arith.constant 5.000000e-01 : f32
    %176 = vector.broadcast %cst_65 : f32 to vector<8x128xf32>
    %177 = arith.mulf %176, %175 : vector<8x128xf32>
    %cst_66 = arith.constant 5.000000e-01 : f32
    %178 = vector.broadcast %cst_66 : f32 to vector<8x128xf32>
    %179 = arith.addf %177, %178 : vector<8x128xf32>
    %180 = vector.extract_strided_slice %174 {offsets = [0, 128], sizes = [8, 128], strides = [1, 1]} : vector<8x512xf32> to vector<8x128xf32>
    %cst_67 = arith.constant 5.000000e-01 : f32
    %181 = vector.broadcast %cst_67 : f32 to vector<8x128xf32>
    %182 = arith.mulf %181, %180 : vector<8x128xf32>
    %cst_68 = arith.constant 5.000000e-01 : f32
    %183 = vector.broadcast %cst_68 : f32 to vector<8x128xf32>
    %184 = arith.addf %182, %183 : vector<8x128xf32>
    %185 = vector.extract_strided_slice %174 {offsets = [0, 256], sizes = [8, 128], strides = [1, 1]} : vector<8x512xf32> to vector<8x128xf32>
    %186 = vector.extract_strided_slice %174 {offsets = [0, 384], sizes = [8, 128], strides = [1, 1]} : vector<8x512xf32> to vector<8x128xf32>
    %cst_69 = arith.constant 5.000000e-01 : f32
    %187 = vector.broadcast %cst_69 : f32 to vector<8x128xf32>
    %188 = arith.mulf %187, %186 : vector<8x128xf32>
    %cst_70 = arith.constant 5.000000e-01 : f32
    %189 = vector.broadcast %cst_70 : f32 to vector<8x128xf32>
    %190 = arith.addf %188, %189 : vector<8x128xf32>
    %191 = arith.mulf %184, %157 : vector<8x128xf32>
    %192 = arith.mulf %179, %185 : vector<8x128xf32>
    %193 = arith.addf %191, %192 : vector<8x128xf32>
    %194 = math.tanh %193 : vector<8x128xf32>
    %195 = arith.mulf %190, %194 : vector<8x128xf32>
    %196 = arith.truncf %195 : vector<8x128xf32> to vector<8x128xbf16>
    %197 = arith.index_cast %164 : i32 to index
    %c0_71 = arith.constant 0 : index
    %198 = vector.load %arg12[%197, %c0_71] : memref<64x128xbf16, #tpu.memory_space<vmem>>, vector<8x128xbf16>
    tpu.vector_store %arg12[%197, %c0_71], %196 {strides = array<i32>} : memref<64x128xbf16, #tpu.memory_space<vmem>>, vector<8x128xbf16>,
    %c5_i32 = arith.constant 5 : i32
    %c8_i32_72 = arith.constant 8 : i32
    %199 = arith.muli %c5_i32, %c8_i32_72 : i32
    %200 = tpu.assume_multiple %199, 8 : i32
    %201 = arith.index_cast %200 : i32 to index
    %c0_73 = arith.constant 0 : index
    %202 = vector.load %arg11[%201, %c0_73] : memref<64x512xbf16, #tpu.memory_space<vmem>>, vector<8x512xbf16>
    %203 = arith.extf %202 : vector<8x512xbf16> to vector<8x512xf32>
    %204 = arith.truncf %195 : vector<8x128xf32> to vector<8x128xbf16>
    %c0_74 = arith.constant 0 : index
    %c0_75 = arith.constant 0 : index
    %205 = vector.load %arg4[%c0_74, %c0_75] : memref<128x512xbf16, #tpu.memory_space<vmem>>, vector<128x512xbf16>
    %cst_76 = arith.constant dense<0.000000e+00> : vector<8x512xf32>
    %206 = tpu.matmul %204, %205, %cst_76 {dimension_numbers = #tpu.dot_dimension_numbers<[1], [0], [0], [1], [0, 0, 1, 1], [], []>} : vector<8x128xbf16>, vector<128x512xbf16>, vector<8x512xf32> -> vector<8x512xf32>
    %207 = arith.addf %203, %206 : vector<8x512xf32>
    %208 = vector.broadcast %16 : vector<1x512xf32> to vector<8x512xf32>
    %209 = arith.mulf %207, %208 : vector<8x512xf32>
    %210 = math.tanh %209 : vector<8x512xf32>
    %211 = vector.extract_strided_slice %210 {offsets = [0, 0], sizes = [8, 128], strides = [1, 1]} : vector<8x512xf32> to vector<8x128xf32>
    %cst_77 = arith.constant 5.000000e-01 : f32
    %212 = vector.broadcast %cst_77 : f32 to vector<8x128xf32>
    %213 = arith.mulf %212, %211 : vector<8x128xf32>
    %cst_78 = arith.constant 5.000000e-01 : f32
    %214 = vector.broadcast %cst_78 : f32 to vector<8x128xf32>
    %215 = arith.addf %213, %214 : vector<8x128xf32>
    %216 = vector.extract_strided_slice %210 {offsets = [0, 128], sizes = [8, 128], strides = [1, 1]} : vector<8x512xf32> to vector<8x128xf32>
    %cst_79 = arith.constant 5.000000e-01 : f32
    %217 = vector.broadcast %cst_79 : f32 to vector<8x128xf32>
    %218 = arith.mulf %217, %216 : vector<8x128xf32>
    %cst_80 = arith.constant 5.000000e-01 : f32
    %219 = vector.broadcast %cst_80 : f32 to vector<8x128xf32>
    %220 = arith.addf %218, %219 : vector<8x128xf32>
    %221 = vector.extract_strided_slice %210 {offsets = [0, 256], sizes = [8, 128], strides = [1, 1]} : vector<8x512xf32> to vector<8x128xf32>
    %222 = vector.extract_strided_slice %210 {offsets = [0, 384], sizes = [8, 128], strides = [1, 1]} : vector<8x512xf32> to vector<8x128xf32>
    %cst_81 = arith.constant 5.000000e-01 : f32
    %223 = vector.broadcast %cst_81 : f32 to vector<8x128xf32>
    %224 = arith.mulf %223, %222 : vector<8x128xf32>
    %cst_82 = arith.constant 5.000000e-01 : f32
    %225 = vector.broadcast %cst_82 : f32 to vector<8x128xf32>
    %226 = arith.addf %224, %225 : vector<8x128xf32>
    %227 = arith.mulf %220, %193 : vector<8x128xf32>
    %228 = arith.mulf %215, %221 : vector<8x128xf32>
    %229 = arith.addf %227, %228 : vector<8x128xf32>
    %230 = math.tanh %229 : vector<8x128xf32>
    %231 = arith.mulf %226, %230 : vector<8x128xf32>
    %232 = arith.truncf %231 : vector<8x128xf32> to vector<8x128xbf16>
    %233 = arith.index_cast %200 : i32 to index
    %c0_83 = arith.constant 0 : index
    %234 = vector.load %arg12[%233, %c0_83] : memref<64x128xbf16, #tpu.memory_space<vmem>>, vector<8x128xbf16>
    tpu.vector_store %arg12[%233, %c0_83], %232 {strides = array<i32>} : memref<64x128xbf16, #tpu.memory_space<vmem>>, vector<8x128xbf16>,
    %c6_i32 = arith.constant 6 : i32
    %c8_i32_84 = arith.constant 8 : i32
    %235 = arith.muli %c6_i32, %c8_i32_84 : i32
    %236 = tpu.assume_multiple %235, 8 : i32
    %237 = arith.index_cast %236 : i32 to index
    %c0_85 = arith.constant 0 : index
    %238 = vector.load %arg11[%237, %c0_85] : memref<64x512xbf16, #tpu.memory_space<vmem>>, vector<8x512xbf16>
    %239 = arith.extf %238 : vector<8x512xbf16> to vector<8x512xf32>
    %240 = arith.truncf %231 : vector<8x128xf32> to vector<8x128xbf16>
    %c0_86 = arith.constant 0 : index
    %c0_87 = arith.constant 0 : index
    %241 = vector.load %arg4[%c0_86, %c0_87] : memref<128x512xbf16, #tpu.memory_space<vmem>>, vector<128x512xbf16>
    %cst_88 = arith.constant dense<0.000000e+00> : vector<8x512xf32>
    %242 = tpu.matmul %240, %241, %cst_88 {dimension_numbers = #tpu.dot_dimension_numbers<[1], [0], [0], [1], [0, 0, 1, 1], [], []>} : vector<8x128xbf16>, vector<128x512xbf16>, vector<8x512xf32> -> vector<8x512xf32>
    %243 = arith.addf %239, %242 : vector<8x512xf32>
    %244 = vector.broadcast %16 : vector<1x512xf32> to vector<8x512xf32>
    %245 = arith.mulf %243, %244 : vector<8x512xf32>
    %246 = math.tanh %245 : vector<8x512xf32>
    %247 = vector.extract_strided_slice %246 {offsets = [0, 0], sizes = [8, 128], strides = [1, 1]} : vector<8x512xf32> to vector<8x128xf32>
    %cst_89 = arith.constant 5.000000e-01 : f32
    %248 = vector.broadcast %cst_89 : f32 to vector<8x128xf32>
    %249 = arith.mulf %248, %247 : vector<8x128xf32>
    %cst_90 = arith.constant 5.000000e-01 : f32
    %250 = vector.broadcast %cst_90 : f32 to vector<8x128xf32>
    %251 = arith.addf %249, %250 : vector<8x128xf32>
    %252 = vector.extract_strided_slice %246 {offsets = [0, 128], sizes = [8, 128], strides = [1, 1]} : vector<8x512xf32> to vector<8x128xf32>
    %cst_91 = arith.constant 5.000000e-01 : f32
    %253 = vector.broadcast %cst_91 : f32 to vector<8x128xf32>
    %254 = arith.mulf %253, %252 : vector<8x128xf32>
    %cst_92 = arith.constant 5.000000e-01 : f32
    %255 = vector.broadcast %cst_92 : f32 to vector<8x128xf32>
    %256 = arith.addf %254, %255 : vector<8x128xf32>
    %257 = vector.extract_strided_slice %246 {offsets = [0, 256], sizes = [8, 128], strides = [1, 1]} : vector<8x512xf32> to vector<8x128xf32>
    %258 = vector.extract_strided_slice %246 {offsets = [0, 384], sizes = [8, 128], strides = [1, 1]} : vector<8x512xf32> to vector<8x128xf32>
    %cst_93 = arith.constant 5.000000e-01 : f32
    %259 = vector.broadcast %cst_93 : f32 to vector<8x128xf32>
    %260 = arith.mulf %259, %258 : vector<8x128xf32>
    %cst_94 = arith.constant 5.000000e-01 : f32
    %261 = vector.broadcast %cst_94 : f32 to vector<8x128xf32>
    %262 = arith.addf %260, %261 : vector<8x128xf32>
    %263 = arith.mulf %256, %229 : vector<8x128xf32>
    %264 = arith.mulf %251, %257 : vector<8x128xf32>
    %265 = arith.addf %263, %264 : vector<8x128xf32>
    %266 = math.tanh %265 : vector<8x128xf32>
    %267 = arith.mulf %262, %266 : vector<8x128xf32>
    %268 = arith.truncf %267 : vector<8x128xf32> to vector<8x128xbf16>
    %269 = arith.index_cast %236 : i32 to index
    %c0_95 = arith.constant 0 : index
    %270 = vector.load %arg12[%269, %c0_95] : memref<64x128xbf16, #tpu.memory_space<vmem>>, vector<8x128xbf16>
    tpu.vector_store %arg12[%269, %c0_95], %268 {strides = array<i32>} : memref<64x128xbf16, #tpu.memory_space<vmem>>, vector<8x128xbf16>,
    %c7_i32 = arith.constant 7 : i32
    %c8_i32_96 = arith.constant 8 : i32
    %271 = arith.muli %c7_i32, %c8_i32_96 : i32
    %272 = tpu.assume_multiple %271, 8 : i32
    %273 = arith.index_cast %272 : i32 to index
    %c0_97 = arith.constant 0 : index
    %274 = vector.load %arg11[%273, %c0_97] : memref<64x512xbf16, #tpu.memory_space<vmem>>, vector<8x512xbf16>
    %275 = arith.extf %274 : vector<8x512xbf16> to vector<8x512xf32>
    %276 = arith.truncf %267 : vector<8x128xf32> to vector<8x128xbf16>
    %c0_98 = arith.constant 0 : index
    %c0_99 = arith.constant 0 : index
    %277 = vector.load %arg4[%c0_98, %c0_99] : memref<128x512xbf16, #tpu.memory_space<vmem>>, vector<128x512xbf16>
    %cst_100 = arith.constant dense<0.000000e+00> : vector<8x512xf32>
    %278 = tpu.matmul %276, %277, %cst_100 {dimension_numbers = #tpu.dot_dimension_numbers<[1], [0], [0], [1], [0, 0, 1, 1], [], []>} : vector<8x128xbf16>, vector<128x512xbf16>, vector<8x512xf32> -> vector<8x512xf32>
    %279 = arith.addf %275, %278 : vector<8x512xf32>
    %280 = vector.broadcast %16 : vector<1x512xf32> to vector<8x512xf32>
    %281 = arith.mulf %279, %280 : vector<8x512xf32>
    %282 = math.tanh %281 : vector<8x512xf32>
    %283 = vector.extract_strided_slice %282 {offsets = [0, 0], sizes = [8, 128], strides = [1, 1]} : vector<8x512xf32> to vector<8x128xf32>
    %cst_101 = arith.constant 5.000000e-01 : f32
    %284 = vector.broadcast %cst_101 : f32 to vector<8x128xf32>
    %285 = arith.mulf %284, %283 : vector<8x128xf32>
    %cst_102 = arith.constant 5.000000e-01 : f32
    %286 = vector.broadcast %cst_102 : f32 to vector<8x128xf32>
    %287 = arith.addf %285, %286 : vector<8x128xf32>
    %288 = vector.extract_strided_slice %282 {offsets = [0, 128], sizes = [8, 128], strides = [1, 1]} : vector<8x512xf32> to vector<8x128xf32>
    %cst_103 = arith.constant 5.000000e-01 : f32
    %289 = vector.broadcast %cst_103 : f32 to vector<8x128xf32>
    %290 = arith.mulf %289, %288 : vector<8x128xf32>
    %cst_104 = arith.constant 5.000000e-01 : f32
    %291 = vector.broadcast %cst_104 : f32 to vector<8x128xf32>
    %292 = arith.addf %290, %291 : vector<8x128xf32>
    %293 = vector.extract_strided_slice %282 {offsets = [0, 256], sizes = [8, 128], strides = [1, 1]} : vector<8x512xf32> to vector<8x128xf32>
    %294 = vector.extract_strided_slice %282 {offsets = [0, 384], sizes = [8, 128], strides = [1, 1]} : vector<8x512xf32> to vector<8x128xf32>
    %cst_105 = arith.constant 5.000000e-01 : f32
    %295 = vector.broadcast %cst_105 : f32 to vector<8x128xf32>
    %296 = arith.mulf %295, %294 : vector<8x128xf32>
    %cst_106 = arith.constant 5.000000e-01 : f32
    %297 = vector.broadcast %cst_106 : f32 to vector<8x128xf32>
    %298 = arith.addf %296, %297 : vector<8x128xf32>
    %299 = arith.mulf %292, %265 : vector<8x128xf32>
    %300 = arith.mulf %287, %293 : vector<8x128xf32>
    %301 = arith.addf %299, %300 : vector<8x128xf32>
    %302 = math.tanh %301 : vector<8x128xf32>
    %303 = arith.mulf %298, %302 : vector<8x128xf32>
    %304 = arith.truncf %303 : vector<8x128xf32> to vector<8x128xbf16>
    %305 = arith.index_cast %272 : i32 to index
    %c0_107 = arith.constant 0 : index
    %306 = vector.load %arg12[%305, %c0_107] : memref<64x128xbf16, #tpu.memory_space<vmem>>, vector<8x128xbf16>
    tpu.vector_store %arg12[%305, %c0_107], %304 {strides = array<i32>} : memref<64x128xbf16, #tpu.memory_space<vmem>>, vector<8x128xbf16>,
    %c8_i32_108 = arith.constant 8 : i32
    %c0_109 = arith.constant 0 : index
    %c0_110 = arith.constant 0 : index
    %307 = vector.load %arg9[%c0_109, %c0_110] : memref<8x128xf32, #tpu.memory_space<vmem>>, vector<8x128xf32>
    tpu.vector_store %arg9[%c0_109, %c0_110], %303 {strides = array<i32>} : memref<8x128xf32, #tpu.memory_space<vmem>>, vector<8x128xf32>,
    %c0_111 = arith.constant 0 : index
    %c0_112 = arith.constant 0 : index
    %308 = vector.load %arg10[%c0_111, %c0_112] : memref<8x128xf32, #tpu.memory_space<vmem>>, vector<8x128xf32>
    tpu.vector_store %arg10[%c0_111, %c0_112], %301 {strides = array<i32>} : memref<8x128xf32, #tpu.memory_space<vmem>>, vector<8x128xf32>,
    tpu.wait_dma2 semaphore(%arg14 : memref<!tpu.dma_semaphore, #tpu.memory_space<semaphore_mem>>) src(%arg6 : memref<128x128xbf16, #tpu.memory_space<any>>) dst(%arg13 : memref<128x128xbf16, #tpu.memory_space<vmem>>)
    %c0_113 = arith.constant 0 : index
    %c0_114 = arith.constant 0 : index
    %309 = vector.load %arg12[%c0_113, %c0_114] : memref<64x128xbf16, #tpu.memory_space<vmem>>, vector<64x128xbf16>
    %c0_115 = arith.constant 0 : index
    %c0_116 = arith.constant 0 : index
    %310 = vector.load %arg13[%c0_115, %c0_116] : memref<128x128xbf16, #tpu.memory_space<vmem>>, vector<128x128xbf16>
    %cst_117 = arith.constant dense<0.000000e+00> : vector<64x128xf32>
    %311 = tpu.matmul %309, %310, %cst_117 {dimension_numbers = #tpu.dot_dimension_numbers<[1], [0], [0], [1], [0, 0, 1, 1], [], []>} : vector<64x128xbf16>, vector<128x128xbf16>, vector<64x128xf32> -> vector<64x128xf32>
    %c0_118 = arith.constant 0 : index
    %c0_119 = arith.constant 0 : index
    %312 = vector.load %arg7[%c0_118, %c0_119] : memref<1x128xf32, #tpu.memory_space<vmem>>, vector<1x128xf32>
    %313 = vector.broadcast %312 : vector<1x128xf32> to vector<64x128xf32>
    %314 = arith.addf %311, %313 : vector<64x128xf32>
    %c0_120 = arith.constant 0 : index
    %c0_121 = arith.constant 0 : index
    %315 = vector.load %arg8[%c0_120, %c0_121] : memref<64x128xf32, #tpu.memory_space<vmem>>, vector<64x128xf32>
    tpu.vector_store %arg8[%c0_120, %c0_121], %314 {strides = array<i32>} : memref<64x128xf32, #tpu.memory_space<vmem>>, vector<64x128xf32>,
    return
  }
}

</mosaic_0001>

<llo_original>
// kernel: tpu_custom_call.1
$region0: #{tpu_custom_call.1}
  #allocation0 [shape = 'u32[]', space=smem, size = 0x4, offset = 0x4, fixed_abs, tag = 'smem constant byte address 0x4 - core index']
  #allocation1 [shape = 'u32[144,128]{1,0:T(1,128)}', space=vmem, size = 0x12000, scoped, tag = 'internal scratch']
  #allocation2 [shape = 'bf16[64,512]{1,0:T(8,128)(2,1)}', space=vmem, size = 0x10000, scoped, tag = 'scratch operand']
  #allocation3 [shape = 'bf16[64,128]{1,0:T(8,128)(2,1)}', space=vmem, size = 0x4000, scoped, tag = 'scratch operand']
  #allocation4 [shape = 'bf16[128,128]{1,0:T(8,128)(2,1)}', space=vmem, size = 0x8000, scoped, tag = 'scratch operand']
  #allocation5 [shape = 's32[1]{0}', space=sflag, size = 0x4, scoped, tag = 'scratch operand']
  #allocation19 [shape = 's32[]', space=sflag, size = 0x4, offset = 0, fixed_abs, tag = 'sflag constant byte address 0x0 - dummy sync flag']
  #allocation20 [shape = 's32[]', space=sflag, size = 0x4, offset = 0, fixed_abs, tag = 'sflag constant byte address 0x0 - dummy sync flag']
  #allocation21 [shape = 'u32[]', space=smem, size = 0x4, offset = 0x44, fixed_abs, tag = 'smem constant byte address 0x44 - assertion arg 0']
  #allocation22 [shape = 'u32[]', space=smem, size = 0x4, offset = 0x48, fixed_abs, tag = 'smem constant byte address 0x48 - assertion arg 1']
  %s0 = inlined_call_operand.hbm [shape: bf16[64,128], index: 0, kind: input, shape index: {}]
  %s1 = inlined_call_operand.hbm [shape: f32[8,128], index: 1, kind: input, shape index: {}]
  %s2 = inlined_call_operand.hbm [shape: f32[8,128], index: 2, kind: input, shape index: {}]
  %s3 = inlined_call_operand.hbm [shape: bf16[128,512], index: 3, kind: input, shape index: {}]
  %s4 = inlined_call_operand.hbm [shape: bf16[128,512], index: 4, kind: input, shape index: {}]
  %s5 = inlined_call_operand.vmem [shape: f32[1,512], index: 5, kind: input, shape index: {}]
  %s6 = inlined_call_operand.hbm [shape: bf16[128,128], index: 6, kind: input, shape index: {}]
  %s7 = inlined_call_operand.vmem [shape: f32[1,128], index: 7, kind: input, shape index: {}]
  %s8 = inlined_call_operand.hbm [shape: f32[64,128], index: 8, kind: output, shape index: {0}]
  %s9 = inlined_call_operand.hbm [shape: f32[8,128], index: 9, kind: output, shape index: {1}]
  %s10 = inlined_call_operand.hbm [shape: f32[8,128], index: 10, kind: output, shape index: {2}]
  %11 = xla_tuple %s8, %s9, %s10
  %s12 = sld [smem:[#allocation0]]
  $region78: #{tpu_custom_call.1} parent=0
    _
  %s14 = ssub.s32 1, %s12
  %s15 = scalar_select 0, %s14, %s12
  $region1: #{tpu_custom_call.1} parent=0
    #allocation6 [shape = 'u8[16384]{0}', space=vmem, size = 0x4000, scoped, tag = 'input window, operand 0, single buffered']
    #allocation7 [shape = 's32[1]{0}', space=sflag, size = 0x4, scoped, tag = 'scoped memory for tpu_custom_call.1']
    #allocation8 [shape = 's32[1]{0}', space=sflag, size = 0x4, scoped, tag = 'scoped memory for tpu_custom_call.1']
    #allocation9 [shape = 'u8[4096]{0}', space=vmem, size = 0x1000, scoped, tag = 'input window, operand 1, single buffered']
    #allocation10 [shape = 's32[1]{0}', space=sflag, size = 0x4, scoped, tag = 'scoped memory for tpu_custom_call.1']
    #allocation11 [shape = 'u8[4096]{0}', space=vmem, size = 0x1000, scoped, tag = 'input window, operand 2, single buffered']
    #allocation12 [shape = 'u8[131072]{0}', space=vmem, size = 0x20000, scoped, tag = 'input window, operand 3, single buffered']
    #allocation13 [shape = 's32[1]{0}', space=sflag, size = 0x4, scoped, tag = 'scoped memory for tpu_custom_call.1']
    #allocation14 [shape = 'u8[131072]{0}', space=vmem, size = 0x20000, scoped, tag = 'input window, operand 4, single buffered']
    #allocation15 [shape = 'u8[32768]{0}', space=vmem, size = 0x8000, scoped, tag = 'output window, operand 0, single buffered']
    #allocation16 [shape = 'u8[4096]{0}', space=vmem, size = 0x1000, scoped, tag = 'output window, operand 1, single buffered']
    #allocation17 [shape = 's32[1]{0}', space=sflag, size = 0x4, scoped, tag = 'scoped memory for tpu_custom_call.1']
    #allocation18 [shape = 'u8[4096]{0}', space=vmem, size = 0x1000, scoped, tag = 'output window, operand 2, single buffered']
    %16 = vsyncpa [#allocation7], 0
    %17 = vsyncpa [#allocation10], 0
    %18 = vsyncpa [#allocation13], 0
    %19 = vsyncpa [#allocation8], 0
    %20 = vsyncpa [#allocation17], 0
    // Predicated region
    $region2: #{tpu_custom_call.1} parent=1 // pred_check
      _
    $region3: #{tpu_custom_call.1} parent=1 // pred_check_branch
      %22 = sbr.rel (0) target = $region5
    $region4: #{tpu_custom_call.1} parent=1 // pred_region
      %s24 = ssub.s32 512, 512
      %25 = vsyncadd [#allocation7], %s24
      %s26 = sshll.u32 [#allocation6], 4
      %s27 = int_to_ptr.vmem [resolvable:$true] %s26
      %32 = dma.hbm_to_vmem [thread:$0]  %s0, 512, %s27, [#allocation7], 64, 64, 4
    $region5: #{tpu_custom_call.1} parent=1 // pred_fallthru
      _
    // Predicated region
    $region6: #{tpu_custom_call.1} parent=1 // pred_check
      _
    $region7: #{tpu_custom_call.1} parent=1 // pred_check_branch
      %34 = sbr.rel (0) target = $region9
    $region8: #{tpu_custom_call.1} parent=1 // pred_region
      %s36 = ssub.s32 128, 128
      %37 = vsyncadd [#allocation10], %s36
      %s39 = sshll.u32 [#allocation9], 4
      %s40 = int_to_ptr.vmem [resolvable:$true] %s39
      %42 = dma.hbm_to_vmem [thread:$0]  %s1, 128, %s40, [#allocation10]
    $region9: #{tpu_custom_call.1} parent=1 // pred_fallthru
      _
    // Predicated region
    $region10: #{tpu_custom_call.1} parent=1 // pred_check
      _
    $region11: #{tpu_custom_call.1} parent=1 // pred_check_branch
      %44 = sbr.rel (0) target = $region13
    $region12: #{tpu_custom_call.1} parent=1 // pred_region
      %s46 = ssub.s32 128, 128
      %47 = vsyncadd [#allocation10], %s46
      %s49 = sshll.u32 [#allocation11], 4
      %s50 = int_to_ptr.vmem [resolvable:$true] %s49
      %52 = dma.hbm_to_vmem [thread:$0]  %s2, 128, %s50, [#allocation10]
    $region13: #{tpu_custom_call.1} parent=1 // pred_fallthru
      _
    // Predicated region
    $region14: #{tpu_custom_call.1} parent=1 // pred_check
      _
    $region15: #{tpu_custom_call.1} parent=1 // pred_check_branch
      %54 = sbr.rel (0) target = $region17
    $region16: #{tpu_custom_call.1} parent=1 // pred_region
      %s56 = ssub.s32 4096, 4096
      %57 = vsyncadd [#allocation13], %s56
      %s58 = sshll.u32 [#allocation12], 4
      %s59 = int_to_ptr.vmem [resolvable:$true] %s58
      %64 = dma.hbm_to_vmem [thread:$0]  %s3, 4096, %s59, [#allocation13], 256, 256, 16
    $region17: #{tpu_custom_call.1} parent=1 // pred_fallthru
      _
    // Predicated region
    $region18: #{tpu_custom_call.1} parent=1 // pred_check
      _
    $region19: #{tpu_custom_call.1} parent=1 // pred_check_branch
      %66 = sbr.rel (0) target = $region21
    $region20: #{tpu_custom_call.1} parent=1 // pred_region
      %s68 = ssub.s32 4096, 4096
      %69 = vsyncadd [#allocation13], %s68
      %s70 = sshll.u32 [#allocation14], 4
      %s71 = int_to_ptr.vmem [resolvable:$true] %s70
      %76 = dma.hbm_to_vmem [thread:$0]  %s4, 4096, %s71, [#allocation13], 256, 256, 16
    $region21: #{tpu_custom_call.1} parent=1 // pred_fallthru
      _
    // Predicated region
    $region22: #{tpu_custom_call.1} parent=1 // pred_check
      _
    $region23: #{tpu_custom_call.1} parent=1 // pred_check_branch
      %78 = sbr.rel (0) target = $region25
    $region24: #{tpu_custom_call.1} parent=1 // pred_region
      _
    $region25: #{tpu_custom_call.1} parent=1 // pred_fallthru
      _
    // Predicated region
    $region26: #{tpu_custom_call.1} parent=1 // pred_check
      _
    $region27: #{tpu_custom_call.1} parent=1 // pred_check_branch
      %80 = sbr.rel (0) target = $region29
    $region28: #{tpu_custom_call.1} parent=1 // pred_region
      _
    $region29: #{tpu_custom_call.1} parent=1 // pred_fallthru
      _
    // Predicated region
    $region30: #{tpu_custom_call.1} parent=1 // pred_check
      _
    $region31: #{tpu_custom_call.1} parent=1 // pred_check_branch
      %82 = sbr.rel (0) target = $region33
    $region32: #{tpu_custom_call.1} parent=1 // pred_region
      %83 = dma.done [#allocation7], 512
    $region33: #{tpu_custom_call.1} parent=1 // pred_fallthru
      _
    // Predicated region
    $region34: #{tpu_custom_call.1} parent=1 // pred_check
      _
    $region35: #{tpu_custom_call.1} parent=1 // pred_check_branch
      %85 = sbr.rel (0) target = $region37
    $region36: #{tpu_custom_call.1} parent=1 // pred_region
      %86 = dma.done [#allocation10], 128
    $region37: #{tpu_custom_call.1} parent=1 // pred_fallthru
      _
    // Predicated region
    $region38: #{tpu_custom_call.1} parent=1 // pred_check
      _
    $region39: #{tpu_custom_call.1} parent=1 // pred_check_branch
      %88 = sbr.rel (0) target = $region41
    $region40: #{tpu_custom_call.1} parent=1 // pred_region
      %89 = dma.done [#allocation10], 128
    $region41: #{tpu_custom_call.1} parent=1 // pred_fallthru
      _
    // Predicated region
    $region42: #{tpu_custom_call.1} parent=1 // pred_check
      _
    $region43: #{tpu_custom_call.1} parent=1 // pred_check_branch
      %91 = sbr.rel (0) target = $region45
    $region44: #{tpu_custom_call.1} parent=1 // pred_region
      %92 = dma.done [#allocation13], 4096
    $region45: #{tpu_custom_call.1} parent=1 // pred_fallthru
      _
    // Predicated region
    $region46: #{tpu_custom_call.1} parent=1 // pred_check
      _
    $region47: #{tpu_custom_call.1} parent=1 // pred_check_branch
      %94 = sbr.rel (0) target = $region49
    $region48: #{tpu_custom_call.1} parent=1 // pred_region
      %95 = dma.done [#allocation13], 4096
    $region49: #{tpu_custom_call.1} parent=1 // pred_fallthru
      _
    // Predicated region
    $region50: #{tpu_custom_call.1} parent=1 // pred_check
      _
    $region51: #{tpu_custom_call.1} parent=1 // pred_check_branch
      %98 = sbr.rel target = $region53
    $region52: #{tpu_custom_call.1} parent=1 // pred_region
      %99 = sst [smem:[#allocation21]] [#allocation20]
      %100 = sst [smem:[#allocation22]] [#allocation19]
    $region53: #{tpu_custom_call.1} parent=1 // pred_fallthru
      _
    %102 = shalt.err (0)
    %s104 = sshll.u32 [#allocation4], 4
    %s105 = int_to_ptr.vmem [resolvable:$true] %s104
    %107 = dma.hbm_to_vmem [thread:$0]  %s6, 1024, %s105, [#allocation5]
    %v108 = vld [vmem:[#allocation6] sm:$0xf]
    %v109 = vld [vmem:[#allocation6 + $0x4] sm:$0xf]
    %v110 = vld [vmem:[#allocation6 + $0x8] sm:$0xf]
    %v111 = vld [vmem:[#allocation6 + $0xc] sm:$0xf]
    %v112 = vld [vmem:[#allocation6 + $0x10] sm:$0xf]
    %v113 = vld [vmem:[#allocation6 + $0x14] sm:$0xf]
    %v114 = vld [vmem:[#allocation6 + $0x18] sm:$0xf]
    %v115 = vld [vmem:[#allocation6 + $0x1c] sm:$0xf]
    %v116 = vld [vmem:[#allocation12] sm:$0xff]
    %v117 = vld [vmem:[#allocation12 + $0x8] sm:$0xff]
    %v118 = vld [vmem:[#allocation12 + $0x10] sm:$0xff]
    %v119 = vld [vmem:[#allocation12 + $0x18] sm:$0xff]
    %v120 = vld [vmem:[#allocation12 + $0x20] sm:$0xff]
    %v121 = vld [vmem:[#allocation12 + $0x28] sm:$0xff]
    %v122 = vld [vmem:[#allocation12 + $0x30] sm:$0xff]
    %v123 = vld [vmem:[#allocation12 + $0x38] sm:$0xff]
    %v124 = vld [vmem:[#allocation12 + $0x40] sm:$0xff]
    %v125 = vld [vmem:[#allocation12 + $0x48] sm:$0xff]
    %v126 = vld [vmem:[#allocation12 + $0x50] sm:$0xff]
    %v127 = vld [vmem:[#allocation12 + $0x58] sm:$0xff]
    %v128 = vld [vmem:[#allocation12 + $0x60] sm:$0xff]
    %v129 = vld [vmem:[#allocation12 + $0x68] sm:$0xff]
    %v130 = vld [vmem:[#allocation12 + $0x70] sm:$0xff]
    %v131 = vld [vmem:[#allocation12 + $0x78] sm:$0xff]
    %v132 = vld [vmem:[#allocation12 + $0x80] sm:$0xff]
    %v133 = vld [vmem:[#allocation12 + $0x88] sm:$0xff]
    %v134 = vld [vmem:[#allocation12 + $0x90] sm:$0xff]
    %v135 = vld [vmem:[#allocation12 + $0x98] sm:$0xff]
    %v136 = vld [vmem:[#allocation12 + $0xa0] sm:$0xff]
    %v137 = vld [vmem:[#allocation12 + $0xa8] sm:$0xff]
    %v138 = vld [vmem:[#allocation12 + $0xb0] sm:$0xff]
    %v139 = vld [vmem:[#allocation12 + $0xb8] sm:$0xff]
    %v140 = vld [vmem:[#allocation12 + $0xc0] sm:$0xff]
    %v141 = vld [vmem:[#allocation12 + $0xc8] sm:$0xff]
    %v142 = vld [vmem:[#allocation12 + $0xd0] sm:$0xff]
    %v143 = vld [vmem:[#allocation12 + $0xd8] sm:$0xff]
    %v144 = vld [vmem:[#allocation12 + $0xe0] sm:$0xff]
    %v145 = vld [vmem:[#allocation12 + $0xe8] sm:$0xff]
    %v146 = vld [vmem:[#allocation12 + $0xf0] sm:$0xff]
    %v147 = vld [vmem:[#allocation12 + $0xf8] sm:$0xff]
    %v148 = vld [vmem:[%s5] sm:$0xf]
    %v150 = vlaneseq
    %v151 = vshrl.u32 %v150, 7
    %v152 = vsub.s32 0, %v151
    %v153 = vrot.slane %v148, %v152
    %v154 = vlaneseq
    %v155 = vshrl.u32 %v154, 7
    %v156 = vsub.s32 1, %v155
    %v157 = vrot.slane %v148, %v156
    %v158 = vlaneseq
    %v159 = vshrl.u32 %v158, 7
    %v160 = vsub.s32 2, %v159
    %v161 = vrot.slane %v148, %v160
    %v162 = vlaneseq
    %v163 = vshrl.u32 %v162, 7
    %v164 = vsub.s32 3, %v163
    %v165 = vrot.slane %v148, %v164
    %v178 = vunpack.c.l.b16 %v108
    %v179 = vunpack.c.l.b16 %v109
    %v180 = vunpack.c.l.b16 %v110
    %v181 = vunpack.c.l.b16 %v111
    %v182 = vunpack.c.l.b16 %v112
    %v183 = vunpack.c.l.b16 %v113
    %v184 = vunpack.c.l.b16 %v114
    %v185 = vunpack.c.l.b16 %v115
    %v186 = vpack.c.b16 %v179, %v178
    %v187 = vpack.c.b16 %v181, %v180
    %v188 = vpack.c.b16 %v183, %v182
    %v189 = vpack.c.b16 %v185, %v184
    %v226 = vunpack.c.l.b16 %v116
    %v227 = vunpack.c.h.b16 %v116
    %v228 = vunpack.c.l.b16 %v117
    %v229 = vunpack.c.h.b16 %v117
    %v230 = vunpack.c.l.b16 %v118
    %v231 = vunpack.c.h.b16 %v118
    %v232 = vunpack.c.l.b16 %v119
    %v233 = vunpack.c.h.b16 %v119
    %v234 = vunpack.c.l.b16 %v120
    %v235 = vunpack.c.h.b16 %v120
    %v236 = vunpack.c.l.b16 %v121
    %v237 = vunpack.c.h.b16 %v121
    %v238 = vunpack.c.l.b16 %v122
    %v239 = vunpack.c.h.b16 %v122
    %v240 = vunpack.c.l.b16 %v123
    %v241 = vunpack.c.h.b16 %v123
    %v242 = vunpack.c.l.b16 %v124
    %v243 = vunpack.c.h.b16 %v124
    %v244 = vunpack.c.l.b16 %v125
    %v245 = vunpack.c.h.b16 %v125
    %v246 = vunpack.c.l.b16 %v126
    %v247 = vunpack.c.h.b16 %v126
    %v248 = vunpack.c.l.b16 %v127
    %v249 = vunpack.c.h.b16 %v127
    %v250 = vunpack.c.l.b16 %v128
    %v251 = vunpack.c.h.b16 %v128
    %v252 = vunpack.c.l.b16 %v129
    %v253 = vunpack.c.h.b16 %v129
    %v254 = vunpack.c.l.b16 %v130
    %v255 = vunpack.c.h.b16 %v130
    %v256 = vunpack.c.l.b16 %v131
    %v257 = vunpack.c.h.b16 %v131
    %v258 = vunpack.c.l.b16 %v132
    %v259 = vunpack.c.h.b16 %v132
    %v260 = vunpack.c.l.b16 %v133
    %v261 = vunpack.c.h.b16 %v133
    %v262 = vunpack.c.l.b16 %v134
    %v263 = vunpack.c.h.b16 %v134
    %v264 = vunpack.c.l.b16 %v135
    %v265 = vunpack.c.h.b16 %v135
    %v266 = vunpack.c.l.b16 %v136
    %v267 = vunpack.c.h.b16 %v136
    %v268 = vunpack.c.l.b16 %v137
    %v269 = vunpack.c.h.b16 %v137
    %v270 = vunpack.c.l.b16 %v138
    %v271 = vunpack.c.h.b16 %v138
    %v272 = vunpack.c.l.b16 %v139
    %v273 = vunpack.c.h.b16 %v139
    %v274 = vunpack.c.l.b16 %v140
    %v275 = vunpack.c.h.b16 %v140
    %v276 = vunpack.c.l.b16 %v141
    %v277 = vunpack.c.h.b16 %v141
    %v278 = vunpack.c.l.b16 %v142
    %v279 = vunpack.c.h.b16 %v142
    %v280 = vunpack.c.l.b16 %v143
    %v281 = vunpack.c.h.b16 %v143
    %v282 = vunpack.c.l.b16 %v144
    %v283 = vunpack.c.h.b16 %v144
    %v284 = vunpack.c.l.b16 %v145
    %v285 = vunpack.c.h.b16 %v145
    %v286 = vunpack.c.l.b16 %v146
    %v287 = vunpack.c.h.b16 %v146
    %v288 = vunpack.c.l.b16 %v147
    %v289 = vunpack.c.h.b16 %v147
    %v290 = vpack.c.b16 %v230, %v226
    %v291 = vpack.c.b16 %v231, %v227
    %v292 = vpack.c.b16 %v232, %v228
    %v293 = vpack.c.b16 %v233, %v229
    %v294 = vpack.c.b16 %v238, %v234
    %v295 = vpack.c.b16 %v239, %v235
    %v296 = vpack.c.b16 %v240, %v236
    %v297 = vpack.c.b16 %v241, %v237
    %v298 = vpack.c.b16 %v246, %v242
    %v299 = vpack.c.b16 %v247, %v243
    %v300 = vpack.c.b16 %v248, %v244
    %v301 = vpack.c.b16 %v249, %v245
    %v302 = vpack.c.b16 %v254, %v250
    %v303 = vpack.c.b16 %v255, %v251
    %v304 = vpack.c.b16 %v256, %v252
    %v305 = vpack.c.b16 %v257, %v253
    %v306 = vpack.c.b16 %v262, %v258
    %v307 = vpack.c.b16 %v263, %v259
    %v308 = vpack.c.b16 %v264, %v260
    %v309 = vpack.c.b16 %v265, %v261
    %v310 = vpack.c.b16 %v270, %v266
    %v311 = vpack.c.b16 %v271, %v267
    %v312 = vpack.c.b16 %v272, %v268
    %v313 = vpack.c.b16 %v273, %v269
    %v314 = vpack.c.b16 %v278, %v274
    %v315 = vpack.c.b16 %v279, %v275
    %v316 = vpack.c.b16 %v280, %v276
    %v317 = vpack.c.b16 %v281, %v277
    %v318 = vpack.c.b16 %v286, %v282
    %v319 = vpack.c.b16 %v287, %v283
    %v320 = vpack.c.b16 %v288, %v284
    %v321 = vpack.c.b16 %v289, %v285
    %354 = vmatprep.subr.bf16.mxu0 %v319
    %355 = vmatpush1.bf16.msra.mxu0 %v318
    %356 = vmatprep.subr.bf16.mxu0 %v315
    %357 = vmatpush1.bf16.msra.mxu0 %v314
    %358 = vmatprep.subr.bf16.mxu0 %v311
    %359 = vmatpush1.bf16.msra.mxu0 %v310
    %360 = vmatprep.subr.bf16.mxu0 %v307
    %361 = vmatpush1.bf16.msra.mxu0 %v306
    %362 = vmatprep.subr.bf16.mxu0 %v303
    %363 = vmatpush1.bf16.msra.mxu0 %v302
    %364 = vmatprep.subr.bf16.mxu0 %v299
    %365 = vmatpush1.bf16.msra.mxu0 %v298
    %366 = vmatprep.subr.bf16.mxu0 %v295
    %367 = vmatpush1.bf16.msra.mxu0 %v294
    %368 = vmatprep.subr.bf16.mxu0 %v291
    %369 = vmatpush1.bf16.msra.mxu0 %v290
    %370 = vmatprep.subr.bf16.mxu0 0
    %371 = vmatpush2.bf16.msra.mxu0 0
    %372 = vmatprep.subr.bf16.mxu0 0
    %373 = vmatpush2.bf16.msra.mxu0 0
    %374 = vmatprep.subr.bf16.mxu0 0
    %375 = vmatpush2.bf16.msra.mxu0 0
    %376 = vmatprep.subr.bf16.mxu0 0
    %377 = vmatpush2.bf16.msra.mxu0 0
    %378 = vmatprep.subr.bf16.mxu0 0
    %379 = vmatpush2.bf16.msra.mxu0 0
    %380 = vmatprep.subr.bf16.mxu0 0
    %381 = vmatpush2.bf16.msra.mxu0 0
    %382 = vmatprep.subr.bf16.mxu0 0
    %383 = vmatpush2.bf16.msra.mxu0 0
    %384 = vmatprep.subr.bf16.mxu0 0
    %385 = vmatpush2.bf16.msra.mxu0 0
    %386 = vmatprep.mubr.bf16.mxu0 0
    %387 = vmatmul.mubr.bf16.gmra.mxu0 %v186
    %v388 = vpop.f32.mrf.mxu0
    %v389 = vadd.f32 %v153, %v388
    %v390 = vpop.f32.mrf.mxu0
    %v391 = vadd.f32 %v157, %v390
    %v392 = vpop.f32.mrf.mxu0
    %v393 = vadd.f32 %v153, %v392
    %v394 = vpop.f32.mrf.mxu0
    %v395 = vadd.f32 %v157, %v394
    %396 = vmatprep.mubr.bf16.mxu0 0
    %397 = vmatmul.mubr.bf16.gmra.mxu0 %v187
    %v398 = vpop.f32.mrf.mxu0
    %v399 = vadd.f32 %v153, %v398
    %v400 = vpop.f32.mrf.mxu0
    %v401 = vadd.f32 %v157, %v400
    %v402 = vpop.f32.mrf.mxu0
    %v403 = vadd.f32 %v153, %v402
    %v404 = vpop.f32.mrf.mxu0
    %v405 = vadd.f32 %v157, %v404
    %406 = vmatprep.mubr.bf16.mxu0 0
    %407 = vmatmul.mubr.bf16.gmra.mxu0 %v188
    %v408 = vpop.f32.mrf.mxu0
    %v409 = vadd.f32 %v153, %v408
    %v410 = vpop.f32.mrf.mxu0
    %v411 = vadd.f32 %v157, %v410
    %v412 = vpop.f32.mrf.mxu0
    %v413 = vadd.f32 %v153, %v412
    %v414 = vpop.f32.mrf.mxu0
    %v415 = vadd.f32 %v157, %v414
    %416 = vmatprep.mubr.bf16.mxu0 0
    %417 = vmatmul.mubr.bf16.gmra.mxu0 %v189
    %v418 = vpop.f32.mrf.mxu0
    %v419 = vadd.f32 %v153, %v418
    %v420 = vpop.f32.mrf.mxu0
    %v421 = vadd.f32 %v157, %v420
    %v422 = vpop.f32.mrf.mxu0
    %v423 = vadd.f32 %v153, %v422
    %v424 = vpop.f32.mrf.mxu0
    %v425 = vadd.f32 %v157, %v424
    %426 = vdwg.mxu0
    %427 = vmatprep.subr.bf16.mxu0 %v321
    %428 = vmatpush1.bf16.msra.mxu0 %v320
    %429 = vmatprep.subr.bf16.mxu0 %v317
    %430 = vmatpush1.bf16.msra.mxu0 %v316
    %431 = vmatprep.subr.bf16.mxu0 %v313
    %432 = vmatpush1.bf16.msra.mxu0 %v312
    %433 = vmatprep.subr.bf16.mxu0 %v309
    %434 = vmatpush1.bf16.msra.mxu0 %v308
    %435 = vmatprep.subr.bf16.mxu0 %v305
    %436 = vmatpush1.bf16.msra.mxu0 %v304
    %437 = vmatprep.subr.bf16.mxu0 %v301
    %438 = vmatpush1.bf16.msra.mxu0 %v300
    %439 = vmatprep.subr.bf16.mxu0 %v297
    %440 = vmatpush1.bf16.msra.mxu0 %v296
    %441 = vmatprep.subr.bf16.mxu0 %v293
    %442 = vmatpush1.bf16.msra.mxu0 %v292
    %443 = vmatprep.subr.bf16.mxu0 0
    %444 = vmatpush2.bf16.msra.mxu0 0
    %445 = vmatprep.subr.bf16.mxu0 0
    %446 = vmatpush2.bf16.msra.mxu0 0
    %447 = vmatprep.subr.bf16.mxu0 0
    %448 = vmatpush2.bf16.msra.mxu0 0
    %449 = vmatprep.subr.bf16.mxu0 0
    %450 = vmatpush2.bf16.msra.mxu0 0
    %451 = vmatprep.subr.bf16.mxu0 0
    %452 = vmatpush2.bf16.msra.mxu0 0
    %453 = vmatprep.subr.bf16.mxu0 0
    %454 = vmatpush2.bf16.msra.mxu0 0
    %455 = vmatprep.subr.bf16.mxu0 0
    %456 = vmatpush2.bf16.msra.mxu0 0
    %457 = vmatprep.subr.bf16.mxu0 0
    %458 = vmatpush2.bf16.msra.mxu0 0
    %459 = vmatprep.mubr.bf16.mxu0 0
    %460 = vmatmul.mubr.bf16.gmra.mxu0 %v186
    %v461 = vpop.f32.mrf.mxu0
    %v462 = vadd.f32 %v161, %v461
    %v463 = vpop.f32.mrf.mxu0
    %v464 = vadd.f32 %v165, %v463
    %v465 = vpop.f32.mrf.mxu0
    %v466 = vadd.f32 %v161, %v465
    %v467 = vpop.f32.mrf.mxu0
    %v468 = vadd.f32 %v165, %v467
    %469 = vmatprep.mubr.bf16.mxu0 0
    %470 = vmatmul.mubr.bf16.gmra.mxu0 %v187
    %v471 = vpop.f32.mrf.mxu0
    %v472 = vadd.f32 %v161, %v471
    %v473 = vpop.f32.mrf.mxu0
    %v474 = vadd.f32 %v165, %v473
    %v475 = vpop.f32.mrf.mxu0
    %v476 = vadd.f32 %v161, %v475
    %v477 = vpop.f32.mrf.mxu0
    %v478 = vadd.f32 %v165, %v477
    %479 = vmatprep.mubr.bf16.mxu0 0
    %480 = vmatmul.mubr.bf16.gmra.mxu0 %v188
    %v481 = vpop.f32.mrf.mxu0
    %v482 = vadd.f32 %v161, %v481
    %v483 = vpop.f32.mrf.mxu0
    %v484 = vadd.f32 %v165, %v483
    %v485 = vpop.f32.mrf.mxu0
    %v486 = vadd.f32 %v161, %v485
    %v487 = vpop.f32.mrf.mxu0
    %v488 = vadd.f32 %v165, %v487
    %489 = vmatprep.mubr.bf16.mxu0 0
    %490 = vmatmul.mubr.bf16.gmra.mxu0 %v189
    %v491 = vpop.f32.mrf.mxu0
    %v492 = vadd.f32 %v161, %v491
    %v493 = vpop.f32.mrf.mxu0
    %v494 = vadd.f32 %v165, %v493
    %v495 = vpop.f32.mrf.mxu0
    %v496 = vadd.f32 %v161, %v495
    %v497 = vpop.f32.mrf.mxu0
    %v498 = vadd.f32 %v165, %v497
    %499 = vdwg.mxu0
    %v500 = vpack.c.bf16 %v393, %v389
    %v501 = vpack.c.bf16 %v395, %v391
    %v502 = vpack.c.bf16 %v466, %v462
    %v503 = vpack.c.bf16 %v468, %v464
    %v504 = vpack.c.bf16 %v403, %v399
    %v505 = vpack.c.bf16 %v405, %v401
    %v506 = vpack.c.bf16 %v476, %v472
    %v507 = vpack.c.bf16 %v478, %v474
    %v508 = vpack.c.bf16 %v413, %v409
    %v509 = vpack.c.bf16 %v415, %v411
    %v510 = vpack.c.bf16 %v486, %v482
    %v511 = vpack.c.bf16 %v488, %v484
    %v512 = vpack.c.bf16 %v423, %v419
    %v513 = vpack.c.bf16 %v425, %v421
    %v514 = vpack.c.bf16 %v496, %v492
    %v515 = vpack.c.bf16 %v498, %v494
    %v532 = vunpack.c.l.b16 %v500
    %v533 = vunpack.c.l.b16 %v501
    %v534 = vunpack.c.l.b16 %v502
    %v535 = vunpack.c.l.b16 %v503
    %v536 = vunpack.c.h.b16 %v500
    %v537 = vunpack.c.h.b16 %v501
    %v538 = vunpack.c.h.b16 %v502
    %v539 = vunpack.c.h.b16 %v503
    %v540 = vunpack.c.l.b16 %v504
    %v541 = vunpack.c.l.b16 %v505
    %v542 = vunpack.c.l.b16 %v506
    %v543 = vunpack.c.l.b16 %v507
    %v544 = vunpack.c.h.b16 %v504
    %v545 = vunpack.c.h.b16 %v505
    %v546 = vunpack.c.h.b16 %v506
    %v547 = vunpack.c.h.b16 %v507
    %v548 = vunpack.c.l.b16 %v508
    %v549 = vunpack.c.l.b16 %v509
    %v550 = vunpack.c.l.b16 %v510
    %v551 = vunpack.c.l.b16 %v511
    %v552 = vunpack.c.h.b16 %v508
    %v553 = vunpack.c.h.b16 %v509
    %v554 = vunpack.c.h.b16 %v510
    %v555 = vunpack.c.h.b16 %v511
    %v556 = vunpack.c.l.b16 %v512
    %v557 = vunpack.c.l.b16 %v513
    %v558 = vunpack.c.l.b16 %v514
    %v559 = vunpack.c.l.b16 %v515
    %v560 = vunpack.c.h.b16 %v512
    %v561 = vunpack.c.h.b16 %v513
    %v562 = vunpack.c.h.b16 %v514
    %v563 = vunpack.c.h.b16 %v515
    %v564 = vpack.c.b16 %v533, %v532
    %v565 = vpack.c.b16 %v535, %v534
    %v566 = vpack.c.b16 %v537, %v536
    %v567 = vpack.c.b16 %v539, %v538
    %v568 = vpack.c.b16 %v541, %v540
    %v569 = vpack.c.b16 %v543, %v542
    %v570 = vpack.c.b16 %v545, %v544
    %v571 = vpack.c.b16 %v547, %v546
    %v572 = vpack.c.b16 %v549, %v548
    %v573 = vpack.c.b16 %v551, %v550
    %v574 = vpack.c.b16 %v553, %v552
    %v575 = vpack.c.b16 %v555, %v554
    %v576 = vpack.c.b16 %v557, %v556
    %v577 = vpack.c.b16 %v559, %v558
    %v578 = vpack.c.b16 %v561, %v560
    %v579 = vpack.c.b16 %v563, %v562
    %596 = vst [vmem:[#allocation2] sm:$0xff] %v564
    %597 = vst [vmem:[#allocation2 + $0x8] sm:$0xff] %v565
    %598 = vst [vmem:[#allocation2 + $0x10] sm:$0xff] %v566
    %599 = vst [vmem:[#allocation2 + $0x18] sm:$0xff] %v567
    %600 = vst [vmem:[#allocation2 + $0x20] sm:$0xff] %v568
    %601 = vst [vmem:[#allocation2 + $0x28] sm:$0xff] %v569
    %602 = vst [vmem:[#allocation2 + $0x30] sm:$0xff] %v570
    %603 = vst [vmem:[#allocation2 + $0x38] sm:$0xff] %v571
    %604 = vst [vmem:[#allocation2 + $0x40] sm:$0xff] %v572
    %605 = vst [vmem:[#allocation2 + $0x48] sm:$0xff] %v573
    %606 = vst [vmem:[#allocation2 + $0x50] sm:$0xff] %v574
    %607 = vst [vmem:[#allocation2 + $0x58] sm:$0xff] %v575
    %608 = vst [vmem:[#allocation2 + $0x60] sm:$0xff] %v576
    %609 = vst [vmem:[#allocation2 + $0x68] sm:$0xff] %v577
    %610 = vst [vmem:[#allocation2 + $0x70] sm:$0xff] %v578
    %611 = vst [vmem:[#allocation2 + $0x78] sm:$0xff] %v579
    %v612 = vlaneseq
    %v613 = vand.u32 %v612, 127
    %v614 = vadd.s32 %v613, 128
    %v615 = vadd.s32 %v613, 256
    %v616 = vadd.s32 %v613, 384
    %vm617 = vcmp.ge.s32.totalorder %v613, 256
    %vm618 = vcmp.ge.s32.totalorder %v614, 256
    %vm619 = vcmp.ge.s32.totalorder %v615, 256
    %vm620 = vcmp.ge.s32.totalorder %v616, 256
    %vm621 = vcmp.lt.s32.totalorder %v613, 384
    %vm622 = vcmp.lt.s32.totalorder %v614, 384
    %vm623 = vcmp.lt.s32.totalorder %v615, 384
    %vm624 = vcmp.lt.s32.totalorder %v616, 384
    %vm625 = vmand %vm617, %vm621
    %vm626 = vmand %vm618, %vm622
    %vm627 = vmand %vm619, %vm623
    %vm628 = vmand %vm620, %vm624
    %v629 = vsel %vm625, 1.0, 0.5
    %v630 = vsel %vm626, 1.0, 0.5
    %v631 = vsel %vm627, 1.0, 0.5
    %v632 = vsel %vm628, 1.0, 0.5
    %v633 = vld [vmem:[#allocation9] sm:$0xff]
    %v634 = vld [vmem:[#allocation11] sm:$0xff]
    %s635 = smul.u32 0, 4
    %s636 = smul.addr %s635, 4
    %s637 = scalar_lea.vmem [#allocation2], %s636
    %v638 = vld [vmem:[%s637] sm:$0xff]
    %v639 = vld [vmem:[%s637 + $0x8] sm:$0xff]
    %v640 = vunpack.c.l.bf16 %v638
    %v641 = vunpack.c.h.bf16 %v638
    %v642 = vunpack.c.l.bf16 %v639
    %v643 = vunpack.c.h.bf16 %v639
    %v644 = vpack.c.bf16 %v633, %v633
    %v645 = vld [vmem:[#allocation14] sm:$0xff]
    %v646 = vld [vmem:[#allocation14 + $0x8] sm:$0xff]
    %v647 = vld [vmem:[#allocation14 + $0x10] sm:$0xff]
    %v648 = vld [vmem:[#allocation14 + $0x18] sm:$0xff]
    %v649 = vld [vmem:[#allocation14 + $0x20] sm:$0xff]
    %v650 = vld [vmem:[#allocation14 + $0x28] sm:$0xff]
    %v651 = vld [vmem:[#allocation14 + $0x30] sm:$0xff]
    %v652 = vld [vmem:[#allocation14 + $0x38] sm:$0xff]
    %v653 = vld [vmem:[#allocation14 + $0x40] sm:$0xff]
    %v654 = vld [vmem:[#allocation14 + $0x48] sm:$0xff]
    %v655 = vld [vmem:[#allocation14 + $0x50] sm:$0xff]
    %v656 = vld [vmem:[#allocation14 + $0x58] sm:$0xff]
    %v657 = vld [vmem:[#allocation14 + $0x60] sm:$0xff]
    %v658 = vld [vmem:[#allocation14 + $0x68] sm:$0xff]
    %v659 = vld [vmem:[#allocation14 + $0x70] sm:$0xff]
    %v660 = vld [vmem:[#allocation14 + $0x78] sm:$0xff]
    %v661 = vld [vmem:[#allocation14 + $0x80] sm:$0xff]
    %v662 = vld [vmem:[#allocation14 + $0x88] sm:$0xff]
    %v663 = vld [vmem:[#allocation14 + $0x90] sm:$0xff]
    %v664 = vld [vmem:[#allocation14 + $0x98] sm:$0xff]
    %v665 = vld [vmem:[#allocation14 + $0xa0] sm:$0xff]
    %v666 = vld [vmem:[#allocation14 + $0xa8] sm:$0xff]
    %v667 = vld [vmem:[#allocation14 + $0xb0] sm:$0xff]
    %v668 = vld [vmem:[#allocation14 + $0xb8] sm:$0xff]
    %v669 = vld [vmem:[#allocation14 + $0xc0] sm:$0xff]
    %v670 = vld [vmem:[#allocation14 + $0xc8] sm:$0xff]
    %v671 = vld [vmem:[#allocation14 + $0xd0] sm:$0xff]
    %v672 = vld [vmem:[#allocation14 + $0xd8] sm:$0xff]
    %v673 = vld [vmem:[#allocation14 + $0xe0] sm:$0xff]
    %v674 = vld [vmem:[#allocation14 + $0xe8] sm:$0xff]
    %v675 = vld [vmem:[#allocation14 + $0xf0] sm:$0xff]
    %v676 = vld [vmem:[#allocation14 + $0xf8] sm:$0xff]
    %v709 = vunpack.c.l.b16 %v645
    %v710 = vunpack.c.h.b16 %v645
    %v711 = vunpack.c.l.b16 %v646
    %v712 = vunpack.c.h.b16 %v646
    %v713 = vunpack.c.l.b16 %v647
    %v714 = vunpack.c.h.b16 %v647
    %v715 = vunpack.c.l.b16 %v648
    %v716 = vunpack.c.h.b16 %v648
    %v717 = vunpack.c.l.b16 %v649
    %v718 = vunpack.c.h.b16 %v649
    %v719 = vunpack.c.l.b16 %v650
    %v720 = vunpack.c.h.b16 %v650
    %v721 = vunpack.c.l.b16 %v651
    %v722 = vunpack.c.h.b16 %v651
    %v723 = vunpack.c.l.b16 %v652
    %v724 = vunpack.c.h.b16 %v652
    %v725 = vunpack.c.l.b16 %v653
    %v726 = vunpack.c.h.b16 %v653
    %v727 = vunpack.c.l.b16 %v654
    %v728 = vunpack.c.h.b16 %v654
    %v729 = vunpack.c.l.b16 %v655
    %v730 = vunpack.c.h.b16 %v655
    %v731 = vunpack.c.l.b16 %v656
    %v732 = vunpack.c.h.b16 %v656
    %v733 = vunpack.c.l.b16 %v657
    %v734 = vunpack.c.h.b16 %v657
    %v735 = vunpack.c.l.b16 %v658
    %v736 = vunpack.c.h.b16 %v658
    %v737 = vunpack.c.l.b16 %v659
    %v738 = vunpack.c.h.b16 %v659
    %v739 = vunpack.c.l.b16 %v660
    %v740 = vunpack.c.h.b16 %v660
    %v741 = vunpack.c.l.b16 %v661
    %v742 = vunpack.c.h.b16 %v661
    %v743 = vunpack.c.l.b16 %v662
    %v744 = vunpack.c.h.b16 %v662
    %v745 = vunpack.c.l.b16 %v663
    %v746 = vunpack.c.h.b16 %v663
    %v747 = vunpack.c.l.b16 %v664
    %v748 = vunpack.c.h.b16 %v664
    %v749 = vunpack.c.l.b16 %v665
    %v750 = vunpack.c.h.b16 %v665
    %v751 = vunpack.c.l.b16 %v666
    %v752 = vunpack.c.h.b16 %v666
    %v753 = vunpack.c.l.b16 %v667
    %v754 = vunpack.c.h.b16 %v667
    %v755 = vunpack.c.l.b16 %v668
    %v756 = vunpack.c.h.b16 %v668
    %v757 = vunpack.c.l.b16 %v669
    %v758 = vunpack.c.h.b16 %v669
    %v759 = vunpack.c.l.b16 %v670
    %v760 = vunpack.c.h.b16 %v670
    %v761 = vunpack.c.l.b16 %v671
    %v762 = vunpack.c.h.b16 %v671
    %v763 = vunpack.c.l.b16 %v672
    %v764 = vunpack.c.h.b16 %v672
    %v765 = vunpack.c.l.b16 %v673
    %v766 = vunpack.c.h.b16 %v673
    %v767 = vunpack.c.l.b16 %v674
    %v768 = vunpack.c.h.b16 %v674
    %v769 = vunpack.c.l.b16 %v675
    %v770 = vunpack.c.h.b16 %v675
    %v771 = vunpack.c.l.b16 %v676
    %v772 = vunpack.c.h.b16 %v676
    %v773 = vpack.c.b16 %v713, %v709
    %v774 = vpack.c.b16 %v714, %v710
    %v775 = vpack.c.b16 %v715, %v711
    %v776 = vpack.c.b16 %v716, %v712
    %v777 = vpack.c.b16 %v721, %v717
    %v778 = vpack.c.b16 %v722, %v718
    %v779 = vpack.c.b16 %v723, %v719
    %v780 = vpack.c.b16 %v724, %v720
    %v781 = vpack.c.b16 %v729, %v725
    %v782 = vpack.c.b16 %v730, %v726
    %v783 = vpack.c.b16 %v731, %v727
    %v784 = vpack.c.b16 %v732, %v728
    %v785 = vpack.c.b16 %v737, %v733
    %v786 = vpack.c.b16 %v738, %v734
    %v787 = vpack.c.b16 %v739, %v735
    %v788 = vpack.c.b16 %v740, %v736
    %v789 = vpack.c.b16 %v745, %v741
    %v790 = vpack.c.b16 %v746, %v742
    %v791 = vpack.c.b16 %v747, %v743
    %v792 = vpack.c.b16 %v748, %v744
    %v793 = vpack.c.b16 %v753, %v749
    %v794 = vpack.c.b16 %v754, %v750
    %v795 = vpack.c.b16 %v755, %v751
    %v796 = vpack.c.b16 %v756, %v752
    %v797 = vpack.c.b16 %v761, %v757
    %v798 = vpack.c.b16 %v762, %v758
    %v799 = vpack.c.b16 %v763, %v759
    %v800 = vpack.c.b16 %v764, %v760
    %v801 = vpack.c.b16 %v769, %v765
    %v802 = vpack.c.b16 %v770, %v766
    %v803 = vpack.c.b16 %v771, %v767
    %v804 = vpack.c.b16 %v772, %v768
    %837 = vmatprep.subr.bf16.mxu0 %v802
    %838 = vmatpush1.bf16.msra.mxu0 %v801
    %839 = vmatprep.subr.bf16.mxu0 %v798
    %840 = vmatpush1.bf16.msra.mxu0 %v797
    %841 = vmatprep.subr.bf16.mxu0 %v794
    %842 = vmatpush1.bf16.msra.mxu0 %v793
    %843 = vmatprep.subr.bf16.mxu0 %v790
    %844 = vmatpush1.bf16.msra.mxu0 %v789
    %845 = vmatprep.subr.bf16.mxu0 %v786
    %846 = vmatpush1.bf16.msra.mxu0 %v785
    %847 = vmatprep.subr.bf16.mxu0 %v782
    %848 = vmatpush1.bf16.msra.mxu0 %v781
    %849 = vmatprep.subr.bf16.mxu0 %v778
    %850 = vmatpush1.bf16.msra.mxu0 %v777
    %851 = vmatprep.subr.bf16.mxu0 %v774
    %852 = vmatpush1.bf16.msra.mxu0 %v773
    %853 = vmatprep.subr.bf16.mxu0 0
    %854 = vmatpush2.bf16.msra.mxu0 0
    %855 = vmatprep.subr.bf16.mxu0 0
    %856 = vmatpush2.bf16.msra.mxu0 0
    %857 = vmatprep.subr.bf16.mxu0 0
    %858 = vmatpush2.bf16.msra.mxu0 0
    %859 = vmatprep.subr.bf16.mxu0 0
    %860 = vmatpush2.bf16.msra.mxu0 0
    %861 = vmatprep.subr.bf16.mxu0 0
    %862 = vmatpush2.bf16.msra.mxu0 0
    %863 = vmatprep.subr.bf16.mxu0 0
    %864 = vmatpush2.bf16.msra.mxu0 0
    %865 = vmatprep.subr.bf16.mxu0 0
    %866 = vmatpush2.bf16.msra.mxu0 0
    %867 = vmatprep.subr.bf16.mxu0 0
    %868 = vmatpush2.bf16.msra.mxu0 0
    %869 = vmatprep.mubr.bf16.mxu0 0
    %870 = vmatmul.mubr.bf16.gmra.mxu0 %v644
    %v871 = vpop.f32.mrf.mxu0
    %v872 = vadd.f32 0.0, %v871
    %v873 = vpop.f32.mrf.mxu0
    %v874 = vadd.f32 0.0, %v873
    %v875 = vpop.f32.mrf.mxu0
    %v876 = vpop.f32.mrf.mxu0
    %877 = vdwg.mxu0
    %878 = vmatprep.subr.bf16.mxu0 %v804
    %879 = vmatpush1.bf16.msra.mxu0 %v803
    %880 = vmatprep.subr.bf16.mxu0 %v800
    %881 = vmatpush1.bf16.msra.mxu0 %v799
    %882 = vmatprep.subr.bf16.mxu0 %v796
    %883 = vmatpush1.bf16.msra.mxu0 %v795
    %884 = vmatprep.subr.bf16.mxu0 %v792
    %885 = vmatpush1.bf16.msra.mxu0 %v791
    %886 = vmatprep.subr.bf16.mxu0 %v788
    %887 = vmatpush1.bf16.msra.mxu0 %v787
    %888 = vmatprep.subr.bf16.mxu0 %v784
    %889 = vmatpush1.bf16.msra.mxu0 %v783
    %890 = vmatprep.subr.bf16.mxu0 %v780
    %891 = vmatpush1.bf16.msra.mxu0 %v779
    %892 = vmatprep.subr.bf16.mxu0 %v776
    %893 = vmatpush1.bf16.msra.mxu0 %v775
    %894 = vmatprep.subr.bf16.mxu0 0
    %895 = vmatpush2.bf16.msra.mxu0 0
    %896 = vmatprep.subr.bf16.mxu0 0
    %897 = vmatpush2.bf16.msra.mxu0 0
    %898 = vmatprep.subr.bf16.mxu0 0
    %899 = vmatpush2.bf16.msra.mxu0 0
    %900 = vmatprep.subr.bf16.mxu0 0
    %901 = vmatpush2.bf16.msra.mxu0 0
    %902 = vmatprep.subr.bf16.mxu0 0
    %903 = vmatpush2.bf16.msra.mxu0 0
    %904 = vmatprep.subr.bf16.mxu0 0
    %905 = vmatpush2.bf16.msra.mxu0 0
    %906 = vmatprep.subr.bf16.mxu0 0
    %907 = vmatpush2.bf16.msra.mxu0 0
    %908 = vmatprep.subr.bf16.mxu0 0
    %909 = vmatpush2.bf16.msra.mxu0 0
    %910 = vmatprep.mubr.bf16.mxu0 0
    %911 = vmatmul.mubr.bf16.gmra.mxu0 %v644
    %v912 = vpop.f32.mrf.mxu0
    %v913 = vadd.f32 0.0, %v912
    %v914 = vpop.f32.mrf.mxu0
    %v915 = vadd.f32 0.0, %v914
    %v916 = vpop.f32.mrf.mxu0
    %v917 = vpop.f32.mrf.mxu0
    %918 = vdwg.mxu0
    %v919 = vadd.f32 %v640, %v872
    %v920 = vadd.f32 %v641, %v874
    %v921 = vadd.f32 %v642, %v913
    %v922 = vadd.f32 %v643, %v915
    %v923 = vmul.f32 %v919, %v629
    %v924 = vmul.f32 %v920, %v630
    %v925 = vmul.f32 %v921, %v631
    %v926 = vmul.f32 %v922, %v632
    %v927 = vtanh.pop %v923
    %v928 = vtanh.pop %v924
    %v929 = vtanh.pop %v925
    %v930 = vtanh.pop %v926
    %v931 = vmul.f32 %v927, 0.5
    %v932 = vadd.f32 %v931, 0.5
    %v933 = vmul.f32 %v928, 0.5
    %v934 = vadd.f32 %v933, 0.5
    %v935 = vmul.f32 %v930, 0.5
    %v936 = vadd.f32 %v935, 0.5
    %v937 = vmul.f32 %v934, %v634
    %v938 = vmul.f32 %v932, %v929
    %v939 = vadd.f32 %v937, %v938
    %v940 = vtanh.pop %v939
    %v941 = vmul.f32 %v936, %v940
    %v942 = vpack.c.bf16 %v941, %v941
    %943 = vst [vmem:[#allocation3] sm:$0xf] %v942
    %s944 = smul.u32 1, 4
    %s945 = smul.addr %s944, 4
    %s946 = scalar_lea.vmem [#allocation2], %s945
    %v947 = vld [vmem:[%s946] sm:$0xff]
    %v948 = vld [vmem:[%s946 + $0x8] sm:$0xff]
    %v949 = vunpack.c.l.bf16 %v947
    %v950 = vunpack.c.h.bf16 %v947
    %v951 = vunpack.c.l.bf16 %v948
    %v952 = vunpack.c.h.bf16 %v948
    %v953 = vld [vmem:[#allocation14] sm:$0xff]
    %v954 = vld [vmem:[#allocation14 + $0x8] sm:$0xff]
    %v955 = vld [vmem:[#allocation14 + $0x10] sm:$0xff]
    %v956 = vld [vmem:[#allocation14 + $0x18] sm:$0xff]
    %v957 = vld [vmem:[#allocation14 + $0x20] sm:$0xff]
    %v958 = vld [vmem:[#allocation14 + $0x28] sm:$0xff]
    %v959 = vld [vmem:[#allocation14 + $0x30] sm:$0xff]
    %v960 = vld [vmem:[#allocation14 + $0x38] sm:$0xff]
    %v961 = vld [vmem:[#allocation14 + $0x40] sm:$0xff]
    %v962 = vld [vmem:[#allocation14 + $0x48] sm:$0xff]
    %v963 = vld [vmem:[#allocation14 + $0x50] sm:$0xff]
    %v964 = vld [vmem:[#allocation14 + $0x58] sm:$0xff]
    %v965 = vld [vmem:[#allocation14 + $0x60] sm:$0xff]
    %v966 = vld [vmem:[#allocation14 + $0x68] sm:$0xff]
    %v967 = vld [vmem:[#allocation14 + $0x70] sm:$0xff]
    %v968 = vld [vmem:[#allocation14 + $0x78] sm:$0xff]
    %v969 = vld [vmem:[#allocation14 + $0x80] sm:$0xff]
    %v970 = vld [vmem:[#allocation14 + $0x88] sm:$0xff]
    %v971 = vld [vmem:[#allocation14 + $0x90] sm:$0xff]
    %v972 = vld [vmem:[#allocation14 + $0x98] sm:$0xff]
    %v973 = vld [vmem:[#allocation14 + $0xa0] sm:$0xff]
    %v974 = vld [vmem:[#allocation14 + $0xa8] sm:$0xff]
    %v975 = vld [vmem:[#allocation14 + $0xb0] sm:$0xff]
    %v976 = vld [vmem:[#allocation14 + $0xb8] sm:$0xff]
    %v977 = vld [vmem:[#allocation14 + $0xc0] sm:$0xff]
    %v978 = vld [vmem:[#allocation14 + $0xc8] sm:$0xff]
    %v979 = vld [vmem:[#allocation14 + $0xd0] sm:$0xff]
    %v980 = vld [vmem:[#allocation14 + $0xd8] sm:$0xff]
    %v981 = vld [vmem:[#allocation14 + $0xe0] sm:$0xff]
    %v982 = vld [vmem:[#allocation14 + $0xe8] sm:$0xff]
    %v983 = vld [vmem:[#allocation14 + $0xf0] sm:$0xff]
    %v984 = vld [vmem:[#allocation14 + $0xf8] sm:$0xff]
    %v1017 = vunpack.c.l.b16 %v953
    %v1018 = vunpack.c.h.b16 %v953
    %v1019 = vunpack.c.l.b16 %v954
    %v1020 = vunpack.c.h.b16 %v954
    %v1021 = vunpack.c.l.b16 %v955
    %v1022 = vunpack.c.h.b16 %v955
    %v1023 = vunpack.c.l.b16 %v956
    %v1024 = vunpack.c.h.b16 %v956
    %v1025 = vunpack.c.l.b16 %v957
    %v1026 = vunpack.c.h.b16 %v957
    %v1027 = vunpack.c.l.b16 %v958
    %v1028 = vunpack.c.h.b16 %v958
    %v1029 = vunpack.c.l.b16 %v959
    %v1030 = vunpack.c.h.b16 %v959
    %v1031 = vunpack.c.l.b16 %v960
    %v1032 = vunpack.c.h.b16 %v960
    %v1033 = vunpack.c.l.b16 %v961
    %v1034 = vunpack.c.h.b16 %v961
    %v1035 = vunpack.c.l.b16 %v962
    %v1036 = vunpack.c.h.b16 %v962
    %v1037 = vunpack.c.l.b16 %v963
    %v1038 = vunpack.c.h.b16 %v963
    %v1039 = vunpack.c.l.b16 %v964
    %v1040 = vunpack.c.h.b16 %v964
    %v1041 = vunpack.c.l.b16 %v965
    %v1042 = vunpack.c.h.b16 %v965
    %v1043 = vunpack.c.l.b16 %v966
    %v1044 = vunpack.c.h.b16 %v966
    %v1045 = vunpack.c.l.b16 %v967
    %v1046 = vunpack.c.h.b16 %v967
    %v1047 = vunpack.c.l.b16 %v968
    %v1048 = vunpack.c.h.b16 %v968
    %v1049 = vunpack.c.l.b16 %v969
    %v1050 = vunpack.c.h.b16 %v969
    %v1051 = vunpack.c.l.b16 %v970
    %v1052 = vunpack.c.h.b16 %v970
    %v1053 = vunpack.c.l.b16 %v971
    %v1054 = vunpack.c.h.b16 %v971
    %v1055 = vunpack.c.l.b16 %v972
    %v1056 = vunpack.c.h.b16 %v972
    %v1057 = vunpack.c.l.b16 %v973
    %v1058 = vunpack.c.h.b16 %v973
    %v1059 = vunpack.c.l.b16 %v974
    %v1060 = vunpack.c.h.b16 %v974
    %v1061 = vunpack.c.l.b16 %v975
    %v1062 = vunpack.c.h.b16 %v975
    %v1063 = vunpack.c.l.b16 %v976
    %v1064 = vunpack.c.h.b16 %v976
    %v1065 = vunpack.c.l.b16 %v977
    %v1066 = vunpack.c.h.b16 %v977
    %v1067 = vunpack.c.l.b16 %v978
    %v1068 = vunpack.c.h.b16 %v978
    %v1069 = vunpack.c.l.b16 %v979
    %v1070 = vunpack.c.h.b16 %v979
    %v1071 = vunpack.c.l.b16 %v980
    %v1072 = vunpack.c.h.b16 %v980
    %v1073 = vunpack.c.l.b16 %v981
    %v1074 = vunpack.c.h.b16 %v981
    %v1075 = vunpack.c.l.b16 %v982
    %v1076 = vunpack.c.h.b16 %v982
    %v1077 = vunpack.c.l.b16 %v983
    %v1078 = vunpack.c.h.b16 %v983
    %v1079 = vunpack.c.l.b16 %v984
    %v1080 = vunpack.c.h.b16 %v984
    %v1081 = vpack.c.b16 %v1021, %v1017
    %v1082 = vpack.c.b16 %v1022, %v1018
    %v1083 = vpack.c.b16 %v1023, %v1019
    %v1084 = vpack.c.b16 %v1024, %v1020
    %v1085 = vpack.c.b16 %v1029, %v1025
    %v1086 = vpack.c.b16 %v1030, %v1026
    %v1087 = vpack.c.b16 %v1031, %v1027
    %v1088 = vpack.c.b16 %v1032, %v1028
    %v1089 = vpack.c.b16 %v1037, %v1033
    %v1090 = vpack.c.b16 %v1038, %v1034
    %v1091 = vpack.c.b16 %v1039, %v1035
    %v1092 = vpack.c.b16 %v1040, %v1036
    %v1093 = vpack.c.b16 %v1045, %v1041
    %v1094 = vpack.c.b16 %v1046, %v1042
    %v1095 = vpack.c.b16 %v1047, %v1043
    %v1096 = vpack.c.b16 %v1048, %v1044
    %v1097 = vpack.c.b16 %v1053, %v1049
    %v1098 = vpack.c.b16 %v1054, %v1050
    %v1099 = vpack.c.b16 %v1055, %v1051
    %v1100 = vpack.c.b16 %v1056, %v1052
    %v1101 = vpack.c.b16 %v1061, %v1057
    %v1102 = vpack.c.b16 %v1062, %v1058
    %v1103 = vpack.c.b16 %v1063, %v1059
    %v1104 = vpack.c.b16 %v1064, %v1060
    %v1105 = vpack.c.b16 %v1069, %v1065
    %v1106 = vpack.c.b16 %v1070, %v1066
    %v1107 = vpack.c.b16 %v1071, %v1067
    %v1108 = vpack.c.b16 %v1072, %v1068
    %v1109 = vpack.c.b16 %v1077, %v1073
    %v1110 = vpack.c.b16 %v1078, %v1074
    %v1111 = vpack.c.b16 %v1079, %v1075
    %v1112 = vpack.c.b16 %v1080, %v1076
    %1145 = vmatprep.subr.bf16.mxu0 %v1110
    %1146 = vmatpush1.bf16.msra.mxu0 %v1109
    %1147 = vmatprep.subr.bf16.mxu0 %v1106
    %1148 = vmatpush1.bf16.msra.mxu0 %v1105
    %1149 = vmatprep.subr.bf16.mxu0 %v1102
    %1150 = vmatpush1.bf16.msra.mxu0 %v1101
    %1151 = vmatprep.subr.bf16.mxu0 %v1098
    %1152 = vmatpush1.bf16.msra.mxu0 %v1097
    %1153 = vmatprep.subr.bf16.mxu0 %v1094
    %1154 = vmatpush1.bf16.msra.mxu0 %v1093
    %1155 = vmatprep.subr.bf16.mxu0 %v1090
    %1156 = vmatpush1.bf16.msra.mxu0 %v1089
    %1157 = vmatprep.subr.bf16.mxu0 %v1086
    %1158 = vmatpush1.bf16.msra.mxu0 %v1085
    %1159 = vmatprep.subr.bf16.mxu0 %v1082
    %1160 = vmatpush1.bf16.msra.mxu0 %v1081
    %1161 = vmatprep.subr.bf16.mxu0 0
    %1162 = vmatpush2.bf16.msra.mxu0 0
    %1163 = vmatprep.subr.bf16.mxu0 0
    %1164 = vmatpush2.bf16.msra.mxu0 0
    %1165 = vmatprep.subr.bf16.mxu0 0
    %1166 = vmatpush2.bf16.msra.mxu0 0
    %1167 = vmatprep.subr.bf16.mxu0 0
    %1168 = vmatpush2.bf16.msra.mxu0 0
    %1169 = vmatprep.subr.bf16.mxu0 0
    %1170 = vmatpush2.bf16.msra.mxu0 0
    %1171 = vmatprep.subr.bf16.mxu0 0
    %1172 = vmatpush2.bf16.msra.mxu0 0
    %1173 = vmatprep.subr.bf16.mxu0 0
    %1174 = vmatpush2.bf16.msra.mxu0 0
    %1175 = vmatprep.subr.bf16.mxu0 0
    %1176 = vmatpush2.bf16.msra.mxu0 0
    %1177 = vmatprep.mubr.bf16.mxu0 0
    %1178 = vmatmul.mubr.bf16.gmra.mxu0 %v942
    %v1179 = vpop.f32.mrf.mxu0
    %v1180 = vadd.f32 0.0, %v1179
    %v1181 = vpop.f32.mrf.mxu0
    %v1182 = vadd.f32 0.0, %v1181
    %v1183 = vpop.f32.mrf.mxu0
    %v1184 = vpop.f32.mrf.mxu0
    %1185 = vdwg.mxu0
    %1186 = vmatprep.subr.bf16.mxu0 %v1112
    %1187 = vmatpush1.bf16.msra.mxu0 %v1111
    %1188 = vmatprep.subr.bf16.mxu0 %v1108
    %1189 = vmatpush1.bf16.msra.mxu0 %v1107
    %1190 = vmatprep.subr.bf16.mxu0 %v1104
    %1191 = vmatpush1.bf16.msra.mxu0 %v1103
    %1192 = vmatprep.subr.bf16.mxu0 %v1100
    %1193 = vmatpush1.bf16.msra.mxu0 %v1099
    %1194 = vmatprep.subr.bf16.mxu0 %v1096
    %1195 = vmatpush1.bf16.msra.mxu0 %v1095
    %1196 = vmatprep.subr.bf16.mxu0 %v1092
    %1197 = vmatpush1.bf16.msra.mxu0 %v1091
    %1198 = vmatprep.subr.bf16.mxu0 %v1088
    %1199 = vmatpush1.bf16.msra.mxu0 %v1087
    %1200 = vmatprep.subr.bf16.mxu0 %v1084
    %1201 = vmatpush1.bf16.msra.mxu0 %v1083
    %1202 = vmatprep.subr.bf16.mxu0 0
    %1203 = vmatpush2.bf16.msra.mxu0 0
    %1204 = vmatprep.subr.bf16.mxu0 0
    %1205 = vmatpush2.bf16.msra.mxu0 0
    %1206 = vmatprep.subr.bf16.mxu0 0
    %1207 = vmatpush2.bf16.msra.mxu0 0
    %1208 = vmatprep.subr.bf16.mxu0 0
    %1209 = vmatpush2.bf16.msra.mxu0 0
    %1210 = vmatprep.subr.bf16.mxu0 0
    %1211 = vmatpush2.bf16.msra.mxu0 0
    %1212 = vmatprep.subr.bf16.mxu0 0
    %1213 = vmatpush2.bf16.msra.mxu0 0
    %1214 = vmatprep.subr.bf16.mxu0 0
    %1215 = vmatpush2.bf16.msra.mxu0 0
    %1216 = vmatprep.subr.bf16.mxu0 0
    %1217 = vmatpush2.bf16.msra.mxu0 0
    %1218 = vmatprep.mubr.bf16.mxu0 0
    %1219 = vmatmul.mubr.bf16.gmra.mxu0 %v942
    %v1220 = vpop.f32.mrf.mxu0
    %v1221 = vadd.f32 0.0, %v1220
    %v1222 = vpop.f32.mrf.mxu0
    %v1223 = vadd.f32 0.0, %v1222
    %v1224 = vpop.f32.mrf.mxu0
    %v1225 = vpop.f32.mrf.mxu0
    %1226 = vdwg.mxu0
    %v1227 = vadd.f32 %v949, %v1180
    %v1228 = vadd.f32 %v950, %v1182
    %v1229 = vadd.f32 %v951, %v1221
    %v1230 = vadd.f32 %v952, %v1223
    %v1231 = vmul.f32 %v1227, %v629
    %v1232 = vmul.f32 %v1228, %v630
    %v1233 = vmul.f32 %v1229, %v631
    %v1234 = vmul.f32 %v1230, %v632
    %v1235 = vtanh.pop %v1231
    %v1236 = vtanh.pop %v1232
    %v1237 = vtanh.pop %v1233
    %v1238 = vtanh.pop %v1234
    %v1239 = vmul.f32 %v1235, 0.5
    %v1240 = vadd.f32 %v1239, 0.5
    %v1241 = vmul.f32 %v1236, 0.5
    %v1242 = vadd.f32 %v1241, 0.5
    %v1243 = vmul.f32 %v1238, 0.5
    %v1244 = vadd.f32 %v1243, 0.5
    %v1245 = vmul.f32 %v1242, %v939
    %v1246 = vmul.f32 %v1240, %v1237
    %v1247 = vadd.f32 %v1245, %v1246
    %v1248 = vtanh.pop %v1247
    %v1249 = vmul.f32 %v1244, %v1248
    %v1250 = vpack.c.bf16 %v1249, %v1249
    %s1251 = scalar_lea.vmem [#allocation3], 4
    %1252 = vst [vmem:[%s1251] sm:$0xf] %v1250
    %s1253 = smul.u32 2, 4
    %s1254 = smul.addr %s1253, 4
    %s1255 = scalar_lea.vmem [#allocation2], %s1254
    %v1256 = vld [vmem:[%s1255] sm:$0xff]
    %v1257 = vld [vmem:[%s1255 + $0x8] sm:$0xff]
    %v1258 = vunpack.c.l.bf16 %v1256
    %v1259 = vunpack.c.h.bf16 %v1256
    %v1260 = vunpack.c.l.bf16 %v1257
    %v1261 = vunpack.c.h.bf16 %v1257
    %v1262 = vld [vmem:[#allocation14] sm:$0xff]
    %v1263 = vld [vmem:[#allocation14 + $0x8] sm:$0xff]
    %v1264 = vld [vmem:[#allocation14 + $0x10] sm:$0xff]
    %v1265 = vld [vmem:[#allocation14 + $0x18] sm:$0xff]
    %v1266 = vld [vmem:[#allocation14 + $0x20] sm:$0xff]
    %v1267 = vld [vmem:[#allocation14 + $0x28] sm:$0xff]
    %v1268 = vld [vmem:[#allocation14 + $0x30] sm:$0xff]
    %v1269 = vld [vmem:[#allocation14 + $0x38] sm:$0xff]
    %v1270 = vld [vmem:[#allocation14 + $0x40] sm:$0xff]
    %v1271 = vld [vmem:[#allocation14 + $0x48] sm:$0xff]
    %v1272 = vld [vmem:[#allocation14 + $0x50] sm:$0xff]
    %v1273 = vld [vmem:[#allocation14 + $0x58] sm:$0xff]
    %v1274 = vld [vmem:[#allocation14 + $0x60] sm:$0xff]
    %v1275 = vld [vmem:[#allocation14 + $0x68] sm:$0xff]
    %v1276 = vld [vmem:[#allocation14 + $0x70] sm:$0xff]
    %v1277 = vld [vmem:[#allocation14 + $0x78] sm:$0xff]
    %v1278 = vld [vmem:[#allocation14 + $0x80] sm:$0xff]
    %v1279 = vld [vmem:[#allocation14 + $0x88] sm:$0xff]
    %v1280 = vld [vmem:[#allocation14 + $0x90] sm:$0xff]
    %v1281 = vld [vmem:[#allocation14 + $0x98] sm:$0xff]
    %v1282 = vld [vmem:[#allocation14 + $0xa0] sm:$0xff]
    %v1283 = vld [vmem:[#allocation14 + $0xa8] sm:$0xff]
    %v1284 = vld [vmem:[#allocation14 + $0xb0] sm:$0xff]
    %v1285 = vld [vmem:[#allocation14 + $0xb8] sm:$0xff]
    %v1286 = vld [vmem:[#allocation14 + $0xc0] sm:$0xff]
    %v1287 = vld [vmem:[#allocation14 + $0xc8] sm:$0xff]
    %v1288 = vld [vmem:[#allocation14 + $0xd0] sm:$0xff]
    %v1289 = vld [vmem:[#allocation14 + $0xd8] sm:$0xff]
    %v1290 = vld [vmem:[#allocation14 + $0xe0] sm:$0xff]
    %v1291 = vld [vmem:[#allocation14 + $0xe8] sm:$0xff]
    %v1292 = vld [vmem:[#allocation14 + $0xf0] sm:$0xff]
    %v1293 = vld [vmem:[#allocation14 + $0xf8] sm:$0xff]
    %v1326 = vunpack.c.l.b16 %v1262
    %v1327 = vunpack.c.h.b16 %v1262
    %v1328 = vunpack.c.l.b16 %v1263
    %v1329 = vunpack.c.h.b16 %v1263
    %v1330 = vunpack.c.l.b16 %v1264
    %v1331 = vunpack.c.h.b16 %v1264
    %v1332 = vunpack.c.l.b16 %v1265
    %v1333 = vunpack.c.h.b16 %v1265
    %v1334 = vunpack.c.l.b16 %v1266
    %v1335 = vunpack.c.h.b16 %v1266
    %v1336 = vunpack.c.l.b16 %v1267
    %v1337 = vunpack.c.h.b16 %v1267
    %v1338 = vunpack.c.l.b16 %v1268
    %v1339 = vunpack.c.h.b16 %v1268
    %v1340 = vunpack.c.l.b16 %v1269
    %v1341 = vunpack.c.h.b16 %v1269
    %v1342 = vunpack.c.l.b16 %v1270
    %v1343 = vunpack.c.h.b16 %v1270
    %v1344 = vunpack.c.l.b16 %v1271
    %v1345 = vunpack.c.h.b16 %v1271
    %v1346 = vunpack.c.l.b16 %v1272
    %v1347 = vunpack.c.h.b16 %v1272
    %v1348 = vunpack.c.l.b16 %v1273
    %v1349 = vunpack.c.h.b16 %v1273
    %v1350 = vunpack.c.l.b16 %v1274
    %v1351 = vunpack.c.h.b16 %v1274
    %v1352 = vunpack.c.l.b16 %v1275
    %v1353 = vunpack.c.h.b16 %v1275
    %v1354 = vunpack.c.l.b16 %v1276
    %v1355 = vunpack.c.h.b16 %v1276
    %v1356 = vunpack.c.l.b16 %v1277
    %v1357 = vunpack.c.h.b16 %v1277
    %v1358 = vunpack.c.l.b16 %v1278
    %v1359 = vunpack.c.h.b16 %v1278
    %v1360 = vunpack.c.l.b16 %v1279
    %v1361 = vunpack.c.h.b16 %v1279
    %v1362 = vunpack.c.l.b16 %v1280
    %v1363 = vunpack.c.h.b16 %v1280
    %v1364 = vunpack.c.l.b16 %v1281
    %v1365 = vunpack.c.h.b16 %v1281
    %v1366 = vunpack.c.l.b16 %v1282
    %v1367 = vunpack.c.h.b16 %v1282
    %v1368 = vunpack.c.l.b16 %v1283
    %v1369 = vunpack.c.h.b16 %v1283
    %v1370 = vunpack.c.l.b16 %v1284
    %v1371 = vunpack.c.h.b16 %v1284
    %v1372 = vunpack.c.l.b16 %v1285
    %v1373 = vunpack.c.h.b16 %v1285
    %v1374 = vunpack.c.l.b16 %v1286
    %v1375 = vunpack.c.h.b16 %v1286
    %v1376 = vunpack.c.l.b16 %v1287
    %v1377 = vunpack.c.h.b16 %v1287
    %v1378 = vunpack.c.l.b16 %v1288
    %v1379 = vunpack.c.h.b16 %v1288
    %v1380 = vunpack.c.l.b16 %v1289
    %v1381 = vunpack.c.h.b16 %v1289
    %v1382 = vunpack.c.l.b16 %v1290
    %v1383 = vunpack.c.h.b16 %v1290
    %v1384 = vunpack.c.l.b16 %v1291
    %v1385 = vunpack.c.h.b16 %v1291
    %v1386 = vunpack.c.l.b16 %v1292
    %v1387 = vunpack.c.h.b16 %v1292
    %v1388 = vunpack.c.l.b16 %v1293
    %v1389 = vunpack.c.h.b16 %v1293
    %v1390 = vpack.c.b16 %v1330, %v1326
    %v1391 = vpack.c.b16 %v1331, %v1327
    %v1392 = vpack.c.b16 %v1332, %v1328
    %v1393 = vpack.c.b16 %v1333, %v1329
    %v1394 = vpack.c.b16 %v1338, %v1334
    %v1395 = vpack.c.b16 %v1339, %v1335
    %v1396 = vpack.c.b16 %v1340, %v1336
    %v1397 = vpack.c.b16 %v1341, %v1337
    %v1398 = vpack.c.b16 %v1346, %v1342
    %v1399 = vpack.c.b16 %v1347, %v1343
    %v1400 = vpack.c.b16 %v1348, %v1344
    %v1401 = vpack.c.b16 %v1349, %v1345
    %v1402 = vpack.c.b16 %v1354, %v1350
    %v1403 = vpack.c.b16 %v1355, %v1351
    %v1404 = vpack.c.b16 %v1356, %v1352
    %v1405 = vpack.c.b16 %v1357, %v1353
    %v1406 = vpack.c.b16 %v1362, %v1358
    %v1407 = vpack.c.b16 %v1363, %v1359
    %v1408 = vpack.c.b16 %v1364, %v1360
    %v1409 = vpack.c.b16 %v1365, %v1361
    %v1410 = vpack.c.b16 %v1370, %v1366
    %v1411 = vpack.c.b16 %v1371, %v1367
    %v1412 = vpack.c.b16 %v1372, %v1368
    %v1413 = vpack.c.b16 %v1373, %v1369
    %v1414 = vpack.c.b16 %v1378, %v1374
    %v1415 = vpack.c.b16 %v1379, %v1375
    %v1416 = vpack.c.b16 %v1380, %v1376
    %v1417 = vpack.c.b16 %v1381, %v1377
    %v1418 = vpack.c.b16 %v1386, %v1382
    %v1419 = vpack.c.b16 %v1387, %v1383
    %v1420 = vpack.c.b16 %v1388, %v1384
    %v1421 = vpack.c.b16 %v1389, %v1385
    %1454 = vmatprep.subr.bf16.mxu0 %v1419
    %1455 = vmatpush1.bf16.msra.mxu0 %v1418
    %1456 = vmatprep.subr.bf16.mxu0 %v1415
    %1457 = vmatpush1.bf16.msra.mxu0 %v1414
    %1458 = vmatprep.subr.bf16.mxu0 %v1411
    %1459 = vmatpush1.bf16.msra.mxu0 %v1410
    %1460 = vmatprep.subr.bf16.mxu0 %v1407
    %1461 = vmatpush1.bf16.msra.mxu0 %v1406
    %1462 = vmatprep.subr.bf16.mxu0 %v1403
    %1463 = vmatpush1.bf16.msra.mxu0 %v1402
    %1464 = vmatprep.subr.bf16.mxu0 %v1399
    %1465 = vmatpush1.bf16.msra.mxu0 %v1398
    %1466 = vmatprep.subr.bf16.mxu0 %v1395
    %1467 = vmatpush1.bf16.msra.mxu0 %v1394
    %1468 = vmatprep.subr.bf16.mxu0 %v1391
    %1469 = vmatpush1.bf16.msra.mxu0 %v1390
    %1470 = vmatprep.subr.bf16.mxu0 0
    %1471 = vmatpush2.bf16.msra.mxu0 0
    %1472 = vmatprep.subr.bf16.mxu0 0
    %1473 = vmatpush2.bf16.msra.mxu0 0
    %1474 = vmatprep.subr.bf16.mxu0 0
    %1475 = vmatpush2.bf16.msra.mxu0 0
    %1476 = vmatprep.subr.bf16.mxu0 0
    %1477 = vmatpush2.bf16.msra.mxu0 0
    %1478 = vmatprep.subr.bf16.mxu0 0
    %1479 = vmatpush2.bf16.msra.mxu0 0
    %1480 = vmatprep.subr.bf16.mxu0 0
    %1481 = vmatpush2.bf16.msra.mxu0 0
    %1482 = vmatprep.subr.bf16.mxu0 0
    %1483 = vmatpush2.bf16.msra.mxu0 0
    %1484 = vmatprep.subr.bf16.mxu0 0
    %1485 = vmatpush2.bf16.msra.mxu0 0
    %1486 = vmatprep.mubr.bf16.mxu0 0
    %1487 = vmatmul.mubr.bf16.gmra.mxu0 %v1250
    %v1488 = vpop.f32.mrf.mxu0
    %v1489 = vadd.f32 0.0, %v1488
    %v1490 = vpop.f32.mrf.mxu0
    %v1491 = vadd.f32 0.0, %v1490
    %v1492 = vpop.f32.mrf.mxu0
    %v1493 = vpop.f32.mrf.mxu0
    %1494 = vdwg.mxu0
    %1495 = vmatprep.subr.bf16.mxu0 %v1421
    %1496 = vmatpush1.bf16.msra.mxu0 %v1420
    %1497 = vmatprep.subr.bf16.mxu0 %v1417
    %1498 = vmatpush1.bf16.msra.mxu0 %v1416
    %1499 = vmatprep.subr.bf16.mxu0 %v1413
    %1500 = vmatpush1.bf16.msra.mxu0 %v1412
    %1501 = vmatprep.subr.bf16.mxu0 %v1409
    %1502 = vmatpush1.bf16.msra.mxu0 %v1408
    %1503 = vmatprep.subr.bf16.mxu0 %v1405
    %1504 = vmatpush1.bf16.msra.mxu0 %v1404
    %1505 = vmatprep.subr.bf16.mxu0 %v1401
    %1506 = vmatpush1.bf16.msra.mxu0 %v1400
    %1507 = vmatprep.subr.bf16.mxu0 %v1397
    %1508 = vmatpush1.bf16.msra.mxu0 %v1396
    %1509 = vmatprep.subr.bf16.mxu0 %v1393
    %1510 = vmatpush1.bf16.msra.mxu0 %v1392
    %1511 = vmatprep.subr.bf16.mxu0 0
    %1512 = vmatpush2.bf16.msra.mxu0 0
    %1513 = vmatprep.subr.bf16.mxu0 0
    %1514 = vmatpush2.bf16.msra.mxu0 0
    %1515 = vmatprep.subr.bf16.mxu0 0
    %1516 = vmatpush2.bf16.msra.mxu0 0
    %1517 = vmatprep.subr.bf16.mxu0 0
    %1518 = vmatpush2.bf16.msra.mxu0 0
    %1519 = vmatprep.subr.bf16.mxu0 0
    %1520 = vmatpush2.bf16.msra.mxu0 0
    %1521 = vmatprep.subr.bf16.mxu0 0
    %1522 = vmatpush2.bf16.msra.mxu0 0
    %1523 = vmatprep.subr.bf16.mxu0 0
    %1524 = vmatpush2.bf16.msra.mxu0 0
    %1525 = vmatprep.subr.bf16.mxu0 0
    %1526 = vmatpush2.bf16.msra.mxu0 0
    %1527 = vmatprep.mubr.bf16.mxu0 0
    %1528 = vmatmul.mubr.bf16.gmra.mxu0 %v1250
    %v1529 = vpop.f32.mrf.mxu0
    %v1530 = vadd.f32 0.0, %v1529
    %v1531 = vpop.f32.mrf.mxu0
    %v1532 = vadd.f32 0.0, %v1531
    %v1533 = vpop.f32.mrf.mxu0
    %v1534 = vpop.f32.mrf.mxu0
    %1535 = vdwg.mxu0
    %v1536 = vadd.f32 %v1258, %v1489
    %v1537 = vadd.f32 %v1259, %v1491
    %v1538 = vadd.f32 %v1260, %v1530
    %v1539 = vadd.f32 %v1261, %v1532
    %v1540 = vmul.f32 %v1536, %v629
    %v1541 = vmul.f32 %v1537, %v630
    %v1542 = vmul.f32 %v1538, %v631
    %v1543 = vmul.f32 %v1539, %v632
    %v1544 = vtanh.pop %v1540
    %v1545 = vtanh.pop %v1541
    %v1546 = vtanh.pop %v1542
    %v1547 = vtanh.pop %v1543
    %v1548 = vmul.f32 %v1544, 0.5
    %v1549 = vadd.f32 %v1548, 0.5
    %v1550 = vmul.f32 %v1545, 0.5
    %v1551 = vadd.f32 %v1550, 0.5
    %v1552 = vmul.f32 %v1547, 0.5
    %v1553 = vadd.f32 %v1552, 0.5
    %v1554 = vmul.f32 %v1551, %v1247
    %v1555 = vmul.f32 %v1549, %v1546
    %v1556 = vadd.f32 %v1554, %v1555
    %v1557 = vtanh.pop %v1556
    %v1558 = vmul.f32 %v1553, %v1557
    %v1559 = vpack.c.bf16 %v1558, %v1558
    %s1560 = scalar_lea.vmem [#allocation3], 8
    %1561 = vst [vmem:[%s1560] sm:$0xf] %v1559
    %s1562 = smul.u32 3, 4
    %s1563 = smul.addr %s1562, 4
    %s1564 = scalar_lea.vmem [#allocation2], %s1563
    %v1565 = vld [vmem:[%s1564] sm:$0xff]
    %v1566 = vld [vmem:[%s1564 + $0x8] sm:$0xff]
    %v1567 = vunpack.c.l.bf16 %v1565
    %v1568 = vunpack.c.h.bf16 %v1565
    %v1569 = vunpack.c.l.bf16 %v1566
    %v1570 = vunpack.c.h.bf16 %v1566
    %v1571 = vld [vmem:[#allocation14] sm:$0xff]
    %v1572 = vld [vmem:[#allocation14 + $0x8] sm:$0xff]
    %v1573 = vld [vmem:[#allocation14 + $0x10] sm:$0xff]
    %v1574 = vld [vmem:[#allocation14 + $0x18] sm:$0xff]
    %v1575 = vld [vmem:[#allocation14 + $0x20] sm:$0xff]
    %v1576 = vld [vmem:[#allocation14 + $0x28] sm:$0xff]
    %v1577 = vld [vmem:[#allocation14 + $0x30] sm:$0xff]
    %v1578 = vld [vmem:[#allocation14 + $0x38] sm:$0xff]
    %v1579 = vld [vmem:[#allocation14 + $0x40] sm:$0xff]
    %v1580 = vld [vmem:[#allocation14 + $0x48] sm:$0xff]
    %v1581 = vld [vmem:[#allocation14 + $0x50] sm:$0xff]
    %v1582 = vld [vmem:[#allocation14 + $0x58] sm:$0xff]
    %v1583 = vld [vmem:[#allocation14 + $0x60] sm:$0xff]
    %v1584 = vld [vmem:[#allocation14 + $0x68] sm:$0xff]
    %v1585 = vld [vmem:[#allocation14 + $0x70] sm:$0xff]
    %v1586 = vld [vmem:[#allocation14 + $0x78] sm:$0xff]
    %v1587 = vld [vmem:[#allocation14 + $0x80] sm:$0xff]
    %v1588 = vld [vmem:[#allocation14 + $0x88] sm:$0xff]
    %v1589 = vld [vmem:[#allocation14 + $0x90] sm:$0xff]
    %v1590 = vld [vmem:[#allocation14 + $0x98] sm:$0xff]
    %v1591 = vld [vmem:[#allocation14 + $0xa0] sm:$0xff]
    %v1592 = vld [vmem:[#allocation14 + $0xa8] sm:$0xff]
    %v1593 = vld [vmem:[#allocation14 + $0xb0] sm:$0xff]
    %v1594 = vld [vmem:[#allocation14 + $0xb8] sm:$0xff]
    %v1595 = vld [vmem:[#allocation14 + $0xc0] sm:$0xff]
    %v1596 = vld [vmem:[#allocation14 + $0xc8] sm:$0xff]
    %v1597 = vld [vmem:[#allocation14 + $0xd0] sm:$0xff]
    %v1598 = vld [vmem:[#allocation14 + $0xd8] sm:$0xff]
    %v1599 = vld [vmem:[#allocation14 + $0xe0] sm:$0xff]
    %v1600 = vld [vmem:[#allocation14 + $0xe8] sm:$0xff]
    %v1601 = vld [vmem:[#allocation14 + $0xf0] sm:$0xff]
    %v1602 = vld [vmem:[#allocation14 + $0xf8] sm:$0xff]
    %v1635 = vunpack.c.l.b16 %v1571
    %v1636 = vunpack.c.h.b16 %v1571
    %v1637 = vunpack.c.l.b16 %v1572
    %v1638 = vunpack.c.h.b16 %v1572
    %v1639 = vunpack.c.l.b16 %v1573
    %v1640 = vunpack.c.h.b16 %v1573
    %v1641 = vunpack.c.l.b16 %v1574
    %v1642 = vunpack.c.h.b16 %v1574
    %v1643 = vunpack.c.l.b16 %v1575
    %v1644 = vunpack.c.h.b16 %v1575
    %v1645 = vunpack.c.l.b16 %v1576
    %v1646 = vunpack.c.h.b16 %v1576
    %v1647 = vunpack.c.l.b16 %v1577
    %v1648 = vunpack.c.h.b16 %v1577
    %v1649 = vunpack.c.l.b16 %v1578
    %v1650 = vunpack.c.h.b16 %v1578
    %v1651 = vunpack.c.l.b16 %v1579
    %v1652 = vunpack.c.h.b16 %v1579
    %v1653 = vunpack.c.l.b16 %v1580
    %v1654 = vunpack.c.h.b16 %v1580
    %v1655 = vunpack.c.l.b16 %v1581
    %v1656 = vunpack.c.h.b16 %v1581
    %v1657 = vunpack.c.l.b16 %v1582
    %v1658 = vunpack.c.h.b16 %v1582
    %v1659 = vunpack.c.l.b16 %v1583
    %v1660 = vunpack.c.h.b16 %v1583
    %v1661 = vunpack.c.l.b16 %v1584
    %v1662 = vunpack.c.h.b16 %v1584
    %v1663 = vunpack.c.l.b16 %v1585
    %v1664 = vunpack.c.h.b16 %v1585
    %v1665 = vunpack.c.l.b16 %v1586
    %v1666 = vunpack.c.h.b16 %v1586
    %v1667 = vunpack.c.l.b16 %v1587
    %v1668 = vunpack.c.h.b16 %v1587
    %v1669 = vunpack.c.l.b16 %v1588
    %v1670 = vunpack.c.h.b16 %v1588
    %v1671 = vunpack.c.l.b16 %v1589
    %v1672 = vunpack.c.h.b16 %v1589
    %v1673 = vunpack.c.l.b16 %v1590
    %v1674 = vunpack.c.h.b16 %v1590
    %v1675 = vunpack.c.l.b16 %v1591
    %v1676 = vunpack.c.h.b16 %v1591
    %v1677 = vunpack.c.l.b16 %v1592
    %v1678 = vunpack.c.h.b16 %v1592
    %v1679 = vunpack.c.l.b16 %v1593
    %v1680 = vunpack.c.h.b16 %v1593
    %v1681 = vunpack.c.l.b16 %v1594
    %v1682 = vunpack.c.h.b16 %v1594
    %v1683 = vunpack.c.l.b16 %v1595
    %v1684 = vunpack.c.h.b16 %v1595
    %v1685 = vunpack.c.l.b16 %v1596
    %v1686 = vunpack.c.h.b16 %v1596
    %v1687 = vunpack.c.l.b16 %v1597
    %v1688 = vunpack.c.h.b16 %v1597
    %v1689 = vunpack.c.l.b16 %v1598
    %v1690 = vunpack.c.h.b16 %v1598
    %v1691 = vunpack.c.l.b16 %v1599
    %v1692 = vunpack.c.h.b16 %v1599
    %v1693 = vunpack.c.l.b16 %v1600
    %v1694 = vunpack.c.h.b16 %v1600
    %v1695 = vunpack.c.l.b16 %v1601
    %v1696 = vunpack.c.h.b16 %v1601
    %v1697 = vunpack.c.l.b16 %v1602
    %v1698 = vunpack.c.h.b16 %v1602
    %v1699 = vpack.c.b16 %v1639, %v1635
    %v1700 = vpack.c.b16 %v1640, %v1636
    %v1701 = vpack.c.b16 %v1641, %v1637
    %v1702 = vpack.c.b16 %v1642, %v1638
    %v1703 = vpack.c.b16 %v1647, %v1643
    %v1704 = vpack.c.b16 %v1648, %v1644
    %v1705 = vpack.c.b16 %v1649, %v1645
    %v1706 = vpack.c.b16 %v1650, %v1646
    %v1707 = vpack.c.b16 %v1655, %v1651
    %v1708 = vpack.c.b16 %v1656, %v1652
    %v1709 = vpack.c.b16 %v1657, %v1653
    %v1710 = vpack.c.b16 %v1658, %v1654
    %v1711 = vpack.c.b16 %v1663, %v1659
    %v1712 = vpack.c.b16 %v1664, %v1660
    %v1713 = vpack.c.b16 %v1665, %v1661
    %v1714 = vpack.c.b16 %v1666, %v1662
    %v1715 = vpack.c.b16 %v1671, %v1667
    %v1716 = vpack.c.b16 %v1672, %v1668
    %v1717 = vpack.c.b16 %v1673, %v1669
    %v1718 = vpack.c.b16 %v1674, %v1670
    %v1719 = vpack.c.b16 %v1679, %v1675
    %v1720 = vpack.c.b16 %v1680, %v1676
    %v1721 = vpack.c.b16 %v1681, %v1677
    %v1722 = vpack.c.b16 %v1682, %v1678
    %v1723 = vpack.c.b16 %v1687, %v1683
    %v1724 = vpack.c.b16 %v1688, %v1684
    %v1725 = vpack.c.b16 %v1689, %v1685
    %v1726 = vpack.c.b16 %v1690, %v1686
    %v1727 = vpack.c.b16 %v1695, %v1691
    %v1728 = vpack.c.b16 %v1696, %v1692
    %v1729 = vpack.c.b16 %v1697, %v1693
    %v1730 = vpack.c.b16 %v1698, %v1694
    %1763 = vmatprep.subr.bf16.mxu0 %v1728
    %1764 = vmatpush1.bf16.msra.mxu0 %v1727
    %1765 = vmatprep.subr.bf16.mxu0 %v1724
    %1766 = vmatpush1.bf16.msra.mxu0 %v1723
    %1767 = vmatprep.subr.bf16.mxu0 %v1720
    %1768 = vmatpush1.bf16.msra.mxu0 %v1719
    %1769 = vmatprep.subr.bf16.mxu0 %v1716
    %1770 = vmatpush1.bf16.msra.mxu0 %v1715
    %1771 = vmatprep.subr.bf16.mxu0 %v1712
    %1772 = vmatpush1.bf16.msra.mxu0 %v1711
    %1773 = vmatprep.subr.bf16.mxu0 %v1708
    %1774 = vmatpush1.bf16.msra.mxu0 %v1707
    %1775 = vmatprep.subr.bf16.mxu0 %v1704
    %1776 = vmatpush1.bf16.msra.mxu0 %v1703
    %1777 = vmatprep.subr.bf16.mxu0 %v1700
    %1778 = vmatpush1.bf16.msra.mxu0 %v1699
    %1779 = vmatprep.subr.bf16.mxu0 0
    %1780 = vmatpush2.bf16.msra.mxu0 0
    %1781 = vmatprep.subr.bf16.mxu0 0
    %1782 = vmatpush2.bf16.msra.mxu0 0
    %1783 = vmatprep.subr.bf16.mxu0 0
    %1784 = vmatpush2.bf16.msra.mxu0 0
    %1785 = vmatprep.subr.bf16.mxu0 0
    %1786 = vmatpush2.bf16.msra.mxu0 0
    %1787 = vmatprep.subr.bf16.mxu0 0
    %1788 = vmatpush2.bf16.msra.mxu0 0
    %1789 = vmatprep.subr.bf16.mxu0 0
    %1790 = vmatpush2.bf16.msra.mxu0 0
    %1791 = vmatprep.subr.bf16.mxu0 0
    %1792 = vmatpush2.bf16.msra.mxu0 0
    %1793 = vmatprep.subr.bf16.mxu0 0
    %1794 = vmatpush2.bf16.msra.mxu0 0
    %1795 = vmatprep.mubr.bf16.mxu0 0
    %1796 = vmatmul.mubr.bf16.gmra.mxu0 %v1559
    %v1797 = vpop.f32.mrf.mxu0
    %v1798 = vadd.f32 0.0, %v1797
    %v1799 = vpop.f32.mrf.mxu0
    %v1800 = vadd.f32 0.0, %v1799
    %v1801 = vpop.f32.mrf.mxu0
    %v1802 = vpop.f32.mrf.mxu0
    %1803 = vdwg.mxu0
    %1804 = vmatprep.subr.bf16.mxu0 %v1730
    %1805 = vmatpush1.bf16.msra.mxu0 %v1729
    %1806 = vmatprep.subr.bf16.mxu0 %v1726
    %1807 = vmatpush1.bf16.msra.mxu0 %v1725
    %1808 = vmatprep.subr.bf16.mxu0 %v1722
    %1809 = vmatpush1.bf16.msra.mxu0 %v1721
    %1810 = vmatprep.subr.bf16.mxu0 %v1718
    %1811 = vmatpush1.bf16.msra.mxu0 %v1717
    %1812 = vmatprep.subr.bf16.mxu0 %v1714
    %1813 = vmatpush1.bf16.msra.mxu0 %v1713
    %1814 = vmatprep.subr.bf16.mxu0 %v1710
    %1815 = vmatpush1.bf16.msra.mxu0 %v1709
    %1816 = vmatprep.subr.bf16.mxu0 %v1706
    %1817 = vmatpush1.bf16.msra.mxu0 %v1705
    %1818 = vmatprep.subr.bf16.mxu0 %v1702
    %1819 = vmatpush1.bf16.msra.mxu0 %v1701
    %1820 = vmatprep.subr.bf16.mxu0 0
    %1821 = vmatpush2.bf16.msra.mxu0 0
    %1822 = vmatprep.subr.bf16.mxu0 0
    %1823 = vmatpush2.bf16.msra.mxu0 0
    %1824 = vmatprep.subr.bf16.mxu0 0
    %1825 = vmatpush2.bf16.msra.mxu0 0
    %1826 = vmatprep.subr.bf16.mxu0 0
    %1827 = vmatpush2.bf16.msra.mxu0 0
    %1828 = vmatprep.subr.bf16.mxu0 0
    %1829 = vmatpush2.bf16.msra.mxu0 0
    %1830 = vmatprep.subr.bf16.mxu0 0
    %1831 = vmatpush2.bf16.msra.mxu0 0
    %1832 = vmatprep.subr.bf16.mxu0 0
    %1833 = vmatpush2.bf16.msra.mxu0 0
    %1834 = vmatprep.subr.bf16.mxu0 0
    %1835 = vmatpush2.bf16.msra.mxu0 0
    %1836 = vmatprep.mubr.bf16.mxu0 0
    %1837 = vmatmul.mubr.bf16.gmra.mxu0 %v1559
    %v1838 = vpop.f32.mrf.mxu0
    %v1839 = vadd.f32 0.0, %v1838
    %v1840 = vpop.f32.mrf.mxu0
    %v1841 = vadd.f32 0.0, %v1840
    %v1842 = vpop.f32.mrf.mxu0
    %v1843 = vpop.f32.mrf.mxu0
    %1844 = vdwg.mxu0
    %v1845 = vadd.f32 %v1567, %v1798
    %v1846 = vadd.f32 %v1568, %v1800
    %v1847 = vadd.f32 %v1569, %v1839
    %v1848 = vadd.f32 %v1570, %v1841
    %v1849 = vmul.f32 %v1845, %v629
    %v1850 = vmul.f32 %v1846, %v630
    %v1851 = vmul.f32 %v1847, %v631
    %v1852 = vmul.f32 %v1848, %v632
    %v1853 = vtanh.pop %v1849
    %v1854 = vtanh.pop %v1850
    %v1855 = vtanh.pop %v1851
    %v1856 = vtanh.pop %v1852
    %v1857 = vmul.f32 %v1853, 0.5
    %v1858 = vadd.f32 %v1857, 0.5
    %v1859 = vmul.f32 %v1854, 0.5
    %v1860 = vadd.f32 %v1859, 0.5
    %v1861 = vmul.f32 %v1856, 0.5
    %v1862 = vadd.f32 %v1861, 0.5
    %v1863 = vmul.f32 %v1860, %v1556
    %v1864 = vmul.f32 %v1858, %v1855
    %v1865 = vadd.f32 %v1863, %v1864
    %v1866 = vtanh.pop %v1865
    %v1867 = vmul.f32 %v1862, %v1866
    %v1868 = vpack.c.bf16 %v1867, %v1867
    %s1869 = scalar_lea.vmem [#allocation3], 12
    %1870 = vst [vmem:[%s1869] sm:$0xf] %v1868
    %s1871 = smul.u32 4, 4
    %s1872 = smul.addr %s1871, 4
    %s1873 = scalar_lea.vmem [#allocation2], %s1872
    %v1874 = vld [vmem:[%s1873] sm:$0xff]
    %v1875 = vld [vmem:[%s1873 + $0x8] sm:$0xff]
    %v1876 = vunpack.c.l.bf16 %v1874
    %v1877 = vunpack.c.h.bf16 %v1874
    %v1878 = vunpack.c.l.bf16 %v1875
    %v1879 = vunpack.c.h.bf16 %v1875
    %v1880 = vld [vmem:[#allocation14] sm:$0xff]
    %v1881 = vld [vmem:[#allocation14 + $0x8] sm:$0xff]
    %v1882 = vld [vmem:[#allocation14 + $0x10] sm:$0xff]
    %v1883 = vld [vmem:[#allocation14 + $0x18] sm:$0xff]
    %v1884 = vld [vmem:[#allocation14 + $0x20] sm:$0xff]
    %v1885 = vld [vmem:[#allocation14 + $0x28] sm:$0xff]
    %v1886 = vld [vmem:[#allocation14 + $0x30] sm:$0xff]
    %v1887 = vld [vmem:[#allocation14 + $0x38] sm:$0xff]
    %v1888 = vld [vmem:[#allocation14 + $0x40] sm:$0xff]
    %v1889 = vld [vmem:[#allocation14 + $0x48] sm:$0xff]
    %v1890 = vld [vmem:[#allocation14 + $0x50] sm:$0xff]
    %v1891 = vld [vmem:[#allocation14 + $0x58] sm:$0xff]
    %v1892 = vld [vmem:[#allocation14 + $0x60] sm:$0xff]
    %v1893 = vld [vmem:[#allocation14 + $0x68] sm:$0xff]
    %v1894 = vld [vmem:[#allocation14 + $0x70] sm:$0xff]
    %v1895 = vld [vmem:[#allocation14 + $0x78] sm:$0xff]
    %v1896 = vld [vmem:[#allocation14 + $0x80] sm:$0xff]
    %v1897 = vld [vmem:[#allocation14 + $0x88] sm:$0xff]
    %v1898 = vld [vmem:[#allocation14 + $0x90] sm:$0xff]
    %v1899 = vld [vmem:[#allocation14 + $0x98] sm:$0xff]
    %v1900 = vld [vmem:[#allocation14 + $0xa0] sm:$0xff]
    %v1901 = vld [vmem:[#allocation14 + $0xa8] sm:$0xff]
    %v1902 = vld [vmem:[#allocation14 + $0xb0] sm:$0xff]
    %v1903 = vld [vmem:[#allocation14 + $0xb8] sm:$0xff]
    %v1904 = vld [vmem:[#allocation14 + $0xc0] sm:$0xff]
    %v1905 = vld [vmem:[#allocation14 + $0xc8] sm:$0xff]
    %v1906 = vld [vmem:[#allocation14 + $0xd0] sm:$0xff]
    %v1907 = vld [vmem:[#allocation14 + $0xd8] sm:$0xff]
    %v1908 = vld [vmem:[#allocation14 + $0xe0] sm:$0xff]
    %v1909 = vld [vmem:[#allocation14 + $0xe8] sm:$0xff]
    %v1910 = vld [vmem:[#allocation14 + $0xf0] sm:$0xff]
    %v1911 = vld [vmem:[#allocation14 + $0xf8] sm:$0xff]
    %v1944 = vunpack.c.l.b16 %v1880
    %v1945 = vunpack.c.h.b16 %v1880
    %v1946 = vunpack.c.l.b16 %v1881
    %v1947 = vunpack.c.h.b16 %v1881
    %v1948 = vunpack.c.l.b16 %v1882
    %v1949 = vunpack.c.h.b16 %v1882
    %v1950 = vunpack.c.l.b16 %v1883
    %v1951 = vunpack.c.h.b16 %v1883
    %v1952 = vunpack.c.l.b16 %v1884
    %v1953 = vunpack.c.h.b16 %v1884
    %v1954 = vunpack.c.l.b16 %v1885
    %v1955 = vunpack.c.h.b16 %v1885
    %v1956 = vunpack.c.l.b16 %v1886
    %v1957 = vunpack.c.h.b16 %v1886
    %v1958 = vunpack.c.l.b16 %v1887
    %v1959 = vunpack.c.h.b16 %v1887
    %v1960 = vunpack.c.l.b16 %v1888
    %v1961 = vunpack.c.h.b16 %v1888
    %v1962 = vunpack.c.l.b16 %v1889
    %v1963 = vunpack.c.h.b16 %v1889
    %v1964 = vunpack.c.l.b16 %v1890
    %v1965 = vunpack.c.h.b16 %v1890
    %v1966 = vunpack.c.l.b16 %v1891
    %v1967 = vunpack.c.h.b16 %v1891
    %v1968 = vunpack.c.l.b16 %v1892
    %v1969 = vunpack.c.h.b16 %v1892
    %v1970 = vunpack.c.l.b16 %v1893
    %v1971 = vunpack.c.h.b16 %v1893
    %v1972 = vunpack.c.l.b16 %v1894
    %v1973 = vunpack.c.h.b16 %v1894
    %v1974 = vunpack.c.l.b16 %v1895
    %v1975 = vunpack.c.h.b16 %v1895
    %v1976 = vunpack.c.l.b16 %v1896
    %v1977 = vunpack.c.h.b16 %v1896
    %v1978 = vunpack.c.l.b16 %v1897
    %v1979 = vunpack.c.h.b16 %v1897
    %v1980 = vunpack.c.l.b16 %v1898
    %v1981 = vunpack.c.h.b16 %v1898
    %v1982 = vunpack.c.l.b16 %v1899
    %v1983 = vunpack.c.h.b16 %v1899
    %v1984 = vunpack.c.l.b16 %v1900
    %v1985 = vunpack.c.h.b16 %v1900
    %v1986 = vunpack.c.l.b16 %v1901
    %v1987 = vunpack.c.h.b16 %v1901
    %v1988 = vunpack.c.l.b16 %v1902
    %v1989 = vunpack.c.h.b16 %v1902
    %v1990 = vunpack.c.l.b16 %v1903
    %v1991 = vunpack.c.h.b16 %v1903
    %v1992 = vunpack.c.l.b16 %v1904
    %v1993 = vunpack.c.h.b16 %v1904
    %v1994 = vunpack.c.l.b16 %v1905
    %v1995 = vunpack.c.h.b16 %v1905
    %v1996 = vunpack.c.l.b16 %v1906
    %v1997 = vunpack.c.h.b16 %v1906
    %v1998 = vunpack.c.l.b16 %v1907
    %v1999 = vunpack.c.h.b16 %v1907
    %v2000 = vunpack.c.l.b16 %v1908
    %v2001 = vunpack.c.h.b16 %v1908
    %v2002 = vunpack.c.l.b16 %v1909
    %v2003 = vunpack.c.h.b16 %v1909
    %v2004 = vunpack.c.l.b16 %v1910
    %v2005 = vunpack.c.h.b16 %v1910
    %v2006 = vunpack.c.l.b16 %v1911
    %v2007 = vunpack.c.h.b16 %v1911
    %v2008 = vpack.c.b16 %v1948, %v1944
    %v2009 = vpack.c.b16 %v1949, %v1945
    %v2010 = vpack.c.b16 %v1950, %v1946
    %v2011 = vpack.c.b16 %v1951, %v1947
    %v2012 = vpack.c.b16 %v1956, %v1952
    %v2013 = vpack.c.b16 %v1957, %v1953
    %v2014 = vpack.c.b16 %v1958, %v1954
    %v2015 = vpack.c.b16 %v1959, %v1955
    %v2016 = vpack.c.b16 %v1964, %v1960
    %v2017 = vpack.c.b16 %v1965, %v1961
    %v2018 = vpack.c.b16 %v1966, %v1962
    %v2019 = vpack.c.b16 %v1967, %v1963
    %v2020 = vpack.c.b16 %v1972, %v1968
    %v2021 = vpack.c.b16 %v1973, %v1969
    %v2022 = vpack.c.b16 %v1974, %v1970
    %v2023 = vpack.c.b16 %v1975, %v1971
    %v2024 = vpack.c.b16 %v1980, %v1976
    %v2025 = vpack.c.b16 %v1981, %v1977
    %v2026 = vpack.c.b16 %v1982, %v1978
    %v2027 = vpack.c.b16 %v1983, %v1979
    %v2028 = vpack.c.b16 %v1988, %v1984
    %v2029 = vpack.c.b16 %v1989, %v1985
    %v2030 = vpack.c.b16 %v1990, %v1986
    %v2031 = vpack.c.b16 %v1991, %v1987
    %v2032 = vpack.c.b16 %v1996, %v1992
    %v2033 = vpack.c.b16 %v1997, %v1993
    %v2034 = vpack.c.b16 %v1998, %v1994
    %v2035 = vpack.c.b16 %v1999, %v1995
    %v2036 = vpack.c.b16 %v2004, %v2000
    %v2037 = vpack.c.b16 %v2005, %v2001
    %v2038 = vpack.c.b16 %v2006, %v2002
    %v2039 = vpack.c.b16 %v2007, %v2003
    %2072 = vmatprep.subr.bf16.mxu0 %v2037
    %2073 = vmatpush1.bf16.msra.mxu0 %v2036
    %2074 = vmatprep.subr.bf16.mxu0 %v2033
    %2075 = vmatpush1.bf16.msra.mxu0 %v2032
    %2076 = vmatprep.subr.bf16.mxu0 %v2029
    %2077 = vmatpush1.bf16.msra.mxu0 %v2028
    %2078 = vmatprep.subr.bf16.mxu0 %v2025
    %2079 = vmatpush1.bf16.msra.mxu0 %v2024
    %2080 = vmatprep.subr.bf16.mxu0 %v2021
    %2081 = vmatpush1.bf16.msra.mxu0 %v2020
    %2082 = vmatprep.subr.bf16.mxu0 %v2017
    %2083 = vmatpush1.bf16.msra.mxu0 %v2016
    %2084 = vmatprep.subr.bf16.mxu0 %v2013
    %2085 = vmatpush1.bf16.msra.mxu0 %v2012
    %2086 = vmatprep.subr.bf16.mxu0 %v2009
    %2087 = vmatpush1.bf16.msra.mxu0 %v2008
    %2088 = vmatprep.subr.bf16.mxu0 0
    %2089 = vmatpush2.bf16.msra.mxu0 0
    %2090 = vmatprep.subr.bf16.mxu0 0
    %2091 = vmatpush2.bf16.msra.mxu0 0
    %2092 = vmatprep.subr.bf16.mxu0 0
    %2093 = vmatpush2.bf16.msra.mxu0 0
    %2094 = vmatprep.subr.bf16.mxu0 0
    %2095 = vmatpush2.bf16.msra.mxu0 0
    %2096 = vmatprep.subr.bf16.mxu0 0
    %2097 = vmatpush2.bf16.msra.mxu0 0
    %2098 = vmatprep.subr.bf16.mxu0 0
    %2099 = vmatpush2.bf16.msra.mxu0 0
    %2100 = vmatprep.subr.bf16.mxu0 0
    %2101 = vmatpush2.bf16.msra.mxu0 0
    %2102 = vmatprep.subr.bf16.mxu0 0
    %2103 = vmatpush2.bf16.msra.mxu0 0
    %2104 = vmatprep.mubr.bf16.mxu0 0
    %2105 = vmatmul.mubr.bf16.gmra.mxu0 %v1868
    %v2106 = vpop.f32.mrf.mxu0
    %v2107 = vadd.f32 0.0, %v2106
    %v2108 = vpop.f32.mrf.mxu0
    %v2109 = vadd.f32 0.0, %v2108
    %v2110 = vpop.f32.mrf.mxu0
    %v2111 = vpop.f32.mrf.mxu0
    %2112 = vdwg.mxu0
    %2113 = vmatprep.subr.bf16.mxu0 %v2039
    %2114 = vmatpush1.bf16.msra.mxu0 %v2038
    %2115 = vmatprep.subr.bf16.mxu0 %v2035
    %2116 = vmatpush1.bf16.msra.mxu0 %v2034
    %2117 = vmatprep.subr.bf16.mxu0 %v2031
    %2118 = vmatpush1.bf16.msra.mxu0 %v2030
    %2119 = vmatprep.subr.bf16.mxu0 %v2027
    %2120 = vmatpush1.bf16.msra.mxu0 %v2026
    %2121 = vmatprep.subr.bf16.mxu0 %v2023
    %2122 = vmatpush1.bf16.msra.mxu0 %v2022
    %2123 = vmatprep.subr.bf16.mxu0 %v2019
    %2124 = vmatpush1.bf16.msra.mxu0 %v2018
    %2125 = vmatprep.subr.bf16.mxu0 %v2015
    %2126 = vmatpush1.bf16.msra.mxu0 %v2014
    %2127 = vmatprep.subr.bf16.mxu0 %v2011
    %2128 = vmatpush1.bf16.msra.mxu0 %v2010
    %2129 = vmatprep.subr.bf16.mxu0 0
    %2130 = vmatpush2.bf16.msra.mxu0 0
    %2131 = vmatprep.subr.bf16.mxu0 0
    %2132 = vmatpush2.bf16.msra.mxu0 0
    %2133 = vmatprep.subr.bf16.mxu0 0
    %2134 = vmatpush2.bf16.msra.mxu0 0
    %2135 = vmatprep.subr.bf16.mxu0 0
    %2136 = vmatpush2.bf16.msra.mxu0 0
    %2137 = vmatprep.subr.bf16.mxu0 0
    %2138 = vmatpush2.bf16.msra.mxu0 0
    %2139 = vmatprep.subr.bf16.mxu0 0
    %2140 = vmatpush2.bf16.msra.mxu0 0
    %2141 = vmatprep.subr.bf16.mxu0 0
    %2142 = vmatpush2.bf16.msra.mxu0 0
    %2143 = vmatprep.subr.bf16.mxu0 0
    %2144 = vmatpush2.bf16.msra.mxu0 0
    %2145 = vmatprep.mubr.bf16.mxu0 0
    %2146 = vmatmul.mubr.bf16.gmra.mxu0 %v1868
    %v2147 = vpop.f32.mrf.mxu0
    %v2148 = vadd.f32 0.0, %v2147
    %v2149 = vpop.f32.mrf.mxu0
    %v2150 = vadd.f32 0.0, %v2149
    %v2151 = vpop.f32.mrf.mxu0
    %v2152 = vpop.f32.mrf.mxu0
    %2153 = vdwg.mxu0
    %v2154 = vadd.f32 %v1876, %v2107
    %v2155 = vadd.f32 %v1877, %v2109
    %v2156 = vadd.f32 %v1878, %v2148
    %v2157 = vadd.f32 %v1879, %v2150
    %v2158 = vmul.f32 %v2154, %v629
    %v2159 = vmul.f32 %v2155, %v630
    %v2160 = vmul.f32 %v2156, %v631
    %v2161 = vmul.f32 %v2157, %v632
    %v2162 = vtanh.pop %v2158
    %v2163 = vtanh.pop %v2159
    %v2164 = vtanh.pop %v2160
    %v2165 = vtanh.pop %v2161
    %v2166 = vmul.f32 %v2162, 0.5
    %v2167 = vadd.f32 %v2166, 0.5
    %v2168 = vmul.f32 %v2163, 0.5
    %v2169 = vadd.f32 %v2168, 0.5
    %v2170 = vmul.f32 %v2165, 0.5
    %v2171 = vadd.f32 %v2170, 0.5
    %v2172 = vmul.f32 %v2169, %v1865
    %v2173 = vmul.f32 %v2167, %v2164
    %v2174 = vadd.f32 %v2172, %v2173
    %v2175 = vtanh.pop %v2174
    %v2176 = vmul.f32 %v2171, %v2175
    %v2177 = vpack.c.bf16 %v2176, %v2176
    %s2178 = scalar_lea.vmem [#allocation3], 16
    %2179 = vst [vmem:[%s2178] sm:$0xf] %v2177
    %s2180 = smul.u32 5, 4
    %s2181 = smul.addr %s2180, 4
    %s2182 = scalar_lea.vmem [#allocation2], %s2181
    %v2183 = vld [vmem:[%s2182] sm:$0xff]
    %v2184 = vld [vmem:[%s2182 + $0x8] sm:$0xff]
    %v2185 = vunpack.c.l.bf16 %v2183
    %v2186 = vunpack.c.h.bf16 %v2183
    %v2187 = vunpack.c.l.bf16 %v2184
    %v2188 = vunpack.c.h.bf16 %v2184
    %v2189 = vld [vmem:[#allocation14] sm:$0xff]
    %v2190 = vld [vmem:[#allocation14 + $0x8] sm:$0xff]
    %v2191 = vld [vmem:[#allocation14 + $0x10] sm:$0xff]
    %v2192 = vld [vmem:[#allocation14 + $0x18] sm:$0xff]
    %v2193 = vld [vmem:[#allocation14 + $0x20] sm:$0xff]
    %v2194 = vld [vmem:[#allocation14 + $0x28] sm:$0xff]
    %v2195 = vld [vmem:[#allocation14 + $0x30] sm:$0xff]
    %v2196 = vld [vmem:[#allocation14 + $0x38] sm:$0xff]
    %v2197 = vld [vmem:[#allocation14 + $0x40] sm:$0xff]
    %v2198 = vld [vmem:[#allocation14 + $0x48] sm:$0xff]
    %v2199 = vld [vmem:[#allocation14 + $0x50] sm:$0xff]
    %v2200 = vld [vmem:[#allocation14 + $0x58] sm:$0xff]
    %v2201 = vld [vmem:[#allocation14 + $0x60] sm:$0xff]
    %v2202 = vld [vmem:[#allocation14 + $0x68] sm:$0xff]
    %v2203 = vld [vmem:[#allocation14 + $0x70] sm:$0xff]
    %v2204 = vld [vmem:[#allocation14 + $0x78] sm:$0xff]
    %v2205 = vld [vmem:[#allocation14 + $0x80] sm:$0xff]
    %v2206 = vld [vmem:[#allocation14 + $0x88] sm:$0xff]
    %v2207 = vld [vmem:[#allocation14 + $0x90] sm:$0xff]
    %v2208 = vld [vmem:[#allocation14 + $0x98] sm:$0xff]
    %v2209 = vld [vmem:[#allocation14 + $0xa0] sm:$0xff]
    %v2210 = vld [vmem:[#allocation14 + $0xa8] sm:$0xff]
    %v2211 = vld [vmem:[#allocation14 + $0xb0] sm:$0xff]
    %v2212 = vld [vmem:[#allocation14 + $0xb8] sm:$0xff]
    %v2213 = vld [vmem:[#allocation14 + $0xc0] sm:$0xff]
    %v2214 = vld [vmem:[#allocation14 + $0xc8] sm:$0xff]
    %v2215 = vld [vmem:[#allocation14 + $0xd0] sm:$0xff]
    %v2216 = vld [vmem:[#allocation14 + $0xd8] sm:$0xff]
    %v2217 = vld [vmem:[#allocation14 + $0xe0] sm:$0xff]
    %v2218 = vld [vmem:[#allocation14 + $0xe8] sm:$0xff]
    %v2219 = vld [vmem:[#allocation14 + $0xf0] sm:$0xff]
    %v2220 = vld [vmem:[#allocation14 + $0xf8] sm:$0xff]
    %v2253 = vunpack.c.l.b16 %v2189
    %v2254 = vunpack.c.h.b16 %v2189
    %v2255 = vunpack.c.l.b16 %v2190
    %v2256 = vunpack.c.h.b16 %v2190
    %v2257 = vunpack.c.l.b16 %v2191
    %v2258 = vunpack.c.h.b16 %v2191
    %v2259 = vunpack.c.l.b16 %v2192
    %v2260 = vunpack.c.h.b16 %v2192
    %v2261 = vunpack.c.l.b16 %v2193
    %v2262 = vunpack.c.h.b16 %v2193
    %v2263 = vunpack.c.l.b16 %v2194
    %v2264 = vunpack.c.h.b16 %v2194
    %v2265 = vunpack.c.l.b16 %v2195
    %v2266 = vunpack.c.h.b16 %v2195
    %v2267 = vunpack.c.l.b16 %v2196
    %v2268 = vunpack.c.h.b16 %v2196
    %v2269 = vunpack.c.l.b16 %v2197
    %v2270 = vunpack.c.h.b16 %v2197
    %v2271 = vunpack.c.l.b16 %v2198
    %v2272 = vunpack.c.h.b16 %v2198
    %v2273 = vunpack.c.l.b16 %v2199
    %v2274 = vunpack.c.h.b16 %v2199
    %v2275 = vunpack.c.l.b16 %v2200
    %v2276 = vunpack.c.h.b16 %v2200
    %v2277 = vunpack.c.l.b16 %v2201
    %v2278 = vunpack.c.h.b16 %v2201
    %v2279 = vunpack.c.l.b16 %v2202
    %v2280 = vunpack.c.h.b16 %v2202
    %v2281 = vunpack.c.l.b16 %v2203
    %v2282 = vunpack.c.h.b16 %v2203
    %v2283 = vunpack.c.l.b16 %v2204
    %v2284 = vunpack.c.h.b16 %v2204
    %v2285 = vunpack.c.l.b16 %v2205
    %v2286 = vunpack.c.h.b16 %v2205
    %v2287 = vunpack.c.l.b16 %v2206
    %v2288 = vunpack.c.h.b16 %v2206
    %v2289 = vunpack.c.l.b16 %v2207
    %v2290 = vunpack.c.h.b16 %v2207
    %v2291 = vunpack.c.l.b16 %v2208
    %v2292 = vunpack.c.h.b16 %v2208
    %v2293 = vunpack.c.l.b16 %v2209
    %v2294 = vunpack.c.h.b16 %v2209
    %v2295 = vunpack.c.l.b16 %v2210
    %v2296 = vunpack.c.h.b16 %v2210
    %v2297 = vunpack.c.l.b16 %v2211
    %v2298 = vunpack.c.h.b16 %v2211
    %v2299 = vunpack.c.l.b16 %v2212
    %v2300 = vunpack.c.h.b16 %v2212
    %v2301 = vunpack.c.l.b16 %v2213
    %v2302 = vunpack.c.h.b16 %v2213
    %v2303 = vunpack.c.l.b16 %v2214
    %v2304 = vunpack.c.h.b16 %v2214
    %v2305 = vunpack.c.l.b16 %v2215
    %v2306 = vunpack.c.h.b16 %v2215
    %v2307 = vunpack.c.l.b16 %v2216
    %v2308 = vunpack.c.h.b16 %v2216
    %v2309 = vunpack.c.l.b16 %v2217
    %v2310 = vunpack.c.h.b16 %v2217
    %v2311 = vunpack.c.l.b16 %v2218
    %v2312 = vunpack.c.h.b16 %v2218
    %v2313 = vunpack.c.l.b16 %v2219
    %v2314 = vunpack.c.h.b16 %v2219
    %v2315 = vunpack.c.l.b16 %v2220
    %v2316 = vunpack.c.h.b16 %v2220
    %v2317 = vpack.c.b16 %v2257, %v2253
    %v2318 = vpack.c.b16 %v2258, %v2254
    %v2319 = vpack.c.b16 %v2259, %v2255
    %v2320 = vpack.c.b16 %v2260, %v2256
    %v2321 = vpack.c.b16 %v2265, %v2261
    %v2322 = vpack.c.b16 %v2266, %v2262
    %v2323 = vpack.c.b16 %v2267, %v2263
    %v2324 = vpack.c.b16 %v2268, %v2264
    %v2325 = vpack.c.b16 %v2273, %v2269
    %v2326 = vpack.c.b16 %v2274, %v2270
    %v2327 = vpack.c.b16 %v2275, %v2271
    %v2328 = vpack.c.b16 %v2276, %v2272
    %v2329 = vpack.c.b16 %v2281, %v2277
    %v2330 = vpack.c.b16 %v2282, %v2278
    %v2331 = vpack.c.b16 %v2283, %v2279
    %v2332 = vpack.c.b16 %v2284, %v2280
    %v2333 = vpack.c.b16 %v2289, %v2285
    %v2334 = vpack.c.b16 %v2290, %v2286
    %v2335 = vpack.c.b16 %v2291, %v2287
    %v2336 = vpack.c.b16 %v2292, %v2288
    %v2337 = vpack.c.b16 %v2297, %v2293
    %v2338 = vpack.c.b16 %v2298, %v2294
    %v2339 = vpack.c.b16 %v2299, %v2295
    %v2340 = vpack.c.b16 %v2300, %v2296
    %v2341 = vpack.c.b16 %v2305, %v2301
    %v2342 = vpack.c.b16 %v2306, %v2302
    %v2343 = vpack.c.b16 %v2307, %v2303
    %v2344 = vpack.c.b16 %v2308, %v2304
    %v2345 = vpack.c.b16 %v2313, %v2309
    %v2346 = vpack.c.b16 %v2314, %v2310
    %v2347 = vpack.c.b16 %v2315, %v2311
    %v2348 = vpack.c.b16 %v2316, %v2312
    %2381 = vmatprep.subr.bf16.mxu0 %v2346
    %2382 = vmatpush1.bf16.msra.mxu0 %v2345
    %2383 = vmatprep.subr.bf16.mxu0 %v2342
    %2384 = vmatpush1.bf16.msra.mxu0 %v2341
    %2385 = vmatprep.subr.bf16.mxu0 %v2338
    %2386 = vmatpush1.bf16.msra.mxu0 %v2337
    %2387 = vmatprep.subr.bf16.mxu0 %v2334
    %2388 = vmatpush1.bf16.msra.mxu0 %v2333
    %2389 = vmatprep.subr.bf16.mxu0 %v2330
    %2390 = vmatpush1.bf16.msra.mxu0 %v2329
    %2391 = vmatprep.subr.bf16.mxu0 %v2326
    %2392 = vmatpush1.bf16.msra.mxu0 %v2325
    %2393 = vmatprep.subr.bf16.mxu0 %v2322
    %2394 = vmatpush1.bf16.msra.mxu0 %v2321
    %2395 = vmatprep.subr.bf16.mxu0 %v2318
    %2396 = vmatpush1.bf16.msra.mxu0 %v2317
    %2397 = vmatprep.subr.bf16.mxu0 0
    %2398 = vmatpush2.bf16.msra.mxu0 0
    %2399 = vmatprep.subr.bf16.mxu0 0
    %2400 = vmatpush2.bf16.msra.mxu0 0
    %2401 = vmatprep.subr.bf16.mxu0 0
    %2402 = vmatpush2.bf16.msra.mxu0 0
    %2403 = vmatprep.subr.bf16.mxu0 0
    %2404 = vmatpush2.bf16.msra.mxu0 0
    %2405 = vmatprep.subr.bf16.mxu0 0
    %2406 = vmatpush2.bf16.msra.mxu0 0
    %2407 = vmatprep.subr.bf16.mxu0 0
    %2408 = vmatpush2.bf16.msra.mxu0 0
    %2409 = vmatprep.subr.bf16.mxu0 0
    %2410 = vmatpush2.bf16.msra.mxu0 0
    %2411 = vmatprep.subr.bf16.mxu0 0
    %2412 = vmatpush2.bf16.msra.mxu0 0
    %2413 = vmatprep.mubr.bf16.mxu0 0
    %2414 = vmatmul.mubr.bf16.gmra.mxu0 %v2177
    %v2415 = vpop.f32.mrf.mxu0
    %v2416 = vadd.f32 0.0, %v2415
    %v2417 = vpop.f32.mrf.mxu0
    %v2418 = vadd.f32 0.0, %v2417
    %v2419 = vpop.f32.mrf.mxu0
    %v2420 = vpop.f32.mrf.mxu0
    %2421 = vdwg.mxu0
    %2422 = vmatprep.subr.bf16.mxu0 %v2348
    %2423 = vmatpush1.bf16.msra.mxu0 %v2347
    %2424 = vmatprep.subr.bf16.mxu0 %v2344
    %2425 = vmatpush1.bf16.msra.mxu0 %v2343
    %2426 = vmatprep.subr.bf16.mxu0 %v2340
    %2427 = vmatpush1.bf16.msra.mxu0 %v2339
    %2428 = vmatprep.subr.bf16.mxu0 %v2336
    %2429 = vmatpush1.bf16.msra.mxu0 %v2335
    %2430 = vmatprep.subr.bf16.mxu0 %v2332
    %2431 = vmatpush1.bf16.msra.mxu0 %v2331
    %2432 = vmatprep.subr.bf16.mxu0 %v2328
    %2433 = vmatpush1.bf16.msra.mxu0 %v2327
    %2434 = vmatprep.subr.bf16.mxu0 %v2324
    %2435 = vmatpush1.bf16.msra.mxu0 %v2323
    %2436 = vmatprep.subr.bf16.mxu0 %v2320
    %2437 = vmatpush1.bf16.msra.mxu0 %v2319
    %2438 = vmatprep.subr.bf16.mxu0 0
    %2439 = vmatpush2.bf16.msra.mxu0 0
    %2440 = vmatprep.subr.bf16.mxu0 0
    %2441 = vmatpush2.bf16.msra.mxu0 0
    %2442 = vmatprep.subr.bf16.mxu0 0
    %2443 = vmatpush2.bf16.msra.mxu0 0
    %2444 = vmatprep.subr.bf16.mxu0 0
    %2445 = vmatpush2.bf16.msra.mxu0 0
    %2446 = vmatprep.subr.bf16.mxu0 0
    %2447 = vmatpush2.bf16.msra.mxu0 0
    %2448 = vmatprep.subr.bf16.mxu0 0
    %2449 = vmatpush2.bf16.msra.mxu0 0
    %2450 = vmatprep.subr.bf16.mxu0 0
    %2451 = vmatpush2.bf16.msra.mxu0 0
    %2452 = vmatprep.subr.bf16.mxu0 0
    %2453 = vmatpush2.bf16.msra.mxu0 0
    %2454 = vmatprep.mubr.bf16.mxu0 0
    %2455 = vmatmul.mubr.bf16.gmra.mxu0 %v2177
    %v2456 = vpop.f32.mrf.mxu0
    %v2457 = vadd.f32 0.0, %v2456
    %v2458 = vpop.f32.mrf.mxu0
    %v2459 = vadd.f32 0.0, %v2458
    %v2460 = vpop.f32.mrf.mxu0
    %v2461 = vpop.f32.mrf.mxu0
    %2462 = vdwg.mxu0
    %v2463 = vadd.f32 %v2185, %v2416
    %v2464 = vadd.f32 %v2186, %v2418
    %v2465 = vadd.f32 %v2187, %v2457
    %v2466 = vadd.f32 %v2188, %v2459
    %v2467 = vmul.f32 %v2463, %v629
    %v2468 = vmul.f32 %v2464, %v630
    %v2469 = vmul.f32 %v2465, %v631
    %v2470 = vmul.f32 %v2466, %v632
    %v2471 = vtanh.pop %v2467
    %v2472 = vtanh.pop %v2468
    %v2473 = vtanh.pop %v2469
    %v2474 = vtanh.pop %v2470
    %v2475 = vmul.f32 %v2471, 0.5
    %v2476 = vadd.f32 %v2475, 0.5
    %v2477 = vmul.f32 %v2472, 0.5
    %v2478 = vadd.f32 %v2477, 0.5
    %v2479 = vmul.f32 %v2474, 0.5
    %v2480 = vadd.f32 %v2479, 0.5
    %v2481 = vmul.f32 %v2478, %v2174
    %v2482 = vmul.f32 %v2476, %v2473
    %v2483 = vadd.f32 %v2481, %v2482
    %v2484 = vtanh.pop %v2483
    %v2485 = vmul.f32 %v2480, %v2484
    %v2486 = vpack.c.bf16 %v2485, %v2485
    %s2487 = scalar_lea.vmem [#allocation3], 20
    %2488 = vst [vmem:[%s2487] sm:$0xf] %v2486
    %s2489 = smul.u32 6, 4
    %s2490 = smul.addr %s2489, 4
    %s2491 = scalar_lea.vmem [#allocation2], %s2490
    %v2492 = vld [vmem:[%s2491] sm:$0xff]
    %v2493 = vld [vmem:[%s2491 + $0x8] sm:$0xff]
    %v2494 = vunpack.c.l.bf16 %v2492
    %v2495 = vunpack.c.h.bf16 %v2492
    %v2496 = vunpack.c.l.bf16 %v2493
    %v2497 = vunpack.c.h.bf16 %v2493
    %v2498 = vld [vmem:[#allocation14] sm:$0xff]
    %v2499 = vld [vmem:[#allocation14 + $0x8] sm:$0xff]
    %v2500 = vld [vmem:[#allocation14 + $0x10] sm:$0xff]
    %v2501 = vld [vmem:[#allocation14 + $0x18] sm:$0xff]
    %v2502 = vld [vmem:[#allocation14 + $0x20] sm:$0xff]
    %v2503 = vld [vmem:[#allocation14 + $0x28] sm:$0xff]
    %v2504 = vld [vmem:[#allocation14 + $0x30] sm:$0xff]
    %v2505 = vld [vmem:[#allocation14 + $0x38] sm:$0xff]
    %v2506 = vld [vmem:[#allocation14 + $0x40] sm:$0xff]
    %v2507 = vld [vmem:[#allocation14 + $0x48] sm:$0xff]
    %v2508 = vld [vmem:[#allocation14 + $0x50] sm:$0xff]
    %v2509 = vld [vmem:[#allocation14 + $0x58] sm:$0xff]
    %v2510 = vld [vmem:[#allocation14 + $0x60] sm:$0xff]
    %v2511 = vld [vmem:[#allocation14 + $0x68] sm:$0xff]
    %v2512 = vld [vmem:[#allocation14 + $0x70] sm:$0xff]
    %v2513 = vld [vmem:[#allocation14 + $0x78] sm:$0xff]
    %v2514 = vld [vmem:[#allocation14 + $0x80] sm:$0xff]
    %v2515 = vld [vmem:[#allocation14 + $0x88] sm:$0xff]
    %v2516 = vld [vmem:[#allocation14 + $0x90] sm:$0xff]
    %v2517 = vld [vmem:[#allocation14 + $0x98] sm:$0xff]
    %v2518 = vld [vmem:[#allocation14 + $0xa0] sm:$0xff]
    %v2519 = vld [vmem:[#allocation14 + $0xa8] sm:$0xff]
    %v2520 = vld [vmem:[#allocation14 + $0xb0] sm:$0xff]
    %v2521 = vld [vmem:[#allocation14 + $0xb8] sm:$0xff]
    %v2522 = vld [vmem:[#allocation14 + $0xc0] sm:$0xff]
    %v2523 = vld [vmem:[#allocation14 + $0xc8] sm:$0xff]
    %v2524 = vld [vmem:[#allocation14 + $0xd0] sm:$0xff]
    %v2525 = vld [vmem:[#allocation14 + $0xd8] sm:$0xff]
    %v2526 = vld [vmem:[#allocation14 + $0xe0] sm:$0xff]
    %v2527 = vld [vmem:[#allocation14 + $0xe8] sm:$0xff]
    %v2528 = vld [vmem:[#allocation14 + $0xf0] sm:$0xff]
    %v2529 = vld [vmem:[#allocation14 + $0xf8] sm:$0xff]
    %v2562 = vunpack.c.l.b16 %v2498
    %v2563 = vunpack.c.h.b16 %v2498
    %v2564 = vunpack.c.l.b16 %v2499
    %v2565 = vunpack.c.h.b16 %v2499
    %v2566 = vunpack.c.l.b16 %v2500
    %v2567 = vunpack.c.h.b16 %v2500
    %v2568 = vunpack.c.l.b16 %v2501
    %v2569 = vunpack.c.h.b16 %v2501
    %v2570 = vunpack.c.l.b16 %v2502
    %v2571 = vunpack.c.h.b16 %v2502
    %v2572 = vunpack.c.l.b16 %v2503
    %v2573 = vunpack.c.h.b16 %v2503
    %v2574 = vunpack.c.l.b16 %v2504
    %v2575 = vunpack.c.h.b16 %v2504
    %v2576 = vunpack.c.l.b16 %v2505
    %v2577 = vunpack.c.h.b16 %v2505
    %v2578 = vunpack.c.l.b16 %v2506
    %v2579 = vunpack.c.h.b16 %v2506
    %v2580 = vunpack.c.l.b16 %v2507
    %v2581 = vunpack.c.h.b16 %v2507
    %v2582 = vunpack.c.l.b16 %v2508
    %v2583 = vunpack.c.h.b16 %v2508
    %v2584 = vunpack.c.l.b16 %v2509
    %v2585 = vunpack.c.h.b16 %v2509
    %v2586 = vunpack.c.l.b16 %v2510
    %v2587 = vunpack.c.h.b16 %v2510
    %v2588 = vunpack.c.l.b16 %v2511
    %v2589 = vunpack.c.h.b16 %v2511
    %v2590 = vunpack.c.l.b16 %v2512
    %v2591 = vunpack.c.h.b16 %v2512
    %v2592 = vunpack.c.l.b16 %v2513
    %v2593 = vunpack.c.h.b16 %v2513
    %v2594 = vunpack.c.l.b16 %v2514
    %v2595 = vunpack.c.h.b16 %v2514
    %v2596 = vunpack.c.l.b16 %v2515
    %v2597 = vunpack.c.h.b16 %v2515
    %v2598 = vunpack.c.l.b16 %v2516
    %v2599 = vunpack.c.h.b16 %v2516
    %v2600 = vunpack.c.l.b16 %v2517
    %v2601 = vunpack.c.h.b16 %v2517
    %v2602 = vunpack.c.l.b16 %v2518
    %v2603 = vunpack.c.h.b16 %v2518
    %v2604 = vunpack.c.l.b16 %v2519
    %v2605 = vunpack.c.h.b16 %v2519
    %v2606 = vunpack.c.l.b16 %v2520
    %v2607 = vunpack.c.h.b16 %v2520
    %v2608 = vunpack.c.l.b16 %v2521
    %v2609 = vunpack.c.h.b16 %v2521
    %v2610 = vunpack.c.l.b16 %v2522
    %v2611 = vunpack.c.h.b16 %v2522
    %v2612 = vunpack.c.l.b16 %v2523
    %v2613 = vunpack.c.h.b16 %v2523
    %v2614 = vunpack.c.l.b16 %v2524
    %v2615 = vunpack.c.h.b16 %v2524
    %v2616 = vunpack.c.l.b16 %v2525
    %v2617 = vunpack.c.h.b16 %v2525
    %v2618 = vunpack.c.l.b16 %v2526
    %v2619 = vunpack.c.h.b16 %v2526
    %v2620 = vunpack.c.l.b16 %v2527
    %v2621 = vunpack.c.h.b16 %v2527
    %v2622 = vunpack.c.l.b16 %v2528
    %v2623 = vunpack.c.h.b16 %v2528
    %v2624 = vunpack.c.l.b16 %v2529
    %v2625 = vunpack.c.h.b16 %v2529
    %v2626 = vpack.c.b16 %v2566, %v2562
    %v2627 = vpack.c.b16 %v2567, %v2563
    %v2628 = vpack.c.b16 %v2568, %v2564
    %v2629 = vpack.c.b16 %v2569, %v2565
    %v2630 = vpack.c.b16 %v2574, %v2570
    %v2631 = vpack.c.b16 %v2575, %v2571
    %v2632 = vpack.c.b16 %v2576, %v2572
    %v2633 = vpack.c.b16 %v2577, %v2573
    %v2634 = vpack.c.b16 %v2582, %v2578
    %v2635 = vpack.c.b16 %v2583, %v2579
    %v2636 = vpack.c.b16 %v2584, %v2580
    %v2637 = vpack.c.b16 %v2585, %v2581
    %v2638 = vpack.c.b16 %v2590, %v2586
    %v2639 = vpack.c.b16 %v2591, %v2587
    %v2640 = vpack.c.b16 %v2592, %v2588
    %v2641 = vpack.c.b16 %v2593, %v2589
    %v2642 = vpack.c.b16 %v2598, %v2594
    %v2643 = vpack.c.b16 %v2599, %v2595
    %v2644 = vpack.c.b16 %v2600, %v2596
    %v2645 = vpack.c.b16 %v2601, %v2597
    %v2646 = vpack.c.b16 %v2606, %v2602
    %v2647 = vpack.c.b16 %v2607, %v2603
    %v2648 = vpack.c.b16 %v2608, %v2604
    %v2649 = vpack.c.b16 %v2609, %v2605
    %v2650 = vpack.c.b16 %v2614, %v2610
    %v2651 = vpack.c.b16 %v2615, %v2611
    %v2652 = vpack.c.b16 %v2616, %v2612
    %v2653 = vpack.c.b16 %v2617, %v2613
    %v2654 = vpack.c.b16 %v2622, %v2618
    %v2655 = vpack.c.b16 %v2623, %v2619
    %v2656 = vpack.c.b16 %v2624, %v2620
    %v2657 = vpack.c.b16 %v2625, %v2621
    %2690 = vmatprep.subr.bf16.mxu0 %v2655
    %2691 = vmatpush1.bf16.msra.mxu0 %v2654
    %2692 = vmatprep.subr.bf16.mxu0 %v2651
    %2693 = vmatpush1.bf16.msra.mxu0 %v2650
    %2694 = vmatprep.subr.bf16.mxu0 %v2647
    %2695 = vmatpush1.bf16.msra.mxu0 %v2646
    %2696 = vmatprep.subr.bf16.mxu0 %v2643
    %2697 = vmatpush1.bf16.msra.mxu0 %v2642
    %2698 = vmatprep.subr.bf16.mxu0 %v2639
    %2699 = vmatpush1.bf16.msra.mxu0 %v2638
    %2700 = vmatprep.subr.bf16.mxu0 %v2635
    %2701 = vmatpush1.bf16.msra.mxu0 %v2634
    %2702 = vmatprep.subr.bf16.mxu0 %v2631
    %2703 = vmatpush1.bf16.msra.mxu0 %v2630
    %2704 = vmatprep.subr.bf16.mxu0 %v2627
    %2705 = vmatpush1.bf16.msra.mxu0 %v2626
    %2706 = vmatprep.subr.bf16.mxu0 0
    %2707 = vmatpush2.bf16.msra.mxu0 0
    %2708 = vmatprep.subr.bf16.mxu0 0
    %2709 = vmatpush2.bf16.msra.mxu0 0
    %2710 = vmatprep.subr.bf16.mxu0 0
    %2711 = vmatpush2.bf16.msra.mxu0 0
    %2712 = vmatprep.subr.bf16.mxu0 0
    %2713 = vmatpush2.bf16.msra.mxu0 0
    %2714 = vmatprep.subr.bf16.mxu0 0
    %2715 = vmatpush2.bf16.msra.mxu0 0
    %2716 = vmatprep.subr.bf16.mxu0 0
    %2717 = vmatpush2.bf16.msra.mxu0 0
    %2718 = vmatprep.subr.bf16.mxu0 0
    %2719 = vmatpush2.bf16.msra.mxu0 0
    %2720 = vmatprep.subr.bf16.mxu0 0
    %2721 = vmatpush2.bf16.msra.mxu0 0
    %2722 = vmatprep.mubr.bf16.mxu0 0
    %2723 = vmatmul.mubr.bf16.gmra.mxu0 %v2486
    %v2724 = vpop.f32.mrf.mxu0
    %v2725 = vadd.f32 0.0, %v2724
    %v2726 = vpop.f32.mrf.mxu0
    %v2727 = vadd.f32 0.0, %v2726
    %v2728 = vpop.f32.mrf.mxu0
    %v2729 = vpop.f32.mrf.mxu0
    %2730 = vdwg.mxu0
    %2731 = vmatprep.subr.bf16.mxu0 %v2657
    %2732 = vmatpush1.bf16.msra.mxu0 %v2656
    %2733 = vmatprep.subr.bf16.mxu0 %v2653
    %2734 = vmatpush1.bf16.msra.mxu0 %v2652
    %2735 = vmatprep.subr.bf16.mxu0 %v2649
    %2736 = vmatpush1.bf16.msra.mxu0 %v2648
    %2737 = vmatprep.subr.bf16.mxu0 %v2645
    %2738 = vmatpush1.bf16.msra.mxu0 %v2644
    %2739 = vmatprep.subr.bf16.mxu0 %v2641
    %2740 = vmatpush1.bf16.msra.mxu0 %v2640
    %2741 = vmatprep.subr.bf16.mxu0 %v2637
    %2742 = vmatpush1.bf16.msra.mxu0 %v2636
    %2743 = vmatprep.subr.bf16.mxu0 %v2633
    %2744 = vmatpush1.bf16.msra.mxu0 %v2632
    %2745 = vmatprep.subr.bf16.mxu0 %v2629
    %2746 = vmatpush1.bf16.msra.mxu0 %v2628
    %2747 = vmatprep.subr.bf16.mxu0 0
    %2748 = vmatpush2.bf16.msra.mxu0 0
    %2749 = vmatprep.subr.bf16.mxu0 0
    %2750 = vmatpush2.bf16.msra.mxu0 0
    %2751 = vmatprep.subr.bf16.mxu0 0
    %2752 = vmatpush2.bf16.msra.mxu0 0
    %2753 = vmatprep.subr.bf16.mxu0 0
    %2754 = vmatpush2.bf16.msra.mxu0 0
    %2755 = vmatprep.subr.bf16.mxu0 0
    %2756 = vmatpush2.bf16.msra.mxu0 0
    %2757 = vmatprep.subr.bf16.mxu0 0
    %2758 = vmatpush2.bf16.msra.mxu0 0
    %2759 = vmatprep.subr.bf16.mxu0 0
    %2760 = vmatpush2.bf16.msra.mxu0 0
    %2761 = vmatprep.subr.bf16.mxu0 0
    %2762 = vmatpush2.bf16.msra.mxu0 0
    %2763 = vmatprep.mubr.bf16.mxu0 0
    %2764 = vmatmul.mubr.bf16.gmra.mxu0 %v2486
    %v2765 = vpop.f32.mrf.mxu0
    %v2766 = vadd.f32 0.0, %v2765
    %v2767 = vpop.f32.mrf.mxu0
    %v2768 = vadd.f32 0.0, %v2767
    %v2769 = vpop.f32.mrf.mxu0
    %v2770 = vpop.f32.mrf.mxu0
    %2771 = vdwg.mxu0
    %v2772 = vadd.f32 %v2494, %v2725
    %v2773 = vadd.f32 %v2495, %v2727
    %v2774 = vadd.f32 %v2496, %v2766
    %v2775 = vadd.f32 %v2497, %v2768
    %v2776 = vmul.f32 %v2772, %v629
    %v2777 = vmul.f32 %v2773, %v630
    %v2778 = vmul.f32 %v2774, %v631
    %v2779 = vmul.f32 %v2775, %v632
    %v2780 = vtanh.pop %v2776
    %v2781 = vtanh.pop %v2777
    %v2782 = vtanh.pop %v2778
    %v2783 = vtanh.pop %v2779
    %v2784 = vmul.f32 %v2780, 0.5
    %v2785 = vadd.f32 %v2784, 0.5
    %v2786 = vmul.f32 %v2781, 0.5
    %v2787 = vadd.f32 %v2786, 0.5
    %v2788 = vmul.f32 %v2783, 0.5
    %v2789 = vadd.f32 %v2788, 0.5
    %v2790 = vmul.f32 %v2787, %v2483
    %v2791 = vmul.f32 %v2785, %v2782
    %v2792 = vadd.f32 %v2790, %v2791
    %v2793 = vtanh.pop %v2792
    %v2794 = vmul.f32 %v2789, %v2793
    %v2795 = vpack.c.bf16 %v2794, %v2794
    %s2796 = scalar_lea.vmem [#allocation3], 24
    %2797 = vst [vmem:[%s2796] sm:$0xf] %v2795
    %s2798 = smul.u32 7, 4
    %s2799 = smul.addr %s2798, 4
    %s2800 = scalar_lea.vmem [#allocation2], %s2799
    %v2801 = vld [vmem:[%s2800] sm:$0xff]
    %v2802 = vld [vmem:[%s2800 + $0x8] sm:$0xff]
    %v2803 = vunpack.c.l.bf16 %v2801
    %v2804 = vunpack.c.h.bf16 %v2801
    %v2805 = vunpack.c.l.bf16 %v2802
    %v2806 = vunpack.c.h.bf16 %v2802
    %v2807 = vld [vmem:[#allocation14] sm:$0xff]
    %v2808 = vld [vmem:[#allocation14 + $0x8] sm:$0xff]
    %v2809 = vld [vmem:[#allocation14 + $0x10] sm:$0xff]
    %v2810 = vld [vmem:[#allocation14 + $0x18] sm:$0xff]
    %v2811 = vld [vmem:[#allocation14 + $0x20] sm:$0xff]
    %v2812 = vld [vmem:[#allocation14 + $0x28] sm:$0xff]
    %v2813 = vld [vmem:[#allocation14 + $0x30] sm:$0xff]
    %v2814 = vld [vmem:[#allocation14 + $0x38] sm:$0xff]
    %v2815 = vld [vmem:[#allocation14 + $0x40] sm:$0xff]
    %v2816 = vld [vmem:[#allocation14 + $0x48] sm:$0xff]
    %v2817 = vld [vmem:[#allocation14 + $0x50] sm:$0xff]
    %v2818 = vld [vmem:[#allocation14 + $0x58] sm:$0xff]
    %v2819 = vld [vmem:[#allocation14 + $0x60] sm:$0xff]
    %v2820 = vld [vmem:[#allocation14 + $0x68] sm:$0xff]
    %v2821 = vld [vmem:[#allocation14 + $0x70] sm:$0xff]
    %v2822 = vld [vmem:[#allocation14 + $0x78] sm:$0xff]
    %v2823 = vld [vmem:[#allocation14 + $0x80] sm:$0xff]
    %v2824 = vld [vmem:[#allocation14 + $0x88] sm:$0xff]
    %v2825 = vld [vmem:[#allocation14 + $0x90] sm:$0xff]
    %v2826 = vld [vmem:[#allocation14 + $0x98] sm:$0xff]
    %v2827 = vld [vmem:[#allocation14 + $0xa0] sm:$0xff]
    %v2828 = vld [vmem:[#allocation14 + $0xa8] sm:$0xff]
    %v2829 = vld [vmem:[#allocation14 + $0xb0] sm:$0xff]
    %v2830 = vld [vmem:[#allocation14 + $0xb8] sm:$0xff]
    %v2831 = vld [vmem:[#allocation14 + $0xc0] sm:$0xff]
    %v2832 = vld [vmem:[#allocation14 + $0xc8] sm:$0xff]
    %v2833 = vld [vmem:[#allocation14 + $0xd0] sm:$0xff]
    %v2834 = vld [vmem:[#allocation14 + $0xd8] sm:$0xff]
    %v2835 = vld [vmem:[#allocation14 + $0xe0] sm:$0xff]
    %v2836 = vld [vmem:[#allocation14 + $0xe8] sm:$0xff]
    %v2837 = vld [vmem:[#allocation14 + $0xf0] sm:$0xff]
    %v2838 = vld [vmem:[#allocation14 + $0xf8] sm:$0xff]
    %v2871 = vunpack.c.l.b16 %v2807
    %v2872 = vunpack.c.h.b16 %v2807
    %v2873 = vunpack.c.l.b16 %v2808
    %v2874 = vunpack.c.h.b16 %v2808
    %v2875 = vunpack.c.l.b16 %v2809
    %v2876 = vunpack.c.h.b16 %v2809
    %v2877 = vunpack.c.l.b16 %v2810
    %v2878 = vunpack.c.h.b16 %v2810
    %v2879 = vunpack.c.l.b16 %v2811
    %v2880 = vunpack.c.h.b16 %v2811
    %v2881 = vunpack.c.l.b16 %v2812
    %v2882 = vunpack.c.h.b16 %v2812
    %v2883 = vunpack.c.l.b16 %v2813
    %v2884 = vunpack.c.h.b16 %v2813
    %v2885 = vunpack.c.l.b16 %v2814
    %v2886 = vunpack.c.h.b16 %v2814
    %v2887 = vunpack.c.l.b16 %v2815
    %v2888 = vunpack.c.h.b16 %v2815
    %v2889 = vunpack.c.l.b16 %v2816
    %v2890 = vunpack.c.h.b16 %v2816
    %v2891 = vunpack.c.l.b16 %v2817
    %v2892 = vunpack.c.h.b16 %v2817
    %v2893 = vunpack.c.l.b16 %v2818
    %v2894 = vunpack.c.h.b16 %v2818
    %v2895 = vunpack.c.l.b16 %v2819
    %v2896 = vunpack.c.h.b16 %v2819
    %v2897 = vunpack.c.l.b16 %v2820
    %v2898 = vunpack.c.h.b16 %v2820
    %v2899 = vunpack.c.l.b16 %v2821
    %v2900 = vunpack.c.h.b16 %v2821
    %v2901 = vunpack.c.l.b16 %v2822
    %v2902 = vunpack.c.h.b16 %v2822
    %v2903 = vunpack.c.l.b16 %v2823
    %v2904 = vunpack.c.h.b16 %v2823
    %v2905 = vunpack.c.l.b16 %v2824
    %v2906 = vunpack.c.h.b16 %v2824
    %v2907 = vunpack.c.l.b16 %v2825
    %v2908 = vunpack.c.h.b16 %v2825
    %v2909 = vunpack.c.l.b16 %v2826
    %v2910 = vunpack.c.h.b16 %v2826
    %v2911 = vunpack.c.l.b16 %v2827
    %v2912 = vunpack.c.h.b16 %v2827
    %v2913 = vunpack.c.l.b16 %v2828
    %v2914 = vunpack.c.h.b16 %v2828
    %v2915 = vunpack.c.l.b16 %v2829
    %v2916 = vunpack.c.h.b16 %v2829
    %v2917 = vunpack.c.l.b16 %v2830
    %v2918 = vunpack.c.h.b16 %v2830
    %v2919 = vunpack.c.l.b16 %v2831
    %v2920 = vunpack.c.h.b16 %v2831
    %v2921 = vunpack.c.l.b16 %v2832
    %v2922 = vunpack.c.h.b16 %v2832
    %v2923 = vunpack.c.l.b16 %v2833
    %v2924 = vunpack.c.h.b16 %v2833
    %v2925 = vunpack.c.l.b16 %v2834
    %v2926 = vunpack.c.h.b16 %v2834
    %v2927 = vunpack.c.l.b16 %v2835
    %v2928 = vunpack.c.h.b16 %v2835
    %v2929 = vunpack.c.l.b16 %v2836
    %v2930 = vunpack.c.h.b16 %v2836
    %v2931 = vunpack.c.l.b16 %v2837
    %v2932 = vunpack.c.h.b16 %v2837
    %v2933 = vunpack.c.l.b16 %v2838
    %v2934 = vunpack.c.h.b16 %v2838
    %v2935 = vpack.c.b16 %v2875, %v2871
    %v2936 = vpack.c.b16 %v2876, %v2872
    %v2937 = vpack.c.b16 %v2877, %v2873
    %v2938 = vpack.c.b16 %v2878, %v2874
    %v2939 = vpack.c.b16 %v2883, %v2879
    %v2940 = vpack.c.b16 %v2884, %v2880
    %v2941 = vpack.c.b16 %v2885, %v2881
    %v2942 = vpack.c.b16 %v2886, %v2882
    %v2943 = vpack.c.b16 %v2891, %v2887
    %v2944 = vpack.c.b16 %v2892, %v2888
    %v2945 = vpack.c.b16 %v2893, %v2889
    %v2946 = vpack.c.b16 %v2894, %v2890
    %v2947 = vpack.c.b16 %v2899, %v2895
    %v2948 = vpack.c.b16 %v2900, %v2896
    %v2949 = vpack.c.b16 %v2901, %v2897
    %v2950 = vpack.c.b16 %v2902, %v2898
    %v2951 = vpack.c.b16 %v2907, %v2903
    %v2952 = vpack.c.b16 %v2908, %v2904
    %v2953 = vpack.c.b16 %v2909, %v2905
    %v2954 = vpack.c.b16 %v2910, %v2906
    %v2955 = vpack.c.b16 %v2915, %v2911
    %v2956 = vpack.c.b16 %v2916, %v2912
    %v2957 = vpack.c.b16 %v2917, %v2913
    %v2958 = vpack.c.b16 %v2918, %v2914
    %v2959 = vpack.c.b16 %v2923, %v2919
    %v2960 = vpack.c.b16 %v2924, %v2920
    %v2961 = vpack.c.b16 %v2925, %v2921
    %v2962 = vpack.c.b16 %v2926, %v2922
    %v2963 = vpack.c.b16 %v2931, %v2927
    %v2964 = vpack.c.b16 %v2932, %v2928
    %v2965 = vpack.c.b16 %v2933, %v2929
    %v2966 = vpack.c.b16 %v2934, %v2930
    %2999 = vmatprep.subr.bf16.mxu0 %v2964
    %3000 = vmatpush1.bf16.msra.mxu0 %v2963
    %3001 = vmatprep.subr.bf16.mxu0 %v2960
    %3002 = vmatpush1.bf16.msra.mxu0 %v2959
    %3003 = vmatprep.subr.bf16.mxu0 %v2956
    %3004 = vmatpush1.bf16.msra.mxu0 %v2955
    %3005 = vmatprep.subr.bf16.mxu0 %v2952
    %3006 = vmatpush1.bf16.msra.mxu0 %v2951
    %3007 = vmatprep.subr.bf16.mxu0 %v2948
    %3008 = vmatpush1.bf16.msra.mxu0 %v2947
    %3009 = vmatprep.subr.bf16.mxu0 %v2944
    %3010 = vmatpush1.bf16.msra.mxu0 %v2943
    %3011 = vmatprep.subr.bf16.mxu0 %v2940
    %3012 = vmatpush1.bf16.msra.mxu0 %v2939
    %3013 = vmatprep.subr.bf16.mxu0 %v2936
    %3014 = vmatpush1.bf16.msra.mxu0 %v2935
    %3015 = vmatprep.subr.bf16.mxu0 0
    %3016 = vmatpush2.bf16.msra.mxu0 0
    %3017 = vmatprep.subr.bf16.mxu0 0
    %3018 = vmatpush2.bf16.msra.mxu0 0
    %3019 = vmatprep.subr.bf16.mxu0 0
    %3020 = vmatpush2.bf16.msra.mxu0 0
    %3021 = vmatprep.subr.bf16.mxu0 0
    %3022 = vmatpush2.bf16.msra.mxu0 0
    %3023 = vmatprep.subr.bf16.mxu0 0
    %3024 = vmatpush2.bf16.msra.mxu0 0
    %3025 = vmatprep.subr.bf16.mxu0 0
    %3026 = vmatpush2.bf16.msra.mxu0 0
    %3027 = vmatprep.subr.bf16.mxu0 0
    %3028 = vmatpush2.bf16.msra.mxu0 0
    %3029 = vmatprep.subr.bf16.mxu0 0
    %3030 = vmatpush2.bf16.msra.mxu0 0
    %3031 = vmatprep.mubr.bf16.mxu0 0
    %3032 = vmatmul.mubr.bf16.gmra.mxu0 %v2795
    %v3033 = vpop.f32.mrf.mxu0
    %v3034 = vadd.f32 0.0, %v3033
    %v3035 = vpop.f32.mrf.mxu0
    %v3036 = vadd.f32 0.0, %v3035
    %v3037 = vpop.f32.mrf.mxu0
    %v3038 = vpop.f32.mrf.mxu0
    %3039 = vdwg.mxu0
    %3040 = vmatprep.subr.bf16.mxu0 %v2966
    %3041 = vmatpush1.bf16.msra.mxu0 %v2965
    %3042 = vmatprep.subr.bf16.mxu0 %v2962
    %3043 = vmatpush1.bf16.msra.mxu0 %v2961
    %3044 = vmatprep.subr.bf16.mxu0 %v2958
    %3045 = vmatpush1.bf16.msra.mxu0 %v2957
    %3046 = vmatprep.subr.bf16.mxu0 %v2954
    %3047 = vmatpush1.bf16.msra.mxu0 %v2953
    %3048 = vmatprep.subr.bf16.mxu0 %v2950
    %3049 = vmatpush1.bf16.msra.mxu0 %v2949
    %3050 = vmatprep.subr.bf16.mxu0 %v2946
    %3051 = vmatpush1.bf16.msra.mxu0 %v2945
    %3052 = vmatprep.subr.bf16.mxu0 %v2942
    %3053 = vmatpush1.bf16.msra.mxu0 %v2941
    %3054 = vmatprep.subr.bf16.mxu0 %v2938
    %3055 = vmatpush1.bf16.msra.mxu0 %v2937
    %3056 = vmatprep.subr.bf16.mxu0 0
    %3057 = vmatpush2.bf16.msra.mxu0 0
    %3058 = vmatprep.subr.bf16.mxu0 0
    %3059 = vmatpush2.bf16.msra.mxu0 0
    %3060 = vmatprep.subr.bf16.mxu0 0
    %3061 = vmatpush2.bf16.msra.mxu0 0
    %3062 = vmatprep.subr.bf16.mxu0 0
    %3063 = vmatpush2.bf16.msra.mxu0 0
    %3064 = vmatprep.subr.bf16.mxu0 0
    %3065 = vmatpush2.bf16.msra.mxu0 0
    %3066 = vmatprep.subr.bf16.mxu0 0
    %3067 = vmatpush2.bf16.msra.mxu0 0
    %3068 = vmatprep.subr.bf16.mxu0 0
    %3069 = vmatpush2.bf16.msra.mxu0 0
    %3070 = vmatprep.subr.bf16.mxu0 0
    %3071 = vmatpush2.bf16.msra.mxu0 0
    %3072 = vmatprep.mubr.bf16.mxu0 0
    %3073 = vmatmul.mubr.bf16.gmra.mxu0 %v2795
    %v3074 = vpop.f32.mrf.mxu0
    %v3075 = vadd.f32 0.0, %v3074
    %v3076 = vpop.f32.mrf.mxu0
    %v3077 = vadd.f32 0.0, %v3076
    %v3078 = vpop.f32.mrf.mxu0
    %v3079 = vpop.f32.mrf.mxu0
    %3080 = vdwg.mxu0
    %v3081 = vadd.f32 %v2803, %v3034
    %v3082 = vadd.f32 %v2804, %v3036
    %v3083 = vadd.f32 %v2805, %v3075
    %v3084 = vadd.f32 %v2806, %v3077
    %v3085 = vmul.f32 %v3081, %v629
    %v3086 = vmul.f32 %v3082, %v630
    %v3087 = vmul.f32 %v3083, %v631
    %v3088 = vmul.f32 %v3084, %v632
    %v3089 = vtanh.pop %v3085
    %v3090 = vtanh.pop %v3086
    %v3091 = vtanh.pop %v3087
    %v3092 = vtanh.pop %v3088
    %v3093 = vmul.f32 %v3089, 0.5
    %v3094 = vadd.f32 %v3093, 0.5
    %v3095 = vmul.f32 %v3090, 0.5
    %v3096 = vadd.f32 %v3095, 0.5
    %v3097 = vmul.f32 %v3092, 0.5
    %v3098 = vadd.f32 %v3097, 0.5
    %v3099 = vmul.f32 %v3096, %v2792
    %v3100 = vmul.f32 %v3094, %v3091
    %v3101 = vadd.f32 %v3099, %v3100
    %v3102 = vtanh.pop %v3101
    %v3103 = vmul.f32 %v3098, %v3102
    %v3104 = vpack.c.bf16 %v3103, %v3103
    %s3105 = scalar_lea.vmem [#allocation3], 28
    %3106 = vst [vmem:[%s3105] sm:$0xf] %v3104
    %3107 = vst [vmem:[#allocation16] sm:$0xff] %v3103
    %3108 = vst [vmem:[#allocation18] sm:$0xff] %v3101
    %s3109 = smul.u32 4, 16
    %s3110 = smul.u32 %s3109, 1
    %s3111 = sshll.u32 %s3110, 4
    %3112 = dma.done [#allocation5], %s3111
    %v3113 = vld [vmem:[#allocation3] sm:$0xf]
    %v3114 = vld [vmem:[#allocation3 + $0x4] sm:$0xf]
    %v3115 = vld [vmem:[#allocation3 + $0x8] sm:$0xf]
    %v3116 = vld [vmem:[#allocation3 + $0xc] sm:$0xf]
    %v3117 = vld [vmem:[#allocation3 + $0x10] sm:$0xf]
    %v3118 = vld [vmem:[#allocation3 + $0x14] sm:$0xf]
    %v3119 = vld [vmem:[#allocation3 + $0x18] sm:$0xf]
    %v3120 = vld [vmem:[#allocation3 + $0x1c] sm:$0xf]
    %v3121 = vld [vmem:[#allocation4] sm:$0xf]
    %v3122 = vld [vmem:[#allocation4 + $0x4] sm:$0xf]
    %v3123 = vld [vmem:[#allocation4 + $0x8] sm:$0xf]
    %v3124 = vld [vmem:[#allocation4 + $0xc] sm:$0xf]
    %v3125 = vld [vmem:[#allocation4 + $0x10] sm:$0xf]
    %v3126 = vld [vmem:[#allocation4 + $0x14] sm:$0xf]
    %v3127 = vld [vmem:[#allocation4 + $0x18] sm:$0xf]
    %v3128 = vld [vmem:[#allocation4 + $0x1c] sm:$0xf]
    %v3129 = vld [vmem:[#allocation4 + $0x20] sm:$0xf]
    %v3130 = vld [vmem:[#allocation4 + $0x24] sm:$0xf]
    %v3131 = vld [vmem:[#allocation4 + $0x28] sm:$0xf]
    %v3132 = vld [vmem:[#allocation4 + $0x2c] sm:$0xf]
    %v3133 = vld [vmem:[#allocation4 + $0x30] sm:$0xf]
    %v3134 = vld [vmem:[#allocation4 + $0x34] sm:$0xf]
    %v3135 = vld [vmem:[#allocation4 + $0x38] sm:$0xf]
    %v3136 = vld [vmem:[#allocation4 + $0x3c] sm:$0xf]
    %v3137 = vld [vmem:[%s7] sm:$0x1]
    %v3139 = vlaneseq
    %v3140 = vshrl.u32 %v3139, 7
    %v3141 = vsub.s32 0, %v3140
    %v3142 = vrot.slane %v3137, %v3141
    %v3152 = vunpack.c.l.b16 %v3113
    %v3153 = vunpack.c.l.b16 %v3114
    %v3154 = vunpack.c.l.b16 %v3115
    %v3155 = vunpack.c.l.b16 %v3116
    %v3156 = vunpack.c.l.b16 %v3117
    %v3157 = vunpack.c.l.b16 %v3118
    %v3158 = vunpack.c.l.b16 %v3119
    %v3159 = vunpack.c.l.b16 %v3120
    %v3160 = vpack.c.b16 %v3153, %v3152
    %v3161 = vpack.c.b16 %v3155, %v3154
    %v3162 = vpack.c.b16 %v3157, %v3156
    %v3163 = vpack.c.b16 %v3159, %v3158
    %v3184 = vunpack.c.l.b16 %v3121
    %v3185 = vunpack.c.l.b16 %v3122
    %v3186 = vunpack.c.l.b16 %v3123
    %v3187 = vunpack.c.l.b16 %v3124
    %v3188 = vunpack.c.l.b16 %v3125
    %v3189 = vunpack.c.l.b16 %v3126
    %v3190 = vunpack.c.l.b16 %v3127
    %v3191 = vunpack.c.l.b16 %v3128
    %v3192 = vunpack.c.l.b16 %v3129
    %v3193 = vunpack.c.l.b16 %v3130
    %v3194 = vunpack.c.l.b16 %v3131
    %v3195 = vunpack.c.l.b16 %v3132
    %v3196 = vunpack.c.l.b16 %v3133
    %v3197 = vunpack.c.l.b16 %v3134
    %v3198 = vunpack.c.l.b16 %v3135
    %v3199 = vunpack.c.l.b16 %v3136
    %v3200 = vpack.c.b16 %v3185, %v3184
    %v3201 = vpack.c.b16 %v3187, %v3186
    %v3202 = vpack.c.b16 %v3189, %v3188
    %v3203 = vpack.c.b16 %v3191, %v3190
    %v3204 = vpack.c.b16 %v3193, %v3192
    %v3205 = vpack.c.b16 %v3195, %v3194
    %v3206 = vpack.c.b16 %v3197, %v3196
    %v3207 = vpack.c.b16 %v3199, %v3198
    %3216 = vmatprep.subr.bf16.mxu0 0
    %3217 = vmatpush1.bf16.msra.mxu0 %v3207
    %3218 = vmatprep.subr.bf16.mxu0 0
    %3219 = vmatpush1.bf16.msra.mxu0 %v3206
    %3220 = vmatprep.subr.bf16.mxu0 0
    %3221 = vmatpush1.bf16.msra.mxu0 %v3205
    %3222 = vmatprep.subr.bf16.mxu0 0
    %3223 = vmatpush1.bf16.msra.mxu0 %v3204
    %3224 = vmatprep.subr.bf16.mxu0 0
    %3225 = vmatpush1.bf16.msra.mxu0 %v3203
    %3226 = vmatprep.subr.bf16.mxu0 0
    %3227 = vmatpush1.bf16.msra.mxu0 %v3202
    %3228 = vmatprep.subr.bf16.mxu0 0
    %3229 = vmatpush1.bf16.msra.mxu0 %v3201
    %3230 = vmatprep.subr.bf16.mxu0 0
    %3231 = vmatpush1.bf16.msra.mxu0 %v3200
    %3232 = vmatprep.subr.bf16.mxu0 0
    %3233 = vmatpush2.bf16.msra.mxu0 0
    %3234 = vmatprep.subr.bf16.mxu0 0
    %3235 = vmatpush2.bf16.msra.mxu0 0
    %3236 = vmatprep.subr.bf16.mxu0 0
    %3237 = vmatpush2.bf16.msra.mxu0 0
    %3238 = vmatprep.subr.bf16.mxu0 0
    %3239 = vmatpush2.bf16.msra.mxu0 0
    %3240 = vmatprep.subr.bf16.mxu0 0
    %3241 = vmatpush2.bf16.msra.mxu0 0
    %3242 = vmatprep.subr.bf16.mxu0 0
    %3243 = vmatpush2.bf16.msra.mxu0 0
    %3244 = vmatprep.subr.bf16.mxu0 0
    %3245 = vmatpush2.bf16.msra.mxu0 0
    %3246 = vmatprep.subr.bf16.mxu0 0
    %3247 = vmatpush2.bf16.msra.mxu0 0
    %3248 = vmatprep.mubr.bf16.mxu0 0
    %3249 = vmatmul.mubr.bf16.gmra.mxu0 %v3160
    %v3250 = vpop.f32.mrf.mxu0
    %v3251 = vadd.f32 %v3142, %v3250
    %v3252 = vpop.f32.mrf.mxu0
    %v3253 = vpop.f32.mrf.mxu0
    %v3254 = vadd.f32 %v3142, %v3253
    %v3255 = vpop.f32.mrf.mxu0
    %3256 = vmatprep.mubr.bf16.mxu0 0
    %3257 = vmatmul.mubr.bf16.gmra.mxu0 %v3161
    %v3258 = vpop.f32.mrf.mxu0
    %v3259 = vadd.f32 %v3142, %v3258
    %v3260 = vpop.f32.mrf.mxu0
    %v3261 = vpop.f32.mrf.mxu0
    %v3262 = vadd.f32 %v3142, %v3261
    %v3263 = vpop.f32.mrf.mxu0
    %3264 = vmatprep.mubr.bf16.mxu0 0
    %3265 = vmatmul.mubr.bf16.gmra.mxu0 %v3162
    %v3266 = vpop.f32.mrf.mxu0
    %v3267 = vadd.f32 %v3142, %v3266
    %v3268 = vpop.f32.mrf.mxu0
    %v3269 = vpop.f32.mrf.mxu0
    %v3270 = vadd.f32 %v3142, %v3269
    %v3271 = vpop.f32.mrf.mxu0
    %3272 = vmatprep.mubr.bf16.mxu0 0
    %3273 = vmatmul.mubr.bf16.gmra.mxu0 %v3163
    %v3274 = vpop.f32.mrf.mxu0
    %v3275 = vadd.f32 %v3142, %v3274
    %v3276 = vpop.f32.mrf.mxu0
    %v3277 = vpop.f32.mrf.mxu0
    %v3278 = vadd.f32 %v3142, %v3277
    %v3279 = vpop.f32.mrf.mxu0
    %3280 = vdwg.mxu0
    %3281 = vst [vmem:[#allocation15] sm:$0xff] %v3251
    %3282 = vst [vmem:[#allocation15 + $0x8] sm:$0xff] %v3254
    %3283 = vst [vmem:[#allocation15 + $0x10] sm:$0xff] %v3259
    %3284 = vst [vmem:[#allocation15 + $0x18] sm:$0xff] %v3262
    %3285 = vst [vmem:[#allocation15 + $0x20] sm:$0xff] %v3267
    %3286 = vst [vmem:[#allocation15 + $0x28] sm:$0xff] %v3270
    %3287 = vst [vmem:[#allocation15 + $0x30] sm:$0xff] %v3275
    %3288 = vst [vmem:[#allocation15 + $0x38] sm:$0xff] %v3278
    // Predicated region
    $region54: #{tpu_custom_call.1} parent=1 // pred_check
      _
    $region55: #{tpu_custom_call.1} parent=1 // pred_check_branch
      %3290 = sbr.rel (0) target = $region57
    $region56: #{tpu_custom_call.1} parent=1 // pred_region
      %s3292 = ssub.s32 1024, 1024
      %3293 = vsyncadd [#allocation8], %s3292
      %s3294 = sshll.u32 [#allocation15], 4
      %s3295 = int_to_ptr.vmem [resolvable:$true] %s3294
      %3300 = dma.vmem_to_hbm [thread:$0]  %s3295, 1024, %s8, [#allocation8], 128, 128, 8
    $region57: #{tpu_custom_call.1} parent=1 // pred_fallthru
      _
    // Predicated region
    $region58: #{tpu_custom_call.1} parent=1 // pred_check
      _
    $region59: #{tpu_custom_call.1} parent=1 // pred_check_branch
      %3302 = sbr.rel (0) target = $region61
    $region60: #{tpu_custom_call.1} parent=1 // pred_region
      %s3304 = ssub.s32 128, 128
      %3305 = vsyncadd [#allocation17], %s3304
      %s3307 = sshll.u32 [#allocation16], 4
      %s3308 = int_to_ptr.vmem [resolvable:$true] %s3307
      %3310 = dma.vmem_to_hbm [thread:$0]  %s3308, 128, %s9, [#allocation17]
    $region61: #{tpu_custom_call.1} parent=1 // pred_fallthru
      _
    // Predicated region
    $region62: #{tpu_custom_call.1} parent=1 // pred_check
      _
    $region63: #{tpu_custom_call.1} parent=1 // pred_check_branch
      %3312 = sbr.rel (0) target = $region65
    $region64: #{tpu_custom_call.1} parent=1 // pred_region
      %s3314 = ssub.s32 128, 128
      %3315 = vsyncadd [#allocation17], %s3314
      %s3317 = sshll.u32 [#allocation18], 4
      %s3318 = int_to_ptr.vmem [resolvable:$true] %s3317
      %3320 = dma.vmem_to_hbm [thread:$0]  %s3318, 128, %s10, [#allocation17]
    $region65: #{tpu_custom_call.1} parent=1 // pred_fallthru
      _
    // Predicated region
    $region66: #{tpu_custom_call.1} parent=1 // pred_check
      _
    $region67: #{tpu_custom_call.1} parent=1 // pred_check_branch
      %3322 = sbr.rel (0) target = $region69
    $region68: #{tpu_custom_call.1} parent=1 // pred_region
      %3323 = dma.done [#allocation8], 1024
    $region69: #{tpu_custom_call.1} parent=1 // pred_fallthru
      _
    // Predicated region
    $region70: #{tpu_custom_call.1} parent=1 // pred_check
      _
    $region71: #{tpu_custom_call.1} parent=1 // pred_check_branch
      %3325 = sbr.rel (0) target = $region73
    $region72: #{tpu_custom_call.1} parent=1 // pred_region
      %3326 = dma.done [#allocation17], 128
    $region73: #{tpu_custom_call.1} parent=1 // pred_fallthru
      _
    // Predicated region
    $region74: #{tpu_custom_call.1} parent=1 // pred_check
      _
    $region75: #{tpu_custom_call.1} parent=1 // pred_check_branch
      %3328 = sbr.rel (0) target = $region77
    $region76: #{tpu_custom_call.1} parent=1 // pred_region
      %3329 = dma.done [#allocation17], 128
    $region77: #{tpu_custom_call.1} parent=1 // pred_fallthru
      _
    %3330 = vsyncpa [#allocation7], 1
    %3331 = vsyncpa [#allocation10], 1
    %3332 = vsyncpa [#allocation13], 1
    %3333 = vsyncpa [#allocation8], 1
    %3334 = vsyncpa [#allocation17], 1
  %3335 = vsyncmov [#allocation5]
  %s3336 = vpop.sfrf %3335
  %p3337 = scmp.eq.s32.totalorder %s3336, 0
  %p3338 = pneg %p3337
  %3340 = shalt.err (%p3338)

</llo_original>
